<compile_context>
chip_gen: v6e
topology: v6e:2x2x1
jax: 0.10.0
libtpu: 0.0.40
codegen_flags: <defaults>
</compile_context>

<pallas_src>
import functools

import jax
import jax.numpy as jnp
from jax.experimental import pallas as pl
from jax.experimental.pallas import tpu as pltpu

EPS = 1e-5
LANE = 128           # lane granule (last dim)
SUBLANE_BF16 = 16    # bf16 sublane granule (second-to-last dim)


def _round_up(x: int, m: int) -> int:
    return (x + m - 1) // m * m


# --------------------------------------------------------------------------------------
# Kernel
# --------------------------------------------------------------------------------------
def generator_kernel(z_ref,
                     w1_ref, g1_ref, be1_ref,
                     w2_ref, g2_ref, be2_ref,
                     w3_ref, g3_ref, be3_ref,
                     w4_ref, b4_ref,
                     out_ref, *, batch):
    b_pad = z_ref.shape[0]
    padded = batch != b_pad              # static Python bool -> masking compiled out if False
    inv_n = jnp.float32(1.0 / batch)
    if padded:
        # Row-validity mask: True for real batch rows, False for zero-padded rows.
        valid = jax.lax.broadcasted_iota(jnp.int32, (b_pad, 1), 0) < batch

    def mm(x, w_ref):
        # bf16 MXU matmul with f32 accumulation.
        return jnp.dot(x.astype(jnp.bfloat16), w_ref[...],
                       preferred_element_type=jnp.float32)

    def bn_relu(h, g_ref, be_ref):
        # Training-mode BatchNorm1d over the real batch rows; biased variance; eps=1e-5.
        # Padded rows of h are exactly zero, so sum(h) and sum(h*h) are exact over the
        # real rows and only need division by the true batch size.
        mean = jnp.sum(h, axis=0, keepdims=True) * inv_n
        if padded:
            ex2 = jnp.sum(h * h, axis=0, keepdims=True) * inv_n
            var = ex2 - mean * mean       # avoids a masked (h - mean) pass
        else:
            d = h - mean
            var = jnp.sum(d * d, axis=0, keepdims=True) * inv_n
        # Fold BN scale/shift into (1, N) rows: one full-width multiply + one add.
        scale = jax.lax.rsqrt(var + EPS) * g_ref[...]
        shift = be_ref[...] - mean * scale
        h = jnp.maximum(h * scale + shift, 0.0)
        if padded:
            # Re-zero padded rows so the next layer's matmul output / BN sums stay exact.
            h = jnp.where(valid, h, 0.0)
        return h

    h = mm(z_ref[...], w1_ref)            # Linear biases b1..b3 dropped: cancelled by BN.
    h = bn_relu(h, g1_ref, be1_ref)
    h = mm(h, w2_ref)
    h = bn_relu(h, g2_ref, be2_ref)
    h = mm(h, w3_ref)
    h = bn_relu(h, g3_ref, be3_ref)
    h = mm(h, w4_ref) + b4_ref[...]
    out_ref[...] = jnp.tanh(h)


# --------------------------------------------------------------------------------------
# Params
# --------------------------------------------------------------------------------------
def init_params(key, z_dim, img_dim):
    """PyTorch-style init: W,b ~ U(-1/sqrt(fan_in), 1/sqrt(fan_in)).

    Weights are stored as (in_features, out_features) in bf16. Biases for the three
    BN-followed Linear layers are omitted (exactly cancelled by the BN mean subtraction).
    Returns: (w1, g1, be1, w2, g2, be2, w3, g3, be3, w4, b4)
    """
    dims = [z_dim, 256, 512, 1024, img_dim]
    params = []
    for i in range(4):
        fan_in, fan_out = dims[i], dims[i + 1]
        key, kw, kb = jax.random.split(key, 3)
        bound = 1.0 / jnp.sqrt(jnp.float32(fan_in))
        w = jax.random.uniform(kw, (fan_in, fan_out), jnp.float32, -bound, bound)
        params.append(w.astype(jnp.bfloat16))
        if i < 3:  # BatchNorm1d affine params (f32)
            params.append(jnp.ones((1, fan_out), jnp.float32))   # gamma
            params.append(jnp.zeros((1, fan_out), jnp.float32))  # beta
        else:      # final layer keeps its bias (no BN after it)
            b = jax.random.uniform(kb, (1, fan_out), jnp.float32, -bound, bound)
            params.append(b)
    return tuple(params)


def prepare_params(params):
    """One-time prep (OUTSIDE the hot forward): pad w1's contraction dim and the final
    layer's output dim to lane multiples (128) so every matmul issues full-width MXU
    passes and the output store is lane-dense. Returns (padded_params, img_dim)."""
    w1, g1, be1, w2, g2, be2, w3, g3, be3, w4, b4 = params
    z_dim, img_dim = w1.shape[0], w4.shape[1]
    k_pad = _round_up(z_dim, LANE)
    n_pad = _round_up(img_dim, LANE)
    w1_p = jnp.pad(w1, ((0, k_pad - z_dim), (0, 0)))
    w4_p = jnp.pad(w4, ((0, 0), (0, n_pad - img_dim)))
    b4_p = jnp.pad(b4, ((0, 0), (0, n_pad - img_dim)))
    prepared = (w1_p, g1, be1, w2, g2, be2, w3, g3, be3, w4_p, b4_p)
    return jax.tree_util.tree_map(jax.device_put, prepared), img_dim


# --------------------------------------------------------------------------------------
# Forward
# --------------------------------------------------------------------------------------
def _vmem_limit_bytes(b_pad, k_pad, n_pad):
    """Live-set-based VMEM budget: keep the fused path alive for big batches on
    v5e/v6e (128 MiB physical) while staying under v7x's 64 MiB physical VMEM."""
    f32 = 4
    acts = b_pad * (k_pad + 256 + 512 + 1024 + n_pad) * f32   # f32 activations
    acts += b_pad * 1024 * 2                                   # largest bf16 matmul copy
    wts = (k_pad * 256 + 256 * 512 + 512 * 1024 + 1024 * n_pad) * 2
    bn = (256 + 512 + 1024) * 2 * f32 + 2 * n_pad * f32
    need = 2 * (acts + wts + bn)                               # 2x headroom for temps
    hi = 100 * 1024 * 1024                                     # fine on 128 MiB parts
    try:
        hi = min(hi, int(0.8 * pltpu.get_tpu_info().vmem_capacity_bytes))
    except Exception:
        pass                                                   # keep conservative default
    return int(min(max(need, 32 * 1024 * 1024), hi))


@functools.partial(jax.jit, static_argnames=("img_dim",))
def generator_forward(z, prepared_params, img_dim):
    w1, g1, be1, w2, g2, be2, w3, g3, be3, w4, b4 = prepared_params
    batch, z_dim = z.shape
    k_pad = w1.shape[0]
    n_pad = w4.shape[1]
    # Batch only needs the bf16 sublane granule (16); lane-density of the output store
    # depends on n_pad, not batch, so 128-padding here would be pure waste.
    b_pad = _round_up(batch, SUBLANE_BF16)

    z_p = jnp.pad(z.astype(jnp.float32), ((0, b_pad - batch), (0, k_pad - z_dim)))

    args = (z_p, w1, g1, be1, w2, g2, be2, w3, g3, be3, w4, b4)

    def full_spec(a):
        # Whole array resident in VMEM (max weight is 512x1024 bf16 = 1 MB).
        return pl.BlockSpec(a.shape, lambda *_: (0,) * a.ndim)

    out = pl.pallas_call(
        functools.partial(generator_kernel, batch=batch),
        out_shape=jax.ShapeDtypeStruct((b_pad, n_pad), jnp.float32),
        in_specs=[full_spec(a) for a in args],
        out_specs=pl.BlockSpec((b_pad, n_pad), lambda *_: (0, 0)),
        compiler_params=pltpu.CompilerParams(
            vmem_limit_bytes=_vmem_limit_bytes(b_pad, k_pad, n_pad)),
    )(*args)
    return out[:batch, :img_dim]


# --------------------------------------------------------------------------------------
# Pure-JAX reference (same numerics: bf16 matmul operands, f32 acc / BN / tanh)
# --------------------------------------------------------------------------------------
def generator_reference(z, params):
    w1, g1, be1, w2, g2, be2, w3, g3, be3, w4, b4 = params

    def mm(x, w):
        return jnp.dot(x.astype(jnp.bfloat16), w, preferred_element_type=jnp.float32)

    def bn_relu(h, g, be):
        mean = jnp.mean(h, axis=0, keepdims=True)
        var = jnp.mean(jnp.square(h - mean), axis=0, keepdims=True)
        h = (h - mean) * jax.lax.rsqrt(var + EPS) * g + be
        return jnp.maximum(h, 0.0)

    h = bn_relu(mm(z, w1), g1, be1)
    h = bn_relu(mm(h, w2), g2, be2)
    h = bn_relu(mm(h, w3), g3, be3)
    return jnp.tanh(mm(h, w4) + b4)


if __name__ == "__main__":
    key = jax.random.PRNGKey(0)
    k_params, k_z = jax.random.split(key)

    batch, z_dim, img_dim = 8, 64, 128
    params = init_params(k_params, z_dim, img_dim)
    prepared, img_dim_p = prepare_params(params)

    z = jax.random.normal(k_z, (batch, z_dim), jnp.float32)

    # Padded-batch path (batch=8 -> padded to 16): exercises the masked/E[h^2] branch.
    out = generator_forward(z, prepared, img_dim_p)
    out = jax.block_until_ready(out)
    ref = generator_reference(z, params)
    assert out.shape == (batch, img_dim)
    assert jnp.allclose(out, ref, atol=2e-3, rtol=2e-3), float(jnp.max(jnp.abs(out - ref)))

    # Aligned-batch path (batch=16): all masking statically compiled out.
    z16 = jax.random.normal(jax.random.PRNGKey(1), (16, z_dim), jnp.float32)
    out16 = jax.block_until_ready(generator_forward(z16, prepared, img_dim_p))
    ref16 = generator_reference(z16, params)
    assert jnp.allclose(out16, ref16, atol=2e-3, rtol=2e-3), \
        float(jnp.max(jnp.abs(out16 - ref16)))

    print("KERNEL_OK")
</pallas_src>

<mosaic_0001>
module attributes {stable_mosaic.version = 11 : i64} {
  func.func @generator_kernel(%arg0: memref<16x128xf32, #tpu.memory_space<vmem>>, %arg1: memref<128x256xbf16, #tpu.memory_space<vmem>>, %arg2: memref<1x256xf32, #tpu.memory_space<vmem>>, %arg3: memref<1x256xf32, #tpu.memory_space<vmem>>, %arg4: memref<256x512xbf16, #tpu.memory_space<vmem>>, %arg5: memref<1x512xf32, #tpu.memory_space<vmem>>, %arg6: memref<1x512xf32, #tpu.memory_space<vmem>>, %arg7: memref<512x1024xbf16, #tpu.memory_space<vmem>>, %arg8: memref<1x1024xf32, #tpu.memory_space<vmem>>, %arg9: memref<1x1024xf32, #tpu.memory_space<vmem>>, %arg10: memref<1024x128xbf16, #tpu.memory_space<vmem>>, %arg11: memref<1x128xf32, #tpu.memory_space<vmem>>, %arg12: memref<16x128xf32, #tpu.memory_space<vmem>>) attributes {dimension_semantics = [], scalar_prefetch = 0 : i64, scratch_operands = 0 : i64, tpu.core_type = #tpu.core_type<tc>} {
    %0 = tpu.iota {dimensions = array<i32: 0>} : vector<16x1xi32>
    %c8_i32 = arith.constant 8 : i32
    %1 = vector.broadcast %c8_i32 : i32 to vector<16x1xi32>
    %2 = arith.cmpi slt, %0, %1 : vector<16x1xi32>
    %c0 = arith.constant 0 : index
    %c0_0 = arith.constant 0 : index
    %3 = vector.load %arg0[%c0, %c0_0] : memref<16x128xf32, #tpu.memory_space<vmem>>, vector<16x128xf32>
    %4 = arith.truncf %3 : vector<16x128xf32> to vector<16x128xbf16>
    %c0_1 = arith.constant 0 : index
    %c0_2 = arith.constant 0 : index
    %5 = vector.load %arg1[%c0_1, %c0_2] : memref<128x256xbf16, #tpu.memory_space<vmem>>, vector<128x256xbf16>
    %cst = arith.constant dense<0.000000e+00> : vector<16x256xf32>
    %6 = tpu.matmul %4, %5, %cst {dimension_numbers = #tpu.dot_dimension_numbers<[1], [0], [0], [1], [0, 0, 1, 1], [], []>} : vector<16x128xbf16>, vector<128x256xbf16>, vector<16x256xf32> -> vector<16x256xf32>
    %cst_3 = arith.constant dense<0.000000e+00> : vector<256xf32>
    %7 = vector.multi_reduction <add>, %6, %cst_3 [0] : vector<16x256xf32> to vector<256xf32>
    %8 = vector.shape_cast %7 : vector<256xf32> to vector<1x256xf32>
    %cst_4 = arith.constant 1.250000e-01 : f32
    %9 = vector.broadcast %cst_4 : f32 to vector<1x256xf32>
    %10 = arith.mulf %8, %9 : vector<1x256xf32>
    %11 = arith.mulf %6, %6 : vector<16x256xf32>
    %cst_5 = arith.constant dense<0.000000e+00> : vector<256xf32>
    %12 = vector.multi_reduction <add>, %11, %cst_5 [0] : vector<16x256xf32> to vector<256xf32>
    %13 = vector.shape_cast %12 : vector<256xf32> to vector<1x256xf32>
    %cst_6 = arith.constant 1.250000e-01 : f32
    %14 = vector.broadcast %cst_6 : f32 to vector<1x256xf32>
    %15 = arith.mulf %13, %14 : vector<1x256xf32>
    %16 = arith.mulf %10, %10 : vector<1x256xf32>
    %17 = arith.subf %15, %16 : vector<1x256xf32>
    %cst_7 = arith.constant 9.99999974E-6 : f32
    %18 = vector.broadcast %cst_7 : f32 to vector<1x256xf32>
    %19 = arith.addf %17, %18 : vector<1x256xf32>
    %20 = math.rsqrt %19 : vector<1x256xf32>
    %c0_8 = arith.constant 0 : index
    %c0_9 = arith.constant 0 : index
    %21 = vector.load %arg2[%c0_8, %c0_9] : memref<1x256xf32, #tpu.memory_space<vmem>>, vector<1x256xf32>
    %22 = arith.mulf %20, %21 : vector<1x256xf32>
    %c0_10 = arith.constant 0 : index
    %c0_11 = arith.constant 0 : index
    %23 = vector.load %arg3[%c0_10, %c0_11] : memref<1x256xf32, #tpu.memory_space<vmem>>, vector<1x256xf32>
    %24 = arith.mulf %10, %22 : vector<1x256xf32>
    %25 = arith.subf %23, %24 : vector<1x256xf32>
    %26 = vector.broadcast %22 : vector<1x256xf32> to vector<16x256xf32>
    %27 = arith.mulf %6, %26 : vector<16x256xf32>
    %28 = vector.broadcast %25 : vector<1x256xf32> to vector<16x256xf32>
    %29 = arith.addf %27, %28 : vector<16x256xf32>
    %cst_12 = arith.constant 0.000000e+00 : f32
    %30 = vector.broadcast %cst_12 : f32 to vector<16x256xf32>
    %31 = arith.maximumf %29, %30 : vector<16x256xf32>
    %cst_13 = arith.constant 0.000000e+00 : f32
    %32 = vector.shape_cast %2 : vector<16x1xi1> to vector<16x1xi1>
    %33 = vector.broadcast %32 : vector<16x1xi1> to vector<16x256xi1>
    %34 = vector.broadcast %cst_13 : f32 to vector<16x256xf32>
    %35 = arith.select %33, %31, %34 : vector<16x256xi1>, vector<16x256xf32>
    %36 = arith.truncf %35 : vector<16x256xf32> to vector<16x256xbf16>
    %c0_14 = arith.constant 0 : index
    %c0_15 = arith.constant 0 : index
    %37 = vector.load %arg4[%c0_14, %c0_15] : memref<256x512xbf16, #tpu.memory_space<vmem>>, vector<256x512xbf16>
    %cst_16 = arith.constant dense<0.000000e+00> : vector<16x512xf32>
    %38 = tpu.matmul %36, %37, %cst_16 {dimension_numbers = #tpu.dot_dimension_numbers<[1], [0], [0], [1], [0, 0, 1, 1], [], []>} : vector<16x256xbf16>, vector<256x512xbf16>, vector<16x512xf32> -> vector<16x512xf32>
    %cst_17 = arith.constant dense<0.000000e+00> : vector<512xf32>
    %39 = vector.multi_reduction <add>, %38, %cst_17 [0] : vector<16x512xf32> to vector<512xf32>
    %40 = vector.shape_cast %39 : vector<512xf32> to vector<1x512xf32>
    %cst_18 = arith.constant 1.250000e-01 : f32
    %41 = vector.broadcast %cst_18 : f32 to vector<1x512xf32>
    %42 = arith.mulf %40, %41 : vector<1x512xf32>
    %43 = arith.mulf %38, %38 : vector<16x512xf32>
    %cst_19 = arith.constant dense<0.000000e+00> : vector<512xf32>
    %44 = vector.multi_reduction <add>, %43, %cst_19 [0] : vector<16x512xf32> to vector<512xf32>
    %45 = vector.shape_cast %44 : vector<512xf32> to vector<1x512xf32>
    %cst_20 = arith.constant 1.250000e-01 : f32
    %46 = vector.broadcast %cst_20 : f32 to vector<1x512xf32>
    %47 = arith.mulf %45, %46 : vector<1x512xf32>
    %48 = arith.mulf %42, %42 : vector<1x512xf32>
    %49 = arith.subf %47, %48 : vector<1x512xf32>
    %cst_21 = arith.constant 9.99999974E-6 : f32
    %50 = vector.broadcast %cst_21 : f32 to vector<1x512xf32>
    %51 = arith.addf %49, %50 : vector<1x512xf32>
    %52 = math.rsqrt %51 : vector<1x512xf32>
    %c0_22 = arith.constant 0 : index
    %c0_23 = arith.constant 0 : index
    %53 = vector.load %arg5[%c0_22, %c0_23] : memref<1x512xf32, #tpu.memory_space<vmem>>, vector<1x512xf32>
    %54 = arith.mulf %52, %53 : vector<1x512xf32>
    %c0_24 = arith.constant 0 : index
    %c0_25 = arith.constant 0 : index
    %55 = vector.load %arg6[%c0_24, %c0_25] : memref<1x512xf32, #tpu.memory_space<vmem>>, vector<1x512xf32>
    %56 = arith.mulf %42, %54 : vector<1x512xf32>
    %57 = arith.subf %55, %56 : vector<1x512xf32>
    %58 = vector.broadcast %54 : vector<1x512xf32> to vector<16x512xf32>
    %59 = arith.mulf %38, %58 : vector<16x512xf32>
    %60 = vector.broadcast %57 : vector<1x512xf32> to vector<16x512xf32>
    %61 = arith.addf %59, %60 : vector<16x512xf32>
    %cst_26 = arith.constant 0.000000e+00 : f32
    %62 = vector.broadcast %cst_26 : f32 to vector<16x512xf32>
    %63 = arith.maximumf %61, %62 : vector<16x512xf32>
    %cst_27 = arith.constant 0.000000e+00 : f32
    %64 = vector.shape_cast %2 : vector<16x1xi1> to vector<16x1xi1>
    %65 = vector.broadcast %64 : vector<16x1xi1> to vector<16x512xi1>
    %66 = vector.broadcast %cst_27 : f32 to vector<16x512xf32>
    %67 = arith.select %65, %63, %66 : vector<16x512xi1>, vector<16x512xf32>
    %68 = arith.truncf %67 : vector<16x512xf32> to vector<16x512xbf16>
    %c0_28 = arith.constant 0 : index
    %c0_29 = arith.constant 0 : index
    %69 = vector.load %arg7[%c0_28, %c0_29] : memref<512x1024xbf16, #tpu.memory_space<vmem>>, vector<512x1024xbf16>
    %cst_30 = arith.constant dense<0.000000e+00> : vector<16x1024xf32>
    %70 = tpu.matmul %68, %69, %cst_30 {dimension_numbers = #tpu.dot_dimension_numbers<[1], [0], [0], [1], [0, 0, 1, 1], [], []>} : vector<16x512xbf16>, vector<512x1024xbf16>, vector<16x1024xf32> -> vector<16x1024xf32>
    %cst_31 = arith.constant dense<0.000000e+00> : vector<1024xf32>
    %71 = vector.multi_reduction <add>, %70, %cst_31 [0] : vector<16x1024xf32> to vector<1024xf32>
    %72 = vector.shape_cast %71 : vector<1024xf32> to vector<1x1024xf32>
    %cst_32 = arith.constant 1.250000e-01 : f32
    %73 = vector.broadcast %cst_32 : f32 to vector<1x1024xf32>
    %74 = arith.mulf %72, %73 : vector<1x1024xf32>
    %75 = arith.mulf %70, %70 : vector<16x1024xf32>
    %cst_33 = arith.constant dense<0.000000e+00> : vector<1024xf32>
    %76 = vector.multi_reduction <add>, %75, %cst_33 [0] : vector<16x1024xf32> to vector<1024xf32>
    %77 = vector.shape_cast %76 : vector<1024xf32> to vector<1x1024xf32>
    %cst_34 = arith.constant 1.250000e-01 : f32
    %78 = vector.broadcast %cst_34 : f32 to vector<1x1024xf32>
    %79 = arith.mulf %77, %78 : vector<1x1024xf32>
    %80 = arith.mulf %74, %74 : vector<1x1024xf32>
    %81 = arith.subf %79, %80 : vector<1x1024xf32>
    %cst_35 = arith.constant 9.99999974E-6 : f32
    %82 = vector.broadcast %cst_35 : f32 to vector<1x1024xf32>
    %83 = arith.addf %81, %82 : vector<1x1024xf32>
    %84 = math.rsqrt %83 : vector<1x1024xf32>
    %c0_36 = arith.constant 0 : index
    %c0_37 = arith.constant 0 : index
    %85 = vector.load %arg8[%c0_36, %c0_37] : memref<1x1024xf32, #tpu.memory_space<vmem>>, vector<1x1024xf32>
    %86 = arith.mulf %84, %85 : vector<1x1024xf32>
    %c0_38 = arith.constant 0 : index
    %c0_39 = arith.constant 0 : index
    %87 = vector.load %arg9[%c0_38, %c0_39] : memref<1x1024xf32, #tpu.memory_space<vmem>>, vector<1x1024xf32>
    %88 = arith.mulf %74, %86 : vector<1x1024xf32>
    %89 = arith.subf %87, %88 : vector<1x1024xf32>
    %90 = vector.broadcast %86 : vector<1x1024xf32> to vector<16x1024xf32>
    %91 = arith.mulf %70, %90 : vector<16x1024xf32>
    %92 = vector.broadcast %89 : vector<1x1024xf32> to vector<16x1024xf32>
    %93 = arith.addf %91, %92 : vector<16x1024xf32>
    %cst_40 = arith.constant 0.000000e+00 : f32
    %94 = vector.broadcast %cst_40 : f32 to vector<16x1024xf32>
    %95 = arith.maximumf %93, %94 : vector<16x1024xf32>
    %cst_41 = arith.constant 0.000000e+00 : f32
    %96 = vector.shape_cast %2 : vector<16x1xi1> to vector<16x1xi1>
    %97 = vector.broadcast %96 : vector<16x1xi1> to vector<16x1024xi1>
    %98 = vector.broadcast %cst_41 : f32 to vector<16x1024xf32>
    %99 = arith.select %97, %95, %98 : vector<16x1024xi1>, vector<16x1024xf32>
    %100 = arith.truncf %99 : vector<16x1024xf32> to vector<16x1024xbf16>
    %c0_42 = arith.constant 0 : index
    %c0_43 = arith.constant 0 : index
    %101 = vector.load %arg10[%c0_42, %c0_43] : memref<1024x128xbf16, #tpu.memory_space<vmem>>, vector<1024x128xbf16>
    %cst_44 = arith.constant dense<0.000000e+00> : vector<16x128xf32>
    %102 = tpu.matmul %100, %101, %cst_44 {dimension_numbers = #tpu.dot_dimension_numbers<[1], [0], [0], [1], [0, 0, 1, 1], [], []>} : vector<16x1024xbf16>, vector<1024x128xbf16>, vector<16x128xf32> -> vector<16x128xf32>
    %c0_45 = arith.constant 0 : index
    %c0_46 = arith.constant 0 : index
    %103 = vector.load %arg11[%c0_45, %c0_46] : memref<1x128xf32, #tpu.memory_space<vmem>>, vector<1x128xf32>
    %104 = vector.broadcast %103 : vector<1x128xf32> to vector<16x128xf32>
    %105 = arith.addf %102, %104 : vector<16x128xf32>
    %106 = math.tanh %105 : vector<16x128xf32>
    %c0_47 = arith.constant 0 : index
    %c0_48 = arith.constant 0 : index
    %107 = vector.load %arg12[%c0_47, %c0_48] : memref<16x128xf32, #tpu.memory_space<vmem>>, vector<16x128xf32>
    tpu.vector_store %arg12[%c0_47, %c0_48], %106 {strides = array<i32>} : memref<16x128xf32, #tpu.memory_space<vmem>>, vector<16x128xf32>,
    return
  }
}

</mosaic_0001>

<llo_original>
// kernel: generator_forward.1
$region0: #{generator_forward.1}
  #allocation0 [shape = 'u32[]', space=smem, size = 0x4, offset = 0x4, fixed_abs, tag = 'smem constant byte address 0x4 - core index']
  #allocation1 [shape = 'u32[144,128]{1,0:T(1,128)}', space=vmem, size = 0x12000, scoped, tag = 'internal scratch']
  %s0 = inlined_call_operand.vmem [shape: f32[16,128], index: 0, kind: input, shape index: {}]
  %s1 = inlined_call_operand.hbm [shape: bf16[128,256], index: 1, kind: input, shape index: {}]
  %s2 = inlined_call_operand.vmem [shape: f32[1,256], index: 2, kind: input, shape index: {}]
  %s3 = inlined_call_operand.vmem [shape: f32[1,256], index: 3, kind: input, shape index: {}]
  %s4 = inlined_call_operand.hbm [shape: bf16[256,512], index: 4, kind: input, shape index: {}]
  %s5 = inlined_call_operand.vmem [shape: f32[1,512], index: 5, kind: input, shape index: {}]
  %s6 = inlined_call_operand.vmem [shape: f32[1,512], index: 6, kind: input, shape index: {}]
  %s7 = inlined_call_operand.hbm [shape: bf16[512,1024], index: 7, kind: input, shape index: {}]
  %s8 = inlined_call_operand.vmem [shape: f32[1,1024], index: 8, kind: input, shape index: {}]
  %s9 = inlined_call_operand.vmem [shape: f32[1,1024], index: 9, kind: input, shape index: {}]
  %s10 = inlined_call_operand.hbm [shape: bf16[1024,128], index: 10, kind: input, shape index: {}]
  %s11 = inlined_call_operand.vmem [shape: f32[1,128], index: 11, kind: input, shape index: {}]
  %s12 = inlined_call_operand.vmem [shape: f32[16,128], index: 12, kind: output, shape index: {}]
  %s13 = sld [smem:[#allocation0]]
  $region74: #{generator_forward.1} parent=0
    _
  %s15 = ssub.s32 1, %s13
  %s16 = scalar_select 0, %s15, %s13
  $region1: #{generator_forward.1} parent=0
    #allocation2 [shape = 'u8[65536]{0}', space=vmem, size = 0x10000, scoped, tag = 'input window, operand 1, single buffered']
    #allocation3 [shape = 's32[1]{0}', space=sflag, size = 0x4, scoped, tag = 'scoped memory for generator_forward.1']
    #allocation4 [shape = 'u8[262144]{0}', space=vmem, size = 0x40000, scoped, tag = 'input window, operand 4, single buffered']
    #allocation5 [shape = 's32[1]{0}', space=sflag, size = 0x4, scoped, tag = 'scoped memory for generator_forward.1']
    #allocation6 [shape = 'u8[1048576]{0}', space=vmem, size = 0x100000, scoped, tag = 'input window, operand 7, single buffered']
    #allocation7 [shape = 'u8[262144]{0}', space=vmem, size = 0x40000, scoped, tag = 'input window, operand 10, single buffered']
    #allocation8 [shape = 's32[1]{0}', space=sflag, size = 0x4, scoped, tag = 'scoped memory for generator_forward.1']
    %17 = vsyncpa [#allocation3], 0
    %18 = vsyncpa [#allocation5], 0
    %19 = vsyncpa [#allocation8], 0
    // Predicated region
    $region2: #{generator_forward.1} parent=1 // pred_check
      _
    $region3: #{generator_forward.1} parent=1 // pred_check_branch
      %21 = sbr.rel (0) target = $region5
    $region4: #{generator_forward.1} parent=1 // pred_region
      _
    $region5: #{generator_forward.1} parent=1 // pred_fallthru
      _
    // Predicated region
    $region6: #{generator_forward.1} parent=1 // pred_check
      _
    $region7: #{generator_forward.1} parent=1 // pred_check_branch
      %23 = sbr.rel (0) target = $region9
    $region8: #{generator_forward.1} parent=1 // pred_region
      %s25 = ssub.s32 2048, 2048
      %26 = vsyncadd [#allocation3], %s25
      %s27 = sshll.u32 [#allocation2], 4
      %s28 = int_to_ptr.vmem [resolvable:$true] %s27
      %33 = dma.hbm_to_vmem [thread:$0]  %s1, 2048, %s28, [#allocation3], 128, 128, 8
    $region9: #{generator_forward.1} parent=1 // pred_fallthru
      _
    // Predicated region
    $region10: #{generator_forward.1} parent=1 // pred_check
      _
    $region11: #{generator_forward.1} parent=1 // pred_check_branch
      %35 = sbr.rel (0) target = $region13
    $region12: #{generator_forward.1} parent=1 // pred_region
      _
    $region13: #{generator_forward.1} parent=1 // pred_fallthru
      _
    // Predicated region
    $region14: #{generator_forward.1} parent=1 // pred_check
      _
    $region15: #{generator_forward.1} parent=1 // pred_check_branch
      %37 = sbr.rel (0) target = $region17
    $region16: #{generator_forward.1} parent=1 // pred_region
      _
    $region17: #{generator_forward.1} parent=1 // pred_fallthru
      _
    // Predicated region
    $region18: #{generator_forward.1} parent=1 // pred_check
      _
    $region19: #{generator_forward.1} parent=1 // pred_check_branch
      %39 = sbr.rel (0) target = $region21
    $region20: #{generator_forward.1} parent=1 // pred_region
      %s41 = ssub.s32 8192, 8192
      %42 = vsyncadd [#allocation5], %s41
      %s43 = sshll.u32 [#allocation4], 4
      %s44 = int_to_ptr.vmem [resolvable:$true] %s43
      %49 = dma.hbm_to_vmem [thread:$0]  %s4, 8192, %s44, [#allocation5], 256, 256, 16
    $region21: #{generator_forward.1} parent=1 // pred_fallthru
      _
    // Predicated region
    $region22: #{generator_forward.1} parent=1 // pred_check
      _
    $region23: #{generator_forward.1} parent=1 // pred_check_branch
      %51 = sbr.rel (0) target = $region25
    $region24: #{generator_forward.1} parent=1 // pred_region
      _
    $region25: #{generator_forward.1} parent=1 // pred_fallthru
      _
    // Predicated region
    $region26: #{generator_forward.1} parent=1 // pred_check
      _
    $region27: #{generator_forward.1} parent=1 // pred_check_branch
      %53 = sbr.rel (0) target = $region29
    $region28: #{generator_forward.1} parent=1 // pred_region
      _
    $region29: #{generator_forward.1} parent=1 // pred_fallthru
      _
    // Predicated region
    $region30: #{generator_forward.1} parent=1 // pred_check
      _
    $region31: #{generator_forward.1} parent=1 // pred_check_branch
      %55 = sbr.rel (0) target = $region33
    $region32: #{generator_forward.1} parent=1 // pred_region
      %s57 = ssub.s32 32768, 32768
      %58 = vsyncadd [#allocation5], %s57
      %s59 = sshll.u32 [#allocation6], 4
      %s60 = int_to_ptr.vmem [resolvable:$true] %s59
      %65 = dma.hbm_to_vmem [thread:$0]  %s7, 32768, %s60, [#allocation5], 512, 512, 32
    $region33: #{generator_forward.1} parent=1 // pred_fallthru
      _
    // Predicated region
    $region34: #{generator_forward.1} parent=1 // pred_check
      _
    $region35: #{generator_forward.1} parent=1 // pred_check_branch
      %67 = sbr.rel (0) target = $region37
    $region36: #{generator_forward.1} parent=1 // pred_region
      _
    $region37: #{generator_forward.1} parent=1 // pred_fallthru
      _
    // Predicated region
    $region38: #{generator_forward.1} parent=1 // pred_check
      _
    $region39: #{generator_forward.1} parent=1 // pred_check_branch
      %69 = sbr.rel (0) target = $region41
    $region40: #{generator_forward.1} parent=1 // pred_region
      _
    $region41: #{generator_forward.1} parent=1 // pred_fallthru
      _
    // Predicated region
    $region42: #{generator_forward.1} parent=1 // pred_check
      _
    $region43: #{generator_forward.1} parent=1 // pred_check_branch
      %71 = sbr.rel (0) target = $region45
    $region44: #{generator_forward.1} parent=1 // pred_region
      %s73 = ssub.s32 8192, 8192
      %74 = vsyncadd [#allocation8], %s73
      %s75 = sshll.u32 [#allocation7], 4
      %s76 = int_to_ptr.vmem [resolvable:$true] %s75
      %81 = dma.hbm_to_vmem [thread:$0]  %s10, 8192, %s76, [#allocation8], 64, 64, 4
    $region45: #{generator_forward.1} parent=1 // pred_fallthru
      _
    // Predicated region
    $region46: #{generator_forward.1} parent=1 // pred_check
      _
    $region47: #{generator_forward.1} parent=1 // pred_check_branch
      %83 = sbr.rel (0) target = $region49
    $region48: #{generator_forward.1} parent=1 // pred_region
      _
    $region49: #{generator_forward.1} parent=1 // pred_fallthru
      _
    // Predicated region
    $region50: #{generator_forward.1} parent=1 // pred_check
      _
    $region51: #{generator_forward.1} parent=1 // pred_check_branch
      %85 = sbr.rel (0) target = $region53
    $region52: #{generator_forward.1} parent=1 // pred_region
      %86 = dma.done [#allocation3], 2048
    $region53: #{generator_forward.1} parent=1 // pred_fallthru
      _
    // Predicated region
    $region54: #{generator_forward.1} parent=1 // pred_check
      _
    $region55: #{generator_forward.1} parent=1 // pred_check_branch
      %88 = sbr.rel (0) target = $region57
    $region56: #{generator_forward.1} parent=1 // pred_region
      %89 = dma.done [#allocation5], 8192
    $region57: #{generator_forward.1} parent=1 // pred_fallthru
      _
    // Predicated region
    $region58: #{generator_forward.1} parent=1 // pred_check
      _
    $region59: #{generator_forward.1} parent=1 // pred_check_branch
      %91 = sbr.rel (0) target = $region61
    $region60: #{generator_forward.1} parent=1 // pred_region
      %92 = dma.done [#allocation5], 32768
    $region61: #{generator_forward.1} parent=1 // pred_fallthru
      _
    // Predicated region
    $region62: #{generator_forward.1} parent=1 // pred_check
      _
    $region63: #{generator_forward.1} parent=1 // pred_check_branch
      %94 = sbr.rel (0) target = $region65
    $region64: #{generator_forward.1} parent=1 // pred_region
      %95 = dma.done [#allocation8], 8192
    $region65: #{generator_forward.1} parent=1 // pred_fallthru
      _
    %v97 = vlaneseq
    %v98 = vshrl.u32 %v97, 7
    %v99 = vadd.s32 %v98, 8
    %vm100 = vcmp.lt.s32.totalorder %v98, 8
    %vm101 = vcmp.lt.s32.totalorder %v99, 8
    %v102 = vld [vmem:[%s0] sm:$0xff]
    %v103 = vld [vmem:[%s0 + $0x8] sm:$0xff]
    %v104 = vpack.c.bf16 %v103, %v102
    %v105 = vld [vmem:[#allocation2] sm:$0xff]
    %v106 = vld [vmem:[#allocation2 + $0x8] sm:$0xff]
    %v107 = vld [vmem:[#allocation2 + $0x10] sm:$0xff]
    %v108 = vld [vmem:[#allocation2 + $0x18] sm:$0xff]
    %v109 = vld [vmem:[#allocation2 + $0x20] sm:$0xff]
    %v110 = vld [vmem:[#allocation2 + $0x28] sm:$0xff]
    %v111 = vld [vmem:[#allocation2 + $0x30] sm:$0xff]
    %v112 = vld [vmem:[#allocation2 + $0x38] sm:$0xff]
    %v113 = vld [vmem:[#allocation2 + $0x40] sm:$0xff]
    %v114 = vld [vmem:[#allocation2 + $0x48] sm:$0xff]
    %v115 = vld [vmem:[#allocation2 + $0x50] sm:$0xff]
    %v116 = vld [vmem:[#allocation2 + $0x58] sm:$0xff]
    %v117 = vld [vmem:[#allocation2 + $0x60] sm:$0xff]
    %v118 = vld [vmem:[#allocation2 + $0x68] sm:$0xff]
    %v119 = vld [vmem:[#allocation2 + $0x70] sm:$0xff]
    %v120 = vld [vmem:[#allocation2 + $0x78] sm:$0xff]
    %v137 = vunpack.c.l.b16 %v105
    %v138 = vunpack.c.h.b16 %v105
    %v139 = vunpack.c.l.b16 %v106
    %v140 = vunpack.c.h.b16 %v106
    %v141 = vunpack.c.l.b16 %v107
    %v142 = vunpack.c.h.b16 %v107
    %v143 = vunpack.c.l.b16 %v108
    %v144 = vunpack.c.h.b16 %v108
    %v145 = vunpack.c.l.b16 %v109
    %v146 = vunpack.c.h.b16 %v109
    %v147 = vunpack.c.l.b16 %v110
    %v148 = vunpack.c.h.b16 %v110
    %v149 = vunpack.c.l.b16 %v111
    %v150 = vunpack.c.h.b16 %v111
    %v151 = vunpack.c.l.b16 %v112
    %v152 = vunpack.c.h.b16 %v112
    %v153 = vunpack.c.l.b16 %v113
    %v154 = vunpack.c.h.b16 %v113
    %v155 = vunpack.c.l.b16 %v114
    %v156 = vunpack.c.h.b16 %v114
    %v157 = vunpack.c.l.b16 %v115
    %v158 = vunpack.c.h.b16 %v115
    %v159 = vunpack.c.l.b16 %v116
    %v160 = vunpack.c.h.b16 %v116
    %v161 = vunpack.c.l.b16 %v117
    %v162 = vunpack.c.h.b16 %v117
    %v163 = vunpack.c.l.b16 %v118
    %v164 = vunpack.c.h.b16 %v118
    %v165 = vunpack.c.l.b16 %v119
    %v166 = vunpack.c.h.b16 %v119
    %v167 = vunpack.c.l.b16 %v120
    %v168 = vunpack.c.h.b16 %v120
    %v169 = vpack.c.b16 %v139, %v137
    %v170 = vpack.c.b16 %v140, %v138
    %v171 = vpack.c.b16 %v143, %v141
    %v172 = vpack.c.b16 %v144, %v142
    %v173 = vpack.c.b16 %v147, %v145
    %v174 = vpack.c.b16 %v148, %v146
    %v175 = vpack.c.b16 %v151, %v149
    %v176 = vpack.c.b16 %v152, %v150
    %v177 = vpack.c.b16 %v155, %v153
    %v178 = vpack.c.b16 %v156, %v154
    %v179 = vpack.c.b16 %v159, %v157
    %v180 = vpack.c.b16 %v160, %v158
    %v181 = vpack.c.b16 %v163, %v161
    %v182 = vpack.c.b16 %v164, %v162
    %v183 = vpack.c.b16 %v167, %v165
    %v184 = vpack.c.b16 %v168, %v166
    %201 = vmatprep.subr.bf16.mxu0 %v184
    %202 = vmatpush1.bf16.msra.mxu0 %v183
    %203 = vmatprep.subr.bf16.mxu0 %v182
    %204 = vmatpush1.bf16.msra.mxu0 %v181
    %205 = vmatprep.subr.bf16.mxu0 %v180
    %206 = vmatpush1.bf16.msra.mxu0 %v179
    %207 = vmatprep.subr.bf16.mxu0 %v178
    %208 = vmatpush1.bf16.msra.mxu0 %v177
    %209 = vmatprep.subr.bf16.mxu0 %v176
    %210 = vmatpush1.bf16.msra.mxu0 %v175
    %211 = vmatprep.subr.bf16.mxu0 %v174
    %212 = vmatpush1.bf16.msra.mxu0 %v173
    %213 = vmatprep.subr.bf16.mxu0 %v172
    %214 = vmatpush1.bf16.msra.mxu0 %v171
    %215 = vmatprep.subr.bf16.mxu0 %v170
    %216 = vmatpush1.bf16.msra.mxu0 %v169
    %217 = vmatprep.subr.bf16.mxu0 0
    %218 = vmatpush2.bf16.msra.mxu0 0
    %219 = vmatprep.subr.bf16.mxu0 0
    %220 = vmatpush2.bf16.msra.mxu0 0
    %221 = vmatprep.subr.bf16.mxu0 0
    %222 = vmatpush2.bf16.msra.mxu0 0
    %223 = vmatprep.subr.bf16.mxu0 0
    %224 = vmatpush2.bf16.msra.mxu0 0
    %225 = vmatprep.subr.bf16.mxu0 0
    %226 = vmatpush2.bf16.msra.mxu0 0
    %227 = vmatprep.subr.bf16.mxu0 0
    %228 = vmatpush2.bf16.msra.mxu0 0
    %229 = vmatprep.subr.bf16.mxu0 0
    %230 = vmatpush2.bf16.msra.mxu0 0
    %231 = vmatprep.subr.bf16.mxu0 0
    %232 = vmatpush2.bf16.msra.mxu0 0
    %233 = vmatprep.mubr.bf16.mxu0 0
    %234 = vmatmul.mubr.bf16.gmra.mxu0 %v104
    %v235 = vpop.f32.mrf.mxu0
    %v236 = vadd.f32 0.0, %v235
    %v237 = vpop.f32.mrf.mxu0
    %v238 = vadd.f32 0.0, %v237
    %v239 = vpop.f32.mrf.mxu0
    %v240 = vadd.f32 0.0, %v239
    %v241 = vpop.f32.mrf.mxu0
    %v242 = vadd.f32 0.0, %v241
    %243 = vdwg.mxu0
    %v244 = vadd.f32 %v236, %v240
    %v245 = vrot.slane %v244, 4
    %v246 = vadd.f32 %v244, %v245
    %v247 = vrot.slane %v246, 2
    %v248 = vadd.f32 %v246, %v247
    %v249 = vrot.slane %v248, 1
    %v250 = vadd.f32 %v248, %v249
    %v251 = vadd.f32 %v238, %v242
    %v252 = vrot.slane %v251, 4
    %v253 = vadd.f32 %v251, %v252
    %v254 = vrot.slane %v253, 2
    %v255 = vadd.f32 %v253, %v254
    %v256 = vrot.slane %v255, 1
    %v257 = vadd.f32 %v255, %v256
    %v258 = vmul.f32 %v250, 0.125
    %v259 = vmul.f32 %v257, 0.125
    %v260 = vmul.f32 %v236, %v236
    %v261 = vmul.f32 %v238, %v238
    %v262 = vmul.f32 %v240, %v240
    %v263 = vmul.f32 %v242, %v242
    %v264 = vadd.f32 %v260, %v262
    %v265 = vrot.slane %v264, 4
    %v266 = vadd.f32 %v264, %v265
    %v267 = vrot.slane %v266, 2
    %v268 = vadd.f32 %v266, %v267
    %v269 = vrot.slane %v268, 1
    %v270 = vadd.f32 %v268, %v269
    %v271 = vadd.f32 %v261, %v263
    %v272 = vrot.slane %v271, 4
    %v273 = vadd.f32 %v271, %v272
    %v274 = vrot.slane %v273, 2
    %v275 = vadd.f32 %v273, %v274
    %v276 = vrot.slane %v275, 1
    %v277 = vadd.f32 %v275, %v276
    %v278 = vmul.f32 %v270, 0.125
    %v279 = vmul.f32 %v277, 0.125
    %v280 = vmul.f32 %v258, %v258
    %v281 = vmul.f32 %v259, %v259
    %v282 = vsub.f32 %v278, %v280
    %v283 = vsub.f32 %v279, %v281
    %v284 = vadd.f32 %v282, 1e-05
    %v285 = vadd.f32 %v283, 1e-05
    %v286 = vrsqrt.pop %v284
    %v287 = vrsqrt.pop %v285
    %v288 = vld [vmem:[%s2] sm:$0x3]
    %v290 = vlaneseq
    %v291 = vshrl.u32 %v290, 7
    %v292 = vsub.s32 0, %v291
    %v293 = vrot.slane %v288, %v292
    %v294 = vlaneseq
    %v295 = vshrl.u32 %v294, 7
    %v296 = vsub.s32 1, %v295
    %v297 = vrot.slane %v288, %v296
    %v300 = vmul.f32 %v286, %v293
    %v301 = vmul.f32 %v287, %v297
    %v302 = vld [vmem:[%s3] sm:$0x3]
    %v303 = vmul.f32 %v258, %v300
    %v304 = vmul.f32 %v259, %v301
    %v307 = vcombine.low %v303, %v304
    %v309 = vunpack.c.l.s4 1966171168
    %v310 = vunpack.c.0.s8 %v309
    %v311 = vlaneseq
    %v312 = vshrl.u32 %v311, 7
    %v313 = vsub.s32 %v310, %v312
    %v314 = vrot.slane %v307, %v313
    %v316 = vunpack.c.l.s4 1966171168
    %v317 = vunpack.c.0.s8 %v316
    %v318 = vlaneseq
    %v319 = vshrl.u32 %v318, 7
    %v320 = vsub.s32 %v317, %v319
    %v321 = vrot.slane %v314, %v320
    %v323 = vsub.f32 %v302, %v321
    %v324 = vlaneseq
    %v325 = vshrl.u32 %v324, 7
    %v326 = vsub.s32 0, %v325
    %v327 = vrot.slane %v300, %v326
    %v328 = vlaneseq
    %v329 = vshrl.u32 %v328, 7
    %v330 = vsub.s32 0, %v329
    %v331 = vrot.slane %v301, %v330
    %v332 = vmul.f32 %v236, %v327
    %v333 = vmul.f32 %v238, %v331
    %v334 = vmul.f32 %v240, %v327
    %v335 = vmul.f32 %v242, %v331
    %v337 = vlaneseq
    %v338 = vshrl.u32 %v337, 7
    %v339 = vsub.s32 0, %v338
    %v340 = vrot.slane %v323, %v339
    %v341 = vlaneseq
    %v342 = vshrl.u32 %v341, 7
    %v343 = vsub.s32 1, %v342
    %v344 = vrot.slane %v323, %v343
    %v347 = vadd.f32 %v332, %v340
    %v348 = vadd.f32 %v333, %v344
    %v349 = vadd.f32 %v334, %v340
    %v350 = vadd.f32 %v335, %v344
    %v351 = vmax.f32 %v347, 0.0
    %v352 = vmax.f32 %v348, 0.0
    %v353 = vmax.f32 %v349, 0.0
    %v354 = vmax.f32 %v350, 0.0
    %v355 = vsel %vm100, 1, 0
    %v356 = vsel %vm101, 1, 0
    %vm357 = vcmp.eq.s32.totalorder %v355, 1
    %vm358 = vcmp.eq.s32.totalorder %v356, 1
    %v359 = vsel %vm357, %v351, 0.0
    %v360 = vsel %vm357, %v352, 0.0
    %v361 = vsel %vm358, %v353, 0.0
    %v362 = vsel %vm358, %v354, 0.0
    %v363 = vpack.c.bf16 %v361, %v359
    %v364 = vpack.c.bf16 %v362, %v360
    %v365 = vld [vmem:[#allocation4] sm:$0xff]
    %v366 = vld [vmem:[#allocation4 + $0x8] sm:$0xff]
    %v367 = vld [vmem:[#allocation4 + $0x10] sm:$0xff]
    %v368 = vld [vmem:[#allocation4 + $0x18] sm:$0xff]
    %v369 = vld [vmem:[#allocation4 + $0x20] sm:$0xff]
    %v370 = vld [vmem:[#allocation4 + $0x28] sm:$0xff]
    %v371 = vld [vmem:[#allocation4 + $0x30] sm:$0xff]
    %v372 = vld [vmem:[#allocation4 + $0x38] sm:$0xff]
    %v373 = vld [vmem:[#allocation4 + $0x40] sm:$0xff]
    %v374 = vld [vmem:[#allocation4 + $0x48] sm:$0xff]
    %v375 = vld [vmem:[#allocation4 + $0x50] sm:$0xff]
    %v376 = vld [vmem:[#allocation4 + $0x58] sm:$0xff]
    %v377 = vld [vmem:[#allocation4 + $0x60] sm:$0xff]
    %v378 = vld [vmem:[#allocation4 + $0x68] sm:$0xff]
    %v379 = vld [vmem:[#allocation4 + $0x70] sm:$0xff]
    %v380 = vld [vmem:[#allocation4 + $0x78] sm:$0xff]
    %v381 = vld [vmem:[#allocation4 + $0x80] sm:$0xff]
    %v382 = vld [vmem:[#allocation4 + $0x88] sm:$0xff]
    %v383 = vld [vmem:[#allocation4 + $0x90] sm:$0xff]
    %v384 = vld [vmem:[#allocation4 + $0x98] sm:$0xff]
    %v385 = vld [vmem:[#allocation4 + $0xa0] sm:$0xff]
    %v386 = vld [vmem:[#allocation4 + $0xa8] sm:$0xff]
    %v387 = vld [vmem:[#allocation4 + $0xb0] sm:$0xff]
    %v388 = vld [vmem:[#allocation4 + $0xb8] sm:$0xff]
    %v389 = vld [vmem:[#allocation4 + $0xc0] sm:$0xff]
    %v390 = vld [vmem:[#allocation4 + $0xc8] sm:$0xff]
    %v391 = vld [vmem:[#allocation4 + $0xd0] sm:$0xff]
    %v392 = vld [vmem:[#allocation4 + $0xd8] sm:$0xff]
    %v393 = vld [vmem:[#allocation4 + $0xe0] sm:$0xff]
    %v394 = vld [vmem:[#allocation4 + $0xe8] sm:$0xff]
    %v395 = vld [vmem:[#allocation4 + $0xf0] sm:$0xff]
    %v396 = vld [vmem:[#allocation4 + $0xf8] sm:$0xff]
    %v397 = vld [vmem:[#allocation4 + $0x100] sm:$0xff]
    %v398 = vld [vmem:[#allocation4 + $0x108] sm:$0xff]
    %v399 = vld [vmem:[#allocation4 + $0x110] sm:$0xff]
    %v400 = vld [vmem:[#allocation4 + $0x118] sm:$0xff]
    %v401 = vld [vmem:[#allocation4 + $0x120] sm:$0xff]
    %v402 = vld [vmem:[#allocation4 + $0x128] sm:$0xff]
    %v403 = vld [vmem:[#allocation4 + $0x130] sm:$0xff]
    %v404 = vld [vmem:[#allocation4 + $0x138] sm:$0xff]
    %v405 = vld [vmem:[#allocation4 + $0x140] sm:$0xff]
    %v406 = vld [vmem:[#allocation4 + $0x148] sm:$0xff]
    %v407 = vld [vmem:[#allocation4 + $0x150] sm:$0xff]
    %v408 = vld [vmem:[#allocation4 + $0x158] sm:$0xff]
    %v409 = vld [vmem:[#allocation4 + $0x160] sm:$0xff]
    %v410 = vld [vmem:[#allocation4 + $0x168] sm:$0xff]
    %v411 = vld [vmem:[#allocation4 + $0x170] sm:$0xff]
    %v412 = vld [vmem:[#allocation4 + $0x178] sm:$0xff]
    %v413 = vld [vmem:[#allocation4 + $0x180] sm:$0xff]
    %v414 = vld [vmem:[#allocation4 + $0x188] sm:$0xff]
    %v415 = vld [vmem:[#allocation4 + $0x190] sm:$0xff]
    %v416 = vld [vmem:[#allocation4 + $0x198] sm:$0xff]
    %v417 = vld [vmem:[#allocation4 + $0x1a0] sm:$0xff]
    %v418 = vld [vmem:[#allocation4 + $0x1a8] sm:$0xff]
    %v419 = vld [vmem:[#allocation4 + $0x1b0] sm:$0xff]
    %v420 = vld [vmem:[#allocation4 + $0x1b8] sm:$0xff]
    %v421 = vld [vmem:[#allocation4 + $0x1c0] sm:$0xff]
    %v422 = vld [vmem:[#allocation4 + $0x1c8] sm:$0xff]
    %v423 = vld [vmem:[#allocation4 + $0x1d0] sm:$0xff]
    %v424 = vld [vmem:[#allocation4 + $0x1d8] sm:$0xff]
    %v425 = vld [vmem:[#allocation4 + $0x1e0] sm:$0xff]
    %v426 = vld [vmem:[#allocation4 + $0x1e8] sm:$0xff]
    %v427 = vld [vmem:[#allocation4 + $0x1f0] sm:$0xff]
    %v428 = vld [vmem:[#allocation4 + $0x1f8] sm:$0xff]
    %v493 = vunpack.c.l.b16 %v365
    %v494 = vunpack.c.h.b16 %v365
    %v495 = vunpack.c.l.b16 %v366
    %v496 = vunpack.c.h.b16 %v366
    %v497 = vunpack.c.l.b16 %v367
    %v498 = vunpack.c.h.b16 %v367
    %v499 = vunpack.c.l.b16 %v368
    %v500 = vunpack.c.h.b16 %v368
    %v501 = vunpack.c.l.b16 %v369
    %v502 = vunpack.c.h.b16 %v369
    %v503 = vunpack.c.l.b16 %v370
    %v504 = vunpack.c.h.b16 %v370
    %v505 = vunpack.c.l.b16 %v371
    %v506 = vunpack.c.h.b16 %v371
    %v507 = vunpack.c.l.b16 %v372
    %v508 = vunpack.c.h.b16 %v372
    %v509 = vunpack.c.l.b16 %v373
    %v510 = vunpack.c.h.b16 %v373
    %v511 = vunpack.c.l.b16 %v374
    %v512 = vunpack.c.h.b16 %v374
    %v513 = vunpack.c.l.b16 %v375
    %v514 = vunpack.c.h.b16 %v375
    %v515 = vunpack.c.l.b16 %v376
    %v516 = vunpack.c.h.b16 %v376
    %v517 = vunpack.c.l.b16 %v377
    %v518 = vunpack.c.h.b16 %v377
    %v519 = vunpack.c.l.b16 %v378
    %v520 = vunpack.c.h.b16 %v378
    %v521 = vunpack.c.l.b16 %v379
    %v522 = vunpack.c.h.b16 %v379
    %v523 = vunpack.c.l.b16 %v380
    %v524 = vunpack.c.h.b16 %v380
    %v525 = vunpack.c.l.b16 %v381
    %v526 = vunpack.c.h.b16 %v381
    %v527 = vunpack.c.l.b16 %v382
    %v528 = vunpack.c.h.b16 %v382
    %v529 = vunpack.c.l.b16 %v383
    %v530 = vunpack.c.h.b16 %v383
    %v531 = vunpack.c.l.b16 %v384
    %v532 = vunpack.c.h.b16 %v384
    %v533 = vunpack.c.l.b16 %v385
    %v534 = vunpack.c.h.b16 %v385
    %v535 = vunpack.c.l.b16 %v386
    %v536 = vunpack.c.h.b16 %v386
    %v537 = vunpack.c.l.b16 %v387
    %v538 = vunpack.c.h.b16 %v387
    %v539 = vunpack.c.l.b16 %v388
    %v540 = vunpack.c.h.b16 %v388
    %v541 = vunpack.c.l.b16 %v389
    %v542 = vunpack.c.h.b16 %v389
    %v543 = vunpack.c.l.b16 %v390
    %v544 = vunpack.c.h.b16 %v390
    %v545 = vunpack.c.l.b16 %v391
    %v546 = vunpack.c.h.b16 %v391
    %v547 = vunpack.c.l.b16 %v392
    %v548 = vunpack.c.h.b16 %v392
    %v549 = vunpack.c.l.b16 %v393
    %v550 = vunpack.c.h.b16 %v393
    %v551 = vunpack.c.l.b16 %v394
    %v552 = vunpack.c.h.b16 %v394
    %v553 = vunpack.c.l.b16 %v395
    %v554 = vunpack.c.h.b16 %v395
    %v555 = vunpack.c.l.b16 %v396
    %v556 = vunpack.c.h.b16 %v396
    %v557 = vunpack.c.l.b16 %v397
    %v558 = vunpack.c.h.b16 %v397
    %v559 = vunpack.c.l.b16 %v398
    %v560 = vunpack.c.h.b16 %v398
    %v561 = vunpack.c.l.b16 %v399
    %v562 = vunpack.c.h.b16 %v399
    %v563 = vunpack.c.l.b16 %v400
    %v564 = vunpack.c.h.b16 %v400
    %v565 = vunpack.c.l.b16 %v401
    %v566 = vunpack.c.h.b16 %v401
    %v567 = vunpack.c.l.b16 %v402
    %v568 = vunpack.c.h.b16 %v402
    %v569 = vunpack.c.l.b16 %v403
    %v570 = vunpack.c.h.b16 %v403
    %v571 = vunpack.c.l.b16 %v404
    %v572 = vunpack.c.h.b16 %v404
    %v573 = vunpack.c.l.b16 %v405
    %v574 = vunpack.c.h.b16 %v405
    %v575 = vunpack.c.l.b16 %v406
    %v576 = vunpack.c.h.b16 %v406
    %v577 = vunpack.c.l.b16 %v407
    %v578 = vunpack.c.h.b16 %v407
    %v579 = vunpack.c.l.b16 %v408
    %v580 = vunpack.c.h.b16 %v408
    %v581 = vunpack.c.l.b16 %v409
    %v582 = vunpack.c.h.b16 %v409
    %v583 = vunpack.c.l.b16 %v410
    %v584 = vunpack.c.h.b16 %v410
    %v585 = vunpack.c.l.b16 %v411
    %v586 = vunpack.c.h.b16 %v411
    %v587 = vunpack.c.l.b16 %v412
    %v588 = vunpack.c.h.b16 %v412
    %v589 = vunpack.c.l.b16 %v413
    %v590 = vunpack.c.h.b16 %v413
    %v591 = vunpack.c.l.b16 %v414
    %v592 = vunpack.c.h.b16 %v414
    %v593 = vunpack.c.l.b16 %v415
    %v594 = vunpack.c.h.b16 %v415
    %v595 = vunpack.c.l.b16 %v416
    %v596 = vunpack.c.h.b16 %v416
    %v597 = vunpack.c.l.b16 %v417
    %v598 = vunpack.c.h.b16 %v417
    %v599 = vunpack.c.l.b16 %v418
    %v600 = vunpack.c.h.b16 %v418
    %v601 = vunpack.c.l.b16 %v419
    %v602 = vunpack.c.h.b16 %v419
    %v603 = vunpack.c.l.b16 %v420
    %v604 = vunpack.c.h.b16 %v420
    %v605 = vunpack.c.l.b16 %v421
    %v606 = vunpack.c.h.b16 %v421
    %v607 = vunpack.c.l.b16 %v422
    %v608 = vunpack.c.h.b16 %v422
    %v609 = vunpack.c.l.b16 %v423
    %v610 = vunpack.c.h.b16 %v423
    %v611 = vunpack.c.l.b16 %v424
    %v612 = vunpack.c.h.b16 %v424
    %v613 = vunpack.c.l.b16 %v425
    %v614 = vunpack.c.h.b16 %v425
    %v615 = vunpack.c.l.b16 %v426
    %v616 = vunpack.c.h.b16 %v426
    %v617 = vunpack.c.l.b16 %v427
    %v618 = vunpack.c.h.b16 %v427
    %v619 = vunpack.c.l.b16 %v428
    %v620 = vunpack.c.h.b16 %v428
    %v621 = vpack.c.b16 %v497, %v493
    %v622 = vpack.c.b16 %v498, %v494
    %v623 = vpack.c.b16 %v499, %v495
    %v624 = vpack.c.b16 %v500, %v496
    %v625 = vpack.c.b16 %v505, %v501
    %v626 = vpack.c.b16 %v506, %v502
    %v627 = vpack.c.b16 %v507, %v503
    %v628 = vpack.c.b16 %v508, %v504
    %v629 = vpack.c.b16 %v513, %v509
    %v630 = vpack.c.b16 %v514, %v510
    %v631 = vpack.c.b16 %v515, %v511
    %v632 = vpack.c.b16 %v516, %v512
    %v633 = vpack.c.b16 %v521, %v517
    %v634 = vpack.c.b16 %v522, %v518
    %v635 = vpack.c.b16 %v523, %v519
    %v636 = vpack.c.b16 %v524, %v520
    %v637 = vpack.c.b16 %v529, %v525
    %v638 = vpack.c.b16 %v530, %v526
    %v639 = vpack.c.b16 %v531, %v527
    %v640 = vpack.c.b16 %v532, %v528
    %v641 = vpack.c.b16 %v537, %v533
    %v642 = vpack.c.b16 %v538, %v534
    %v643 = vpack.c.b16 %v539, %v535
    %v644 = vpack.c.b16 %v540, %v536
    %v645 = vpack.c.b16 %v545, %v541
    %v646 = vpack.c.b16 %v546, %v542
    %v647 = vpack.c.b16 %v547, %v543
    %v648 = vpack.c.b16 %v548, %v544
    %v649 = vpack.c.b16 %v553, %v549
    %v650 = vpack.c.b16 %v554, %v550
    %v651 = vpack.c.b16 %v555, %v551
    %v652 = vpack.c.b16 %v556, %v552
    %v653 = vpack.c.b16 %v561, %v557
    %v654 = vpack.c.b16 %v562, %v558
    %v655 = vpack.c.b16 %v563, %v559
    %v656 = vpack.c.b16 %v564, %v560
    %v657 = vpack.c.b16 %v569, %v565
    %v658 = vpack.c.b16 %v570, %v566
    %v659 = vpack.c.b16 %v571, %v567
    %v660 = vpack.c.b16 %v572, %v568
    %v661 = vpack.c.b16 %v577, %v573
    %v662 = vpack.c.b16 %v578, %v574
    %v663 = vpack.c.b16 %v579, %v575
    %v664 = vpack.c.b16 %v580, %v576
    %v665 = vpack.c.b16 %v585, %v581
    %v666 = vpack.c.b16 %v586, %v582
    %v667 = vpack.c.b16 %v587, %v583
    %v668 = vpack.c.b16 %v588, %v584
    %v669 = vpack.c.b16 %v593, %v589
    %v670 = vpack.c.b16 %v594, %v590
    %v671 = vpack.c.b16 %v595, %v591
    %v672 = vpack.c.b16 %v596, %v592
    %v673 = vpack.c.b16 %v601, %v597
    %v674 = vpack.c.b16 %v602, %v598
    %v675 = vpack.c.b16 %v603, %v599
    %v676 = vpack.c.b16 %v604, %v600
    %v677 = vpack.c.b16 %v609, %v605
    %v678 = vpack.c.b16 %v610, %v606
    %v679 = vpack.c.b16 %v611, %v607
    %v680 = vpack.c.b16 %v612, %v608
    %v681 = vpack.c.b16 %v617, %v613
    %v682 = vpack.c.b16 %v618, %v614
    %v683 = vpack.c.b16 %v619, %v615
    %v684 = vpack.c.b16 %v620, %v616
    %749 = vmatprep.subr.bf16.mxu0 %v650
    %750 = vmatpush1.bf16.msra.mxu0 %v649
    %751 = vmatprep.subr.bf16.mxu0 %v646
    %752 = vmatpush1.bf16.msra.mxu0 %v645
    %753 = vmatprep.subr.bf16.mxu0 %v642
    %754 = vmatpush1.bf16.msra.mxu0 %v641
    %755 = vmatprep.subr.bf16.mxu0 %v638
    %756 = vmatpush1.bf16.msra.mxu0 %v637
    %757 = vmatprep.subr.bf16.mxu0 %v634
    %758 = vmatpush1.bf16.msra.mxu0 %v633
    %759 = vmatprep.subr.bf16.mxu0 %v630
    %760 = vmatpush1.bf16.msra.mxu0 %v629
    %761 = vmatprep.subr.bf16.mxu0 %v626
    %762 = vmatpush1.bf16.msra.mxu0 %v625
    %763 = vmatprep.subr.bf16.mxu0 %v622
    %764 = vmatpush1.bf16.msra.mxu0 %v621
    %765 = vmatprep.subr.bf16.mxu0 %v682
    %766 = vmatpush2.bf16.msra.mxu0 %v681
    %767 = vmatprep.subr.bf16.mxu0 %v678
    %768 = vmatpush2.bf16.msra.mxu0 %v677
    %769 = vmatprep.subr.bf16.mxu0 %v674
    %770 = vmatpush2.bf16.msra.mxu0 %v673
    %771 = vmatprep.subr.bf16.mxu0 %v670
    %772 = vmatpush2.bf16.msra.mxu0 %v669
    %773 = vmatprep.subr.bf16.mxu0 %v666
    %774 = vmatpush2.bf16.msra.mxu0 %v665
    %775 = vmatprep.subr.bf16.mxu0 %v662
    %776 = vmatpush2.bf16.msra.mxu0 %v661
    %777 = vmatprep.subr.bf16.mxu0 %v658
    %778 = vmatpush2.bf16.msra.mxu0 %v657
    %779 = vmatprep.subr.bf16.mxu0 %v654
    %780 = vmatpush2.bf16.msra.mxu0 %v653
    %781 = vmatprep.mubr.bf16.mxu0 %v364
    %782 = vmatmul.mubr.bf16.gmra.mxu0 %v363
    %v783 = vpop.f32.mrf.mxu0
    %v784 = vadd.f32 0.0, %v783
    %v785 = vpop.f32.mrf.mxu0
    %v786 = vadd.f32 0.0, %v785
    %v787 = vpop.f32.mrf.mxu0
    %v788 = vadd.f32 0.0, %v787
    %v789 = vpop.f32.mrf.mxu0
    %v790 = vadd.f32 0.0, %v789
    %791 = vdwg.mxu0
    %792 = vmatprep.subr.bf16.mxu0 %v652
    %793 = vmatpush1.bf16.msra.mxu0 %v651
    %794 = vmatprep.subr.bf16.mxu0 %v648
    %795 = vmatpush1.bf16.msra.mxu0 %v647
    %796 = vmatprep.subr.bf16.mxu0 %v644
    %797 = vmatpush1.bf16.msra.mxu0 %v643
    %798 = vmatprep.subr.bf16.mxu0 %v640
    %799 = vmatpush1.bf16.msra.mxu0 %v639
    %800 = vmatprep.subr.bf16.mxu0 %v636
    %801 = vmatpush1.bf16.msra.mxu0 %v635
    %802 = vmatprep.subr.bf16.mxu0 %v632
    %803 = vmatpush1.bf16.msra.mxu0 %v631
    %804 = vmatprep.subr.bf16.mxu0 %v628
    %805 = vmatpush1.bf16.msra.mxu0 %v627
    %806 = vmatprep.subr.bf16.mxu0 %v624
    %807 = vmatpush1.bf16.msra.mxu0 %v623
    %808 = vmatprep.subr.bf16.mxu0 %v684
    %809 = vmatpush2.bf16.msra.mxu0 %v683
    %810 = vmatprep.subr.bf16.mxu0 %v680
    %811 = vmatpush2.bf16.msra.mxu0 %v679
    %812 = vmatprep.subr.bf16.mxu0 %v676
    %813 = vmatpush2.bf16.msra.mxu0 %v675
    %814 = vmatprep.subr.bf16.mxu0 %v672
    %815 = vmatpush2.bf16.msra.mxu0 %v671
    %816 = vmatprep.subr.bf16.mxu0 %v668
    %817 = vmatpush2.bf16.msra.mxu0 %v667
    %818 = vmatprep.subr.bf16.mxu0 %v664
    %819 = vmatpush2.bf16.msra.mxu0 %v663
    %820 = vmatprep.subr.bf16.mxu0 %v660
    %821 = vmatpush2.bf16.msra.mxu0 %v659
    %822 = vmatprep.subr.bf16.mxu0 %v656
    %823 = vmatpush2.bf16.msra.mxu0 %v655
    %824 = vmatprep.mubr.bf16.mxu0 %v364
    %825 = vmatmul.mubr.bf16.gmra.mxu0 %v363
    %v826 = vpop.f32.mrf.mxu0
    %v827 = vadd.f32 0.0, %v826
    %v828 = vpop.f32.mrf.mxu0
    %v829 = vadd.f32 0.0, %v828
    %v830 = vpop.f32.mrf.mxu0
    %v831 = vadd.f32 0.0, %v830
    %v832 = vpop.f32.mrf.mxu0
    %v833 = vadd.f32 0.0, %v832
    %834 = vdwg.mxu0
    %v835 = vadd.f32 %v784, %v788
    %v836 = vrot.slane %v835, 4
    %v837 = vadd.f32 %v835, %v836
    %v838 = vrot.slane %v837, 2
    %v839 = vadd.f32 %v837, %v838
    %v840 = vrot.slane %v839, 1
    %v841 = vadd.f32 %v839, %v840
    %v842 = vadd.f32 %v786, %v790
    %v843 = vrot.slane %v842, 4
    %v844 = vadd.f32 %v842, %v843
    %v845 = vrot.slane %v844, 2
    %v846 = vadd.f32 %v844, %v845
    %v847 = vrot.slane %v846, 1
    %v848 = vadd.f32 %v846, %v847
    %v849 = vadd.f32 %v827, %v831
    %v850 = vrot.slane %v849, 4
    %v851 = vadd.f32 %v849, %v850
    %v852 = vrot.slane %v851, 2
    %v853 = vadd.f32 %v851, %v852
    %v854 = vrot.slane %v853, 1
    %v855 = vadd.f32 %v853, %v854
    %v856 = vadd.f32 %v829, %v833
    %v857 = vrot.slane %v856, 4
    %v858 = vadd.f32 %v856, %v857
    %v859 = vrot.slane %v858, 2
    %v860 = vadd.f32 %v858, %v859
    %v861 = vrot.slane %v860, 1
    %v862 = vadd.f32 %v860, %v861
    %v863 = vmul.f32 %v841, 0.125
    %v864 = vmul.f32 %v848, 0.125
    %v865 = vmul.f32 %v855, 0.125
    %v866 = vmul.f32 %v862, 0.125
    %v867 = vmul.f32 %v784, %v784
    %v868 = vmul.f32 %v786, %v786
    %v869 = vmul.f32 %v827, %v827
    %v870 = vmul.f32 %v829, %v829
    %v871 = vmul.f32 %v788, %v788
    %v872 = vmul.f32 %v790, %v790
    %v873 = vmul.f32 %v831, %v831
    %v874 = vmul.f32 %v833, %v833
    %v875 = vadd.f32 %v867, %v871
    %v876 = vrot.slane %v875, 4
    %v877 = vadd.f32 %v875, %v876
    %v878 = vrot.slane %v877, 2
    %v879 = vadd.f32 %v877, %v878
    %v880 = vrot.slane %v879, 1
    %v881 = vadd.f32 %v879, %v880
    %v882 = vadd.f32 %v868, %v872
    %v883 = vrot.slane %v882, 4
    %v884 = vadd.f32 %v882, %v883
    %v885 = vrot.slane %v884, 2
    %v886 = vadd.f32 %v884, %v885
    %v887 = vrot.slane %v886, 1
    %v888 = vadd.f32 %v886, %v887
    %v889 = vadd.f32 %v869, %v873
    %v890 = vrot.slane %v889, 4
    %v891 = vadd.f32 %v889, %v890
    %v892 = vrot.slane %v891, 2
    %v893 = vadd.f32 %v891, %v892
    %v894 = vrot.slane %v893, 1
    %v895 = vadd.f32 %v893, %v894
    %v896 = vadd.f32 %v870, %v874
    %v897 = vrot.slane %v896, 4
    %v898 = vadd.f32 %v896, %v897
    %v899 = vrot.slane %v898, 2
    %v900 = vadd.f32 %v898, %v899
    %v901 = vrot.slane %v900, 1
    %v902 = vadd.f32 %v900, %v901
    %v903 = vmul.f32 %v881, 0.125
    %v904 = vmul.f32 %v888, 0.125
    %v905 = vmul.f32 %v895, 0.125
    %v906 = vmul.f32 %v902, 0.125
    %v907 = vmul.f32 %v863, %v863
    %v908 = vmul.f32 %v864, %v864
    %v909 = vmul.f32 %v865, %v865
    %v910 = vmul.f32 %v866, %v866
    %v911 = vsub.f32 %v903, %v907
    %v912 = vsub.f32 %v904, %v908
    %v913 = vsub.f32 %v905, %v909
    %v914 = vsub.f32 %v906, %v910
    %v915 = vadd.f32 %v911, 1e-05
    %v916 = vadd.f32 %v912, 1e-05
    %v917 = vadd.f32 %v913, 1e-05
    %v918 = vadd.f32 %v914, 1e-05
    %v919 = vrsqrt.pop %v915
    %v920 = vrsqrt.pop %v916
    %v921 = vrsqrt.pop %v917
    %v922 = vrsqrt.pop %v918
    %v923 = vld [vmem:[%s5] sm:$0xf]
    %v925 = vlaneseq
    %v926 = vshrl.u32 %v925, 7
    %v927 = vsub.s32 0, %v926
    %v928 = vrot.slane %v923, %v927
    %v929 = vlaneseq
    %v930 = vshrl.u32 %v929, 7
    %v931 = vsub.s32 1, %v930
    %v932 = vrot.slane %v923, %v931
    %v933 = vlaneseq
    %v934 = vshrl.u32 %v933, 7
    %v935 = vsub.s32 2, %v934
    %v936 = vrot.slane %v923, %v935
    %v937 = vlaneseq
    %v938 = vshrl.u32 %v937, 7
    %v939 = vsub.s32 3, %v938
    %v940 = vrot.slane %v923, %v939
    %v945 = vmul.f32 %v919, %v928
    %v946 = vmul.f32 %v920, %v932
    %v947 = vmul.f32 %v921, %v936
    %v948 = vmul.f32 %v922, %v940
    %v949 = vld [vmem:[%s6] sm:$0xf]
    %v950 = vmul.f32 %v863, %v945
    %v951 = vmul.f32 %v864, %v946
    %v952 = vmul.f32 %v865, %v947
    %v953 = vmul.f32 %v866, %v948
    %v958 = vcombine.low %v950, %v951
    %v959 = vcombine.low %v952, %v953
    %v961 = vunpack.c.l.s4 1966171168
    %v962 = vunpack.c.0.s8 %v961
    %v963 = vlaneseq
    %v964 = vshrl.u32 %v963, 7
    %v965 = vsub.s32 %v962, %v964
    %v966 = vrot.slane %v958, %v965
    %v968 = vunpack.c.l.s4 1966171168
    %v969 = vunpack.c.0.s8 %v968
    %v970 = vlaneseq
    %v971 = vshrl.u32 %v970, 7
    %v972 = vsub.s32 %v969, %v971
    %v973 = vrot.slane %v959, %v972
    %v974 = vcombine.low %v966, %v973
    %v976 = vunpack.c.l.s4 1966171168
    %v977 = vunpack.c.0.s8 %v976
    %v978 = vlaneseq
    %v979 = vshrl.u32 %v978, 7
    %v980 = vsub.s32 %v977, %v979
    %v981 = vrot.slane %v974, %v980
    %v983 = vsub.f32 %v949, %v981
    %v984 = vlaneseq
    %v985 = vshrl.u32 %v984, 7
    %v986 = vsub.s32 0, %v985
    %v987 = vrot.slane %v945, %v986
    %v988 = vlaneseq
    %v989 = vshrl.u32 %v988, 7
    %v990 = vsub.s32 0, %v989
    %v991 = vrot.slane %v946, %v990
    %v992 = vlaneseq
    %v993 = vshrl.u32 %v992, 7
    %v994 = vsub.s32 0, %v993
    %v995 = vrot.slane %v947, %v994
    %v996 = vlaneseq
    %v997 = vshrl.u32 %v996, 7
    %v998 = vsub.s32 0, %v997
    %v999 = vrot.slane %v948, %v998
    %v1000 = vmul.f32 %v784, %v987
    %v1001 = vmul.f32 %v786, %v991
    %v1002 = vmul.f32 %v827, %v995
    %v1003 = vmul.f32 %v829, %v999
    %v1004 = vmul.f32 %v788, %v987
    %v1005 = vmul.f32 %v790, %v991
    %v1006 = vmul.f32 %v831, %v995
    %v1007 = vmul.f32 %v833, %v999
    %v1009 = vlaneseq
    %v1010 = vshrl.u32 %v1009, 7
    %v1011 = vsub.s32 0, %v1010
    %v1012 = vrot.slane %v983, %v1011
    %v1013 = vlaneseq
    %v1014 = vshrl.u32 %v1013, 7
    %v1015 = vsub.s32 1, %v1014
    %v1016 = vrot.slane %v983, %v1015
    %v1017 = vlaneseq
    %v1018 = vshrl.u32 %v1017, 7
    %v1019 = vsub.s32 2, %v1018
    %v1020 = vrot.slane %v983, %v1019
    %v1021 = vlaneseq
    %v1022 = vshrl.u32 %v1021, 7
    %v1023 = vsub.s32 3, %v1022
    %v1024 = vrot.slane %v983, %v1023
    %v1029 = vadd.f32 %v1000, %v1012
    %v1030 = vadd.f32 %v1001, %v1016
    %v1031 = vadd.f32 %v1002, %v1020
    %v1032 = vadd.f32 %v1003, %v1024
    %v1033 = vadd.f32 %v1004, %v1012
    %v1034 = vadd.f32 %v1005, %v1016
    %v1035 = vadd.f32 %v1006, %v1020
    %v1036 = vadd.f32 %v1007, %v1024
    %v1037 = vmax.f32 %v1029, 0.0
    %v1038 = vmax.f32 %v1030, 0.0
    %v1039 = vmax.f32 %v1031, 0.0
    %v1040 = vmax.f32 %v1032, 0.0
    %v1041 = vmax.f32 %v1033, 0.0
    %v1042 = vmax.f32 %v1034, 0.0
    %v1043 = vmax.f32 %v1035, 0.0
    %v1044 = vmax.f32 %v1036, 0.0
    %v1045 = vsel %vm357, %v1037, 0.0
    %v1046 = vsel %vm357, %v1038, 0.0
    %v1047 = vsel %vm357, %v1039, 0.0
    %v1048 = vsel %vm357, %v1040, 0.0
    %v1049 = vsel %vm358, %v1041, 0.0
    %v1050 = vsel %vm358, %v1042, 0.0
    %v1051 = vsel %vm358, %v1043, 0.0
    %v1052 = vsel %vm358, %v1044, 0.0
    %v1053 = vpack.c.bf16 %v1049, %v1045
    %v1054 = vpack.c.bf16 %v1050, %v1046
    %v1055 = vpack.c.bf16 %v1051, %v1047
    %v1056 = vpack.c.bf16 %v1052, %v1048
    %v1057 = vld [vmem:[#allocation6] sm:$0xff]
    %v1058 = vld [vmem:[#allocation6 + $0x8] sm:$0xff]
    %v1059 = vld [vmem:[#allocation6 + $0x10] sm:$0xff]
    %v1060 = vld [vmem:[#allocation6 + $0x18] sm:$0xff]
    %v1061 = vld [vmem:[#allocation6 + $0x20] sm:$0xff]
    %v1062 = vld [vmem:[#allocation6 + $0x28] sm:$0xff]
    %v1063 = vld [vmem:[#allocation6 + $0x30] sm:$0xff]
    %v1064 = vld [vmem:[#allocation6 + $0x38] sm:$0xff]
    %v1065 = vld [vmem:[#allocation6 + $0x40] sm:$0xff]
    %v1066 = vld [vmem:[#allocation6 + $0x48] sm:$0xff]
    %v1067 = vld [vmem:[#allocation6 + $0x50] sm:$0xff]
    %v1068 = vld [vmem:[#allocation6 + $0x58] sm:$0xff]
    %v1069 = vld [vmem:[#allocation6 + $0x60] sm:$0xff]
    %v1070 = vld [vmem:[#allocation6 + $0x68] sm:$0xff]
    %v1071 = vld [vmem:[#allocation6 + $0x70] sm:$0xff]
    %v1072 = vld [vmem:[#allocation6 + $0x78] sm:$0xff]
    %v1073 = vld [vmem:[#allocation6 + $0x80] sm:$0xff]
    %v1074 = vld [vmem:[#allocation6 + $0x88] sm:$0xff]
    %v1075 = vld [vmem:[#allocation6 + $0x90] sm:$0xff]
    %v1076 = vld [vmem:[#allocation6 + $0x98] sm:$0xff]
    %v1077 = vld [vmem:[#allocation6 + $0xa0] sm:$0xff]
    %v1078 = vld [vmem:[#allocation6 + $0xa8] sm:$0xff]
    %v1079 = vld [vmem:[#allocation6 + $0xb0] sm:$0xff]
    %v1080 = vld [vmem:[#allocation6 + $0xb8] sm:$0xff]
    %v1081 = vld [vmem:[#allocation6 + $0xc0] sm:$0xff]
    %v1082 = vld [vmem:[#allocation6 + $0xc8] sm:$0xff]
    %v1083 = vld [vmem:[#allocation6 + $0xd0] sm:$0xff]
    %v1084 = vld [vmem:[#allocation6 + $0xd8] sm:$0xff]
    %v1085 = vld [vmem:[#allocation6 + $0xe0] sm:$0xff]
    %v1086 = vld [vmem:[#allocation6 + $0xe8] sm:$0xff]
    %v1087 = vld [vmem:[#allocation6 + $0xf0] sm:$0xff]
    %v1088 = vld [vmem:[#allocation6 + $0xf8] sm:$0xff]
    %v1089 = vld [vmem:[#allocation6 + $0x100] sm:$0xff]
    %v1090 = vld [vmem:[#allocation6 + $0x108] sm:$0xff]
    %v1091 = vld [vmem:[#allocation6 + $0x110] sm:$0xff]
    %v1092 = vld [vmem:[#allocation6 + $0x118] sm:$0xff]
    %v1093 = vld [vmem:[#allocation6 + $0x120] sm:$0xff]
    %v1094 = vld [vmem:[#allocation6 + $0x128] sm:$0xff]
    %v1095 = vld [vmem:[#allocation6 + $0x130] sm:$0xff]
    %v1096 = vld [vmem:[#allocation6 + $0x138] sm:$0xff]
    %v1097 = vld [vmem:[#allocation6 + $0x140] sm:$0xff]
    %v1098 = vld [vmem:[#allocation6 + $0x148] sm:$0xff]
    %v1099 = vld [vmem:[#allocation6 + $0x150] sm:$0xff]
    %v1100 = vld [vmem:[#allocation6 + $0x158] sm:$0xff]
    %v1101 = vld [vmem:[#allocation6 + $0x160] sm:$0xff]
    %v1102 = vld [vmem:[#allocation6 + $0x168] sm:$0xff]
    %v1103 = vld [vmem:[#allocation6 + $0x170] sm:$0xff]
    %v1104 = vld [vmem:[#allocation6 + $0x178] sm:$0xff]
    %v1105 = vld [vmem:[#allocation6 + $0x180] sm:$0xff]
    %v1106 = vld [vmem:[#allocation6 + $0x188] sm:$0xff]
    %v1107 = vld [vmem:[#allocation6 + $0x190] sm:$0xff]
    %v1108 = vld [vmem:[#allocation6 + $0x198] sm:$0xff]
    %v1109 = vld [vmem:[#allocation6 + $0x1a0] sm:$0xff]
    %v1110 = vld [vmem:[#allocation6 + $0x1a8] sm:$0xff]
    %v1111 = vld [vmem:[#allocation6 + $0x1b0] sm:$0xff]
    %v1112 = vld [vmem:[#allocation6 + $0x1b8] sm:$0xff]
    %v1113 = vld [vmem:[#allocation6 + $0x1c0] sm:$0xff]
    %v1114 = vld [vmem:[#allocation6 + $0x1c8] sm:$0xff]
    %v1115 = vld [vmem:[#allocation6 + $0x1d0] sm:$0xff]
    %v1116 = vld [vmem:[#allocation6 + $0x1d8] sm:$0xff]
    %v1117 = vld [vmem:[#allocation6 + $0x1e0] sm:$0xff]
    %v1118 = vld [vmem:[#allocation6 + $0x1e8] sm:$0xff]
    %v1119 = vld [vmem:[#allocation6 + $0x1f0] sm:$0xff]
    %v1120 = vld [vmem:[#allocation6 + $0x1f8] sm:$0xff]
    %v1121 = vld [vmem:[#allocation6 + $0x200] sm:$0xff]
    %v1122 = vld [vmem:[#allocation6 + $0x208] sm:$0xff]
    %v1123 = vld [vmem:[#allocation6 + $0x210] sm:$0xff]
    %v1124 = vld [vmem:[#allocation6 + $0x218] sm:$0xff]
    %v1125 = vld [vmem:[#allocation6 + $0x220] sm:$0xff]
    %v1126 = vld [vmem:[#allocation6 + $0x228] sm:$0xff]
    %v1127 = vld [vmem:[#allocation6 + $0x230] sm:$0xff]
    %v1128 = vld [vmem:[#allocation6 + $0x238] sm:$0xff]
    %v1129 = vld [vmem:[#allocation6 + $0x240] sm:$0xff]
    %v1130 = vld [vmem:[#allocation6 + $0x248] sm:$0xff]
    %v1131 = vld [vmem:[#allocation6 + $0x250] sm:$0xff]
    %v1132 = vld [vmem:[#allocation6 + $0x258] sm:$0xff]
    %v1133 = vld [vmem:[#allocation6 + $0x260] sm:$0xff]
    %v1134 = vld [vmem:[#allocation6 + $0x268] sm:$0xff]
    %v1135 = vld [vmem:[#allocation6 + $0x270] sm:$0xff]
    %v1136 = vld [vmem:[#allocation6 + $0x278] sm:$0xff]
    %v1137 = vld [vmem:[#allocation6 + $0x280] sm:$0xff]
    %v1138 = vld [vmem:[#allocation6 + $0x288] sm:$0xff]
    %v1139 = vld [vmem:[#allocation6 + $0x290] sm:$0xff]
    %v1140 = vld [vmem:[#allocation6 + $0x298] sm:$0xff]
    %v1141 = vld [vmem:[#allocation6 + $0x2a0] sm:$0xff]
    %v1142 = vld [vmem:[#allocation6 + $0x2a8] sm:$0xff]
    %v1143 = vld [vmem:[#allocation6 + $0x2b0] sm:$0xff]
    %v1144 = vld [vmem:[#allocation6 + $0x2b8] sm:$0xff]
    %v1145 = vld [vmem:[#allocation6 + $0x2c0] sm:$0xff]
    %v1146 = vld [vmem:[#allocation6 + $0x2c8] sm:$0xff]
    %v1147 = vld [vmem:[#allocation6 + $0x2d0] sm:$0xff]
    %v1148 = vld [vmem:[#allocation6 + $0x2d8] sm:$0xff]
    %v1149 = vld [vmem:[#allocation6 + $0x2e0] sm:$0xff]
    %v1150 = vld [vmem:[#allocation6 + $0x2e8] sm:$0xff]
    %v1151 = vld [vmem:[#allocation6 + $0x2f0] sm:$0xff]
    %v1152 = vld [vmem:[#allocation6 + $0x2f8] sm:$0xff]
    %v1153 = vld [vmem:[#allocation6 + $0x300] sm:$0xff]
    %v1154 = vld [vmem:[#allocation6 + $0x308] sm:$0xff]
    %v1155 = vld [vmem:[#allocation6 + $0x310] sm:$0xff]
    %v1156 = vld [vmem:[#allocation6 + $0x318] sm:$0xff]
    %v1157 = vld [vmem:[#allocation6 + $0x320] sm:$0xff]
    %v1158 = vld [vmem:[#allocation6 + $0x328] sm:$0xff]
    %v1159 = vld [vmem:[#allocation6 + $0x330] sm:$0xff]
    %v1160 = vld [vmem:[#allocation6 + $0x338] sm:$0xff]
    %v1161 = vld [vmem:[#allocation6 + $0x340] sm:$0xff]
    %v1162 = vld [vmem:[#allocation6 + $0x348] sm:$0xff]
    %v1163 = vld [vmem:[#allocation6 + $0x350] sm:$0xff]
    %v1164 = vld [vmem:[#allocation6 + $0x358] sm:$0xff]
    %v1165 = vld [vmem:[#allocation6 + $0x360] sm:$0xff]
    %v1166 = vld [vmem:[#allocation6 + $0x368] sm:$0xff]
    %v1167 = vld [vmem:[#allocation6 + $0x370] sm:$0xff]
    %v1168 = vld [vmem:[#allocation6 + $0x378] sm:$0xff]
    %v1169 = vld [vmem:[#allocation6 + $0x380] sm:$0xff]
    %v1170 = vld [vmem:[#allocation6 + $0x388] sm:$0xff]
    %v1171 = vld [vmem:[#allocation6 + $0x390] sm:$0xff]
    %v1172 = vld [vmem:[#allocation6 + $0x398] sm:$0xff]
    %v1173 = vld [vmem:[#allocation6 + $0x3a0] sm:$0xff]
    %v1174 = vld [vmem:[#allocation6 + $0x3a8] sm:$0xff]
    %v1175 = vld [vmem:[#allocation6 + $0x3b0] sm:$0xff]
    %v1176 = vld [vmem:[#allocation6 + $0x3b8] sm:$0xff]
    %v1177 = vld [vmem:[#allocation6 + $0x3c0] sm:$0xff]
    %v1178 = vld [vmem:[#allocation6 + $0x3c8] sm:$0xff]
    %v1179 = vld [vmem:[#allocation6 + $0x3d0] sm:$0xff]
    %v1180 = vld [vmem:[#allocation6 + $0x3d8] sm:$0xff]
    %v1181 = vld [vmem:[#allocation6 + $0x3e0] sm:$0xff]
    %v1182 = vld [vmem:[#allocation6 + $0x3e8] sm:$0xff]
    %v1183 = vld [vmem:[#allocation6 + $0x3f0] sm:$0xff]
    %v1184 = vld [vmem:[#allocation6 + $0x3f8] sm:$0xff]
    %v1185 = vld [vmem:[#allocation6 + $0x400] sm:$0xff]
    %v1186 = vld [vmem:[#allocation6 + $0x408] sm:$0xff]
    %v1187 = vld [vmem:[#allocation6 + $0x410] sm:$0xff]
    %v1188 = vld [vmem:[#allocation6 + $0x418] sm:$0xff]
    %v1189 = vld [vmem:[#allocation6 + $0x420] sm:$0xff]
    %v1190 = vld [vmem:[#allocation6 + $0x428] sm:$0xff]
    %v1191 = vld [vmem:[#allocation6 + $0x430] sm:$0xff]
    %v1192 = vld [vmem:[#allocation6 + $0x438] sm:$0xff]
    %v1193 = vld [vmem:[#allocation6 + $0x440] sm:$0xff]
    %v1194 = vld [vmem:[#allocation6 + $0x448] sm:$0xff]
    %v1195 = vld [vmem:[#allocation6 + $0x450] sm:$0xff]
    %v1196 = vld [vmem:[#allocation6 + $0x458] sm:$0xff]
    %v1197 = vld [vmem:[#allocation6 + $0x460] sm:$0xff]
    %v1198 = vld [vmem:[#allocation6 + $0x468] sm:$0xff]
    %v1199 = vld [vmem:[#allocation6 + $0x470] sm:$0xff]
    %v1200 = vld [vmem:[#allocation6 + $0x478] sm:$0xff]
    %v1201 = vld [vmem:[#allocation6 + $0x480] sm:$0xff]
    %v1202 = vld [vmem:[#allocation6 + $0x488] sm:$0xff]
    %v1203 = vld [vmem:[#allocation6 + $0x490] sm:$0xff]
    %v1204 = vld [vmem:[#allocation6 + $0x498] sm:$0xff]
    %v1205 = vld [vmem:[#allocation6 + $0x4a0] sm:$0xff]
    %v1206 = vld [vmem:[#allocation6 + $0x4a8] sm:$0xff]
    %v1207 = vld [vmem:[#allocation6 + $0x4b0] sm:$0xff]
    %v1208 = vld [vmem:[#allocation6 + $0x4b8] sm:$0xff]
    %v1209 = vld [vmem:[#allocation6 + $0x4c0] sm:$0xff]
    %v1210 = vld [vmem:[#allocation6 + $0x4c8] sm:$0xff]
    %v1211 = vld [vmem:[#allocation6 + $0x4d0] sm:$0xff]
    %v1212 = vld [vmem:[#allocation6 + $0x4d8] sm:$0xff]
    %v1213 = vld [vmem:[#allocation6 + $0x4e0] sm:$0xff]
    %v1214 = vld [vmem:[#allocation6 + $0x4e8] sm:$0xff]
    %v1215 = vld [vmem:[#allocation6 + $0x4f0] sm:$0xff]
    %v1216 = vld [vmem:[#allocation6 + $0x4f8] sm:$0xff]
    %v1217 = vld [vmem:[#allocation6 + $0x500] sm:$0xff]
    %v1218 = vld [vmem:[#allocation6 + $0x508] sm:$0xff]
    %v1219 = vld [vmem:[#allocation6 + $0x510] sm:$0xff]
    %v1220 = vld [vmem:[#allocation6 + $0x518] sm:$0xff]
    %v1221 = vld [vmem:[#allocation6 + $0x520] sm:$0xff]
    %v1222 = vld [vmem:[#allocation6 + $0x528] sm:$0xff]
    %v1223 = vld [vmem:[#allocation6 + $0x530] sm:$0xff]
    %v1224 = vld [vmem:[#allocation6 + $0x538] sm:$0xff]
    %v1225 = vld [vmem:[#allocation6 + $0x540] sm:$0xff]
    %v1226 = vld [vmem:[#allocation6 + $0x548] sm:$0xff]
    %v1227 = vld [vmem:[#allocation6 + $0x550] sm:$0xff]
    %v1228 = vld [vmem:[#allocation6 + $0x558] sm:$0xff]
    %v1229 = vld [vmem:[#allocation6 + $0x560] sm:$0xff]
    %v1230 = vld [vmem:[#allocation6 + $0x568] sm:$0xff]
    %v1231 = vld [vmem:[#allocation6 + $0x570] sm:$0xff]
    %v1232 = vld [vmem:[#allocation6 + $0x578] sm:$0xff]
    %v1233 = vld [vmem:[#allocation6 + $0x580] sm:$0xff]
    %v1234 = vld [vmem:[#allocation6 + $0x588] sm:$0xff]
    %v1235 = vld [vmem:[#allocation6 + $0x590] sm:$0xff]
    %v1236 = vld [vmem:[#allocation6 + $0x598] sm:$0xff]
    %v1237 = vld [vmem:[#allocation6 + $0x5a0] sm:$0xff]
    %v1238 = vld [vmem:[#allocation6 + $0x5a8] sm:$0xff]
    %v1239 = vld [vmem:[#allocation6 + $0x5b0] sm:$0xff]
    %v1240 = vld [vmem:[#allocation6 + $0x5b8] sm:$0xff]
    %v1241 = vld [vmem:[#allocation6 + $0x5c0] sm:$0xff]
    %v1242 = vld [vmem:[#allocation6 + $0x5c8] sm:$0xff]
    %v1243 = vld [vmem:[#allocation6 + $0x5d0] sm:$0xff]
    %v1244 = vld [vmem:[#allocation6 + $0x5d8] sm:$0xff]
    %v1245 = vld [vmem:[#allocation6 + $0x5e0] sm:$0xff]
    %v1246 = vld [vmem:[#allocation6 + $0x5e8] sm:$0xff]
    %v1247 = vld [vmem:[#allocation6 + $0x5f0] sm:$0xff]
    %v1248 = vld [vmem:[#allocation6 + $0x5f8] sm:$0xff]
    %v1249 = vld [vmem:[#allocation6 + $0x600] sm:$0xff]
    %v1250 = vld [vmem:[#allocation6 + $0x608] sm:$0xff]
    %v1251 = vld [vmem:[#allocation6 + $0x610] sm:$0xff]
    %v1252 = vld [vmem:[#allocation6 + $0x618] sm:$0xff]
    %v1253 = vld [vmem:[#allocation6 + $0x620] sm:$0xff]
    %v1254 = vld [vmem:[#allocation6 + $0x628] sm:$0xff]
    %v1255 = vld [vmem:[#allocation6 + $0x630] sm:$0xff]
    %v1256 = vld [vmem:[#allocation6 + $0x638] sm:$0xff]
    %v1257 = vld [vmem:[#allocation6 + $0x640] sm:$0xff]
    %v1258 = vld [vmem:[#allocation6 + $0x648] sm:$0xff]
    %v1259 = vld [vmem:[#allocation6 + $0x650] sm:$0xff]
    %v1260 = vld [vmem:[#allocation6 + $0x658] sm:$0xff]
    %v1261 = vld [vmem:[#allocation6 + $0x660] sm:$0xff]
    %v1262 = vld [vmem:[#allocation6 + $0x668] sm:$0xff]
    %v1263 = vld [vmem:[#allocation6 + $0x670] sm:$0xff]
    %v1264 = vld [vmem:[#allocation6 + $0x678] sm:$0xff]
    %v1265 = vld [vmem:[#allocation6 + $0x680] sm:$0xff]
    %v1266 = vld [vmem:[#allocation6 + $0x688] sm:$0xff]
    %v1267 = vld [vmem:[#allocation6 + $0x690] sm:$0xff]
    %v1268 = vld [vmem:[#allocation6 + $0x698] sm:$0xff]
    %v1269 = vld [vmem:[#allocation6 + $0x6a0] sm:$0xff]
    %v1270 = vld [vmem:[#allocation6 + $0x6a8] sm:$0xff]
    %v1271 = vld [vmem:[#allocation6 + $0x6b0] sm:$0xff]
    %v1272 = vld [vmem:[#allocation6 + $0x6b8] sm:$0xff]
    %v1273 = vld [vmem:[#allocation6 + $0x6c0] sm:$0xff]
    %v1274 = vld [vmem:[#allocation6 + $0x6c8] sm:$0xff]
    %v1275 = vld [vmem:[#allocation6 + $0x6d0] sm:$0xff]
    %v1276 = vld [vmem:[#allocation6 + $0x6d8] sm:$0xff]
    %v1277 = vld [vmem:[#allocation6 + $0x6e0] sm:$0xff]
    %v1278 = vld [vmem:[#allocation6 + $0x6e8] sm:$0xff]
    %v1279 = vld [vmem:[#allocation6 + $0x6f0] sm:$0xff]
    %v1280 = vld [vmem:[#allocation6 + $0x6f8] sm:$0xff]
    %v1281 = vld [vmem:[#allocation6 + $0x700] sm:$0xff]
    %v1282 = vld [vmem:[#allocation6 + $0x708] sm:$0xff]
    %v1283 = vld [vmem:[#allocation6 + $0x710] sm:$0xff]
    %v1284 = vld [vmem:[#allocation6 + $0x718] sm:$0xff]
    %v1285 = vld [vmem:[#allocation6 + $0x720] sm:$0xff]
    %v1286 = vld [vmem:[#allocation6 + $0x728] sm:$0xff]
    %v1287 = vld [vmem:[#allocation6 + $0x730] sm:$0xff]
    %v1288 = vld [vmem:[#allocation6 + $0x738] sm:$0xff]
    %v1289 = vld [vmem:[#allocation6 + $0x740] sm:$0xff]
    %v1290 = vld [vmem:[#allocation6 + $0x748] sm:$0xff]
    %v1291 = vld [vmem:[#allocation6 + $0x750] sm:$0xff]
    %v1292 = vld [vmem:[#allocation6 + $0x758] sm:$0xff]
    %v1293 = vld [vmem:[#allocation6 + $0x760] sm:$0xff]
    %v1294 = vld [vmem:[#allocation6 + $0x768] sm:$0xff]
    %v1295 = vld [vmem:[#allocation6 + $0x770] sm:$0xff]
    %v1296 = vld [vmem:[#allocation6 + $0x778] sm:$0xff]
    %v1297 = vld [vmem:[#allocation6 + $0x780] sm:$0xff]
    %v1298 = vld [vmem:[#allocation6 + $0x788] sm:$0xff]
    %v1299 = vld [vmem:[#allocation6 + $0x790] sm:$0xff]
    %v1300 = vld [vmem:[#allocation6 + $0x798] sm:$0xff]
    %v1301 = vld [vmem:[#allocation6 + $0x7a0] sm:$0xff]
    %v1302 = vld [vmem:[#allocation6 + $0x7a8] sm:$0xff]
    %v1303 = vld [vmem:[#allocation6 + $0x7b0] sm:$0xff]
    %v1304 = vld [vmem:[#allocation6 + $0x7b8] sm:$0xff]
    %v1305 = vld [vmem:[#allocation6 + $0x7c0] sm:$0xff]
    %v1306 = vld [vmem:[#allocation6 + $0x7c8] sm:$0xff]
    %v1307 = vld [vmem:[#allocation6 + $0x7d0] sm:$0xff]
    %v1308 = vld [vmem:[#allocation6 + $0x7d8] sm:$0xff]
    %v1309 = vld [vmem:[#allocation6 + $0x7e0] sm:$0xff]
    %v1310 = vld [vmem:[#allocation6 + $0x7e8] sm:$0xff]
    %v1311 = vld [vmem:[#allocation6 + $0x7f0] sm:$0xff]
    %v1312 = vld [vmem:[#allocation6 + $0x7f8] sm:$0xff]
    %v1569 = vunpack.c.l.b16 %v1057
    %v1570 = vunpack.c.h.b16 %v1057
    %v1571 = vunpack.c.l.b16 %v1058
    %v1572 = vunpack.c.h.b16 %v1058
    %v1573 = vunpack.c.l.b16 %v1059
    %v1574 = vunpack.c.h.b16 %v1059
    %v1575 = vunpack.c.l.b16 %v1060
    %v1576 = vunpack.c.h.b16 %v1060
    %v1577 = vunpack.c.l.b16 %v1061
    %v1578 = vunpack.c.h.b16 %v1061
    %v1579 = vunpack.c.l.b16 %v1062
    %v1580 = vunpack.c.h.b16 %v1062
    %v1581 = vunpack.c.l.b16 %v1063
    %v1582 = vunpack.c.h.b16 %v1063
    %v1583 = vunpack.c.l.b16 %v1064
    %v1584 = vunpack.c.h.b16 %v1064
    %v1585 = vunpack.c.l.b16 %v1065
    %v1586 = vunpack.c.h.b16 %v1065
    %v1587 = vunpack.c.l.b16 %v1066
    %v1588 = vunpack.c.h.b16 %v1066
    %v1589 = vunpack.c.l.b16 %v1067
    %v1590 = vunpack.c.h.b16 %v1067
    %v1591 = vunpack.c.l.b16 %v1068
    %v1592 = vunpack.c.h.b16 %v1068
    %v1593 = vunpack.c.l.b16 %v1069
    %v1594 = vunpack.c.h.b16 %v1069
    %v1595 = vunpack.c.l.b16 %v1070
    %v1596 = vunpack.c.h.b16 %v1070
    %v1597 = vunpack.c.l.b16 %v1071
    %v1598 = vunpack.c.h.b16 %v1071
    %v1599 = vunpack.c.l.b16 %v1072
    %v1600 = vunpack.c.h.b16 %v1072
    %v1601 = vunpack.c.l.b16 %v1073
    %v1602 = vunpack.c.h.b16 %v1073
    %v1603 = vunpack.c.l.b16 %v1074
    %v1604 = vunpack.c.h.b16 %v1074
    %v1605 = vunpack.c.l.b16 %v1075
    %v1606 = vunpack.c.h.b16 %v1075
    %v1607 = vunpack.c.l.b16 %v1076
    %v1608 = vunpack.c.h.b16 %v1076
    %v1609 = vunpack.c.l.b16 %v1077
    %v1610 = vunpack.c.h.b16 %v1077
    %v1611 = vunpack.c.l.b16 %v1078
    %v1612 = vunpack.c.h.b16 %v1078
    %v1613 = vunpack.c.l.b16 %v1079
    %v1614 = vunpack.c.h.b16 %v1079
    %v1615 = vunpack.c.l.b16 %v1080
    %v1616 = vunpack.c.h.b16 %v1080
    %v1617 = vunpack.c.l.b16 %v1081
    %v1618 = vunpack.c.h.b16 %v1081
    %v1619 = vunpack.c.l.b16 %v1082
    %v1620 = vunpack.c.h.b16 %v1082
    %v1621 = vunpack.c.l.b16 %v1083
    %v1622 = vunpack.c.h.b16 %v1083
    %v1623 = vunpack.c.l.b16 %v1084
    %v1624 = vunpack.c.h.b16 %v1084
    %v1625 = vunpack.c.l.b16 %v1085
    %v1626 = vunpack.c.h.b16 %v1085
    %v1627 = vunpack.c.l.b16 %v1086
    %v1628 = vunpack.c.h.b16 %v1086
    %v1629 = vunpack.c.l.b16 %v1087
    %v1630 = vunpack.c.h.b16 %v1087
    %v1631 = vunpack.c.l.b16 %v1088
    %v1632 = vunpack.c.h.b16 %v1088
    %v1633 = vunpack.c.l.b16 %v1089
    %v1634 = vunpack.c.h.b16 %v1089
    %v1635 = vunpack.c.l.b16 %v1090
    %v1636 = vunpack.c.h.b16 %v1090
    %v1637 = vunpack.c.l.b16 %v1091
    %v1638 = vunpack.c.h.b16 %v1091
    %v1639 = vunpack.c.l.b16 %v1092
    %v1640 = vunpack.c.h.b16 %v1092
    %v1641 = vunpack.c.l.b16 %v1093
    %v1642 = vunpack.c.h.b16 %v1093
    %v1643 = vunpack.c.l.b16 %v1094
    %v1644 = vunpack.c.h.b16 %v1094
    %v1645 = vunpack.c.l.b16 %v1095
    %v1646 = vunpack.c.h.b16 %v1095
    %v1647 = vunpack.c.l.b16 %v1096
    %v1648 = vunpack.c.h.b16 %v1096
    %v1649 = vunpack.c.l.b16 %v1097
    %v1650 = vunpack.c.h.b16 %v1097
    %v1651 = vunpack.c.l.b16 %v1098
    %v1652 = vunpack.c.h.b16 %v1098
    %v1653 = vunpack.c.l.b16 %v1099
    %v1654 = vunpack.c.h.b16 %v1099
    %v1655 = vunpack.c.l.b16 %v1100
    %v1656 = vunpack.c.h.b16 %v1100
    %v1657 = vunpack.c.l.b16 %v1101
    %v1658 = vunpack.c.h.b16 %v1101
    %v1659 = vunpack.c.l.b16 %v1102
    %v1660 = vunpack.c.h.b16 %v1102
    %v1661 = vunpack.c.l.b16 %v1103
    %v1662 = vunpack.c.h.b16 %v1103
    %v1663 = vunpack.c.l.b16 %v1104
    %v1664 = vunpack.c.h.b16 %v1104
    %v1665 = vunpack.c.l.b16 %v1105
    %v1666 = vunpack.c.h.b16 %v1105
    %v1667 = vunpack.c.l.b16 %v1106
    %v1668 = vunpack.c.h.b16 %v1106
    %v1669 = vunpack.c.l.b16 %v1107
    %v1670 = vunpack.c.h.b16 %v1107
    %v1671 = vunpack.c.l.b16 %v1108
    %v1672 = vunpack.c.h.b16 %v1108
    %v1673 = vunpack.c.l.b16 %v1109
    %v1674 = vunpack.c.h.b16 %v1109
    %v1675 = vunpack.c.l.b16 %v1110
    %v1676 = vunpack.c.h.b16 %v1110
    %v1677 = vunpack.c.l.b16 %v1111
    %v1678 = vunpack.c.h.b16 %v1111
    %v1679 = vunpack.c.l.b16 %v1112
    %v1680 = vunpack.c.h.b16 %v1112
    %v1681 = vunpack.c.l.b16 %v1113
    %v1682 = vunpack.c.h.b16 %v1113
    %v1683 = vunpack.c.l.b16 %v1114
    %v1684 = vunpack.c.h.b16 %v1114
    %v1685 = vunpack.c.l.b16 %v1115
    %v1686 = vunpack.c.h.b16 %v1115
    %v1687 = vunpack.c.l.b16 %v1116
    %v1688 = vunpack.c.h.b16 %v1116
    %v1689 = vunpack.c.l.b16 %v1117
    %v1690 = vunpack.c.h.b16 %v1117
    %v1691 = vunpack.c.l.b16 %v1118
    %v1692 = vunpack.c.h.b16 %v1118
    %v1693 = vunpack.c.l.b16 %v1119
    %v1694 = vunpack.c.h.b16 %v1119
    %v1695 = vunpack.c.l.b16 %v1120
    %v1696 = vunpack.c.h.b16 %v1120
    %v1697 = vunpack.c.l.b16 %v1121
    %v1698 = vunpack.c.h.b16 %v1121
    %v1699 = vunpack.c.l.b16 %v1122
    %v1700 = vunpack.c.h.b16 %v1122
    %v1701 = vunpack.c.l.b16 %v1123
    %v1702 = vunpack.c.h.b16 %v1123
    %v1703 = vunpack.c.l.b16 %v1124
    %v1704 = vunpack.c.h.b16 %v1124
    %v1705 = vunpack.c.l.b16 %v1125
    %v1706 = vunpack.c.h.b16 %v1125
    %v1707 = vunpack.c.l.b16 %v1126
    %v1708 = vunpack.c.h.b16 %v1126
    %v1709 = vunpack.c.l.b16 %v1127
    %v1710 = vunpack.c.h.b16 %v1127
    %v1711 = vunpack.c.l.b16 %v1128
    %v1712 = vunpack.c.h.b16 %v1128
    %v1713 = vunpack.c.l.b16 %v1129
    %v1714 = vunpack.c.h.b16 %v1129
    %v1715 = vunpack.c.l.b16 %v1130
    %v1716 = vunpack.c.h.b16 %v1130
    %v1717 = vunpack.c.l.b16 %v1131
    %v1718 = vunpack.c.h.b16 %v1131
    %v1719 = vunpack.c.l.b16 %v1132
    %v1720 = vunpack.c.h.b16 %v1132
    %v1721 = vunpack.c.l.b16 %v1133
    %v1722 = vunpack.c.h.b16 %v1133
    %v1723 = vunpack.c.l.b16 %v1134
    %v1724 = vunpack.c.h.b16 %v1134
    %v1725 = vunpack.c.l.b16 %v1135
    %v1726 = vunpack.c.h.b16 %v1135
    %v1727 = vunpack.c.l.b16 %v1136
    %v1728 = vunpack.c.h.b16 %v1136
    %v1729 = vunpack.c.l.b16 %v1137
    %v1730 = vunpack.c.h.b16 %v1137
    %v1731 = vunpack.c.l.b16 %v1138
    %v1732 = vunpack.c.h.b16 %v1138
    %v1733 = vunpack.c.l.b16 %v1139
    %v1734 = vunpack.c.h.b16 %v1139
    %v1735 = vunpack.c.l.b16 %v1140
    %v1736 = vunpack.c.h.b16 %v1140
    %v1737 = vunpack.c.l.b16 %v1141
    %v1738 = vunpack.c.h.b16 %v1141
    %v1739 = vunpack.c.l.b16 %v1142
    %v1740 = vunpack.c.h.b16 %v1142
    %v1741 = vunpack.c.l.b16 %v1143
    %v1742 = vunpack.c.h.b16 %v1143
    %v1743 = vunpack.c.l.b16 %v1144
    %v1744 = vunpack.c.h.b16 %v1144
    %v1745 = vunpack.c.l.b16 %v1145
    %v1746 = vunpack.c.h.b16 %v1145
    %v1747 = vunpack.c.l.b16 %v1146
    %v1748 = vunpack.c.h.b16 %v1146
    %v1749 = vunpack.c.l.b16 %v1147
    %v1750 = vunpack.c.h.b16 %v1147
    %v1751 = vunpack.c.l.b16 %v1148
    %v1752 = vunpack.c.h.b16 %v1148
    %v1753 = vunpack.c.l.b16 %v1149
    %v1754 = vunpack.c.h.b16 %v1149
    %v1755 = vunpack.c.l.b16 %v1150
    %v1756 = vunpack.c.h.b16 %v1150
    %v1757 = vunpack.c.l.b16 %v1151
    %v1758 = vunpack.c.h.b16 %v1151
    %v1759 = vunpack.c.l.b16 %v1152
    %v1760 = vunpack.c.h.b16 %v1152
    %v1761 = vunpack.c.l.b16 %v1153
    %v1762 = vunpack.c.h.b16 %v1153
    %v1763 = vunpack.c.l.b16 %v1154
    %v1764 = vunpack.c.h.b16 %v1154
    %v1765 = vunpack.c.l.b16 %v1155
    %v1766 = vunpack.c.h.b16 %v1155
    %v1767 = vunpack.c.l.b16 %v1156
    %v1768 = vunpack.c.h.b16 %v1156
    %v1769 = vunpack.c.l.b16 %v1157
    %v1770 = vunpack.c.h.b16 %v1157
    %v1771 = vunpack.c.l.b16 %v1158
    %v1772 = vunpack.c.h.b16 %v1158
    %v1773 = vunpack.c.l.b16 %v1159
    %v1774 = vunpack.c.h.b16 %v1159
    %v1775 = vunpack.c.l.b16 %v1160
    %v1776 = vunpack.c.h.b16 %v1160
    %v1777 = vunpack.c.l.b16 %v1161
    %v1778 = vunpack.c.h.b16 %v1161
    %v1779 = vunpack.c.l.b16 %v1162
    %v1780 = vunpack.c.h.b16 %v1162
    %v1781 = vunpack.c.l.b16 %v1163
    %v1782 = vunpack.c.h.b16 %v1163
    %v1783 = vunpack.c.l.b16 %v1164
    %v1784 = vunpack.c.h.b16 %v1164
    %v1785 = vunpack.c.l.b16 %v1165
    %v1786 = vunpack.c.h.b16 %v1165
    %v1787 = vunpack.c.l.b16 %v1166
    %v1788 = vunpack.c.h.b16 %v1166
    %v1789 = vunpack.c.l.b16 %v1167
    %v1790 = vunpack.c.h.b16 %v1167
    %v1791 = vunpack.c.l.b16 %v1168
    %v1792 = vunpack.c.h.b16 %v1168
    %v1793 = vunpack.c.l.b16 %v1169
    %v1794 = vunpack.c.h.b16 %v1169
    %v1795 = vunpack.c.l.b16 %v1170
    %v1796 = vunpack.c.h.b16 %v1170
    %v1797 = vunpack.c.l.b16 %v1171
    %v1798 = vunpack.c.h.b16 %v1171
    %v1799 = vunpack.c.l.b16 %v1172
    %v1800 = vunpack.c.h.b16 %v1172
    %v1801 = vunpack.c.l.b16 %v1173
    %v1802 = vunpack.c.h.b16 %v1173
    %v1803 = vunpack.c.l.b16 %v1174
    %v1804 = vunpack.c.h.b16 %v1174
    %v1805 = vunpack.c.l.b16 %v1175
    %v1806 = vunpack.c.h.b16 %v1175
    %v1807 = vunpack.c.l.b16 %v1176
    %v1808 = vunpack.c.h.b16 %v1176
    %v1809 = vunpack.c.l.b16 %v1177
    %v1810 = vunpack.c.h.b16 %v1177
    %v1811 = vunpack.c.l.b16 %v1178
    %v1812 = vunpack.c.h.b16 %v1178
    %v1813 = vunpack.c.l.b16 %v1179
    %v1814 = vunpack.c.h.b16 %v1179
    %v1815 = vunpack.c.l.b16 %v1180
    %v1816 = vunpack.c.h.b16 %v1180
    %v1817 = vunpack.c.l.b16 %v1181
    %v1818 = vunpack.c.h.b16 %v1181
    %v1819 = vunpack.c.l.b16 %v1182
    %v1820 = vunpack.c.h.b16 %v1182
    %v1821 = vunpack.c.l.b16 %v1183
    %v1822 = vunpack.c.h.b16 %v1183
    %v1823 = vunpack.c.l.b16 %v1184
    %v1824 = vunpack.c.h.b16 %v1184
    %v1825 = vunpack.c.l.b16 %v1185
    %v1826 = vunpack.c.h.b16 %v1185
    %v1827 = vunpack.c.l.b16 %v1186
    %v1828 = vunpack.c.h.b16 %v1186
    %v1829 = vunpack.c.l.b16 %v1187
    %v1830 = vunpack.c.h.b16 %v1187
    %v1831 = vunpack.c.l.b16 %v1188
    %v1832 = vunpack.c.h.b16 %v1188
    %v1833 = vunpack.c.l.b16 %v1189
    %v1834 = vunpack.c.h.b16 %v1189
    %v1835 = vunpack.c.l.b16 %v1190
    %v1836 = vunpack.c.h.b16 %v1190
    %v1837 = vunpack.c.l.b16 %v1191
    %v1838 = vunpack.c.h.b16 %v1191
    %v1839 = vunpack.c.l.b16 %v1192
    %v1840 = vunpack.c.h.b16 %v1192
    %v1841 = vunpack.c.l.b16 %v1193
    %v1842 = vunpack.c.h.b16 %v1193
    %v1843 = vunpack.c.l.b16 %v1194
    %v1844 = vunpack.c.h.b16 %v1194
    %v1845 = vunpack.c.l.b16 %v1195
    %v1846 = vunpack.c.h.b16 %v1195
    %v1847 = vunpack.c.l.b16 %v1196
    %v1848 = vunpack.c.h.b16 %v1196
    %v1849 = vunpack.c.l.b16 %v1197
    %v1850 = vunpack.c.h.b16 %v1197
    %v1851 = vunpack.c.l.b16 %v1198
    %v1852 = vunpack.c.h.b16 %v1198
    %v1853 = vunpack.c.l.b16 %v1199
    %v1854 = vunpack.c.h.b16 %v1199
    %v1855 = vunpack.c.l.b16 %v1200
    %v1856 = vunpack.c.h.b16 %v1200
    %v1857 = vunpack.c.l.b16 %v1201
    %v1858 = vunpack.c.h.b16 %v1201
    %v1859 = vunpack.c.l.b16 %v1202
    %v1860 = vunpack.c.h.b16 %v1202
    %v1861 = vunpack.c.l.b16 %v1203
    %v1862 = vunpack.c.h.b16 %v1203
    %v1863 = vunpack.c.l.b16 %v1204
    %v1864 = vunpack.c.h.b16 %v1204
    %v1865 = vunpack.c.l.b16 %v1205
    %v1866 = vunpack.c.h.b16 %v1205
    %v1867 = vunpack.c.l.b16 %v1206
    %v1868 = vunpack.c.h.b16 %v1206
    %v1869 = vunpack.c.l.b16 %v1207
    %v1870 = vunpack.c.h.b16 %v1207
    %v1871 = vunpack.c.l.b16 %v1208
    %v1872 = vunpack.c.h.b16 %v1208
    %v1873 = vunpack.c.l.b16 %v1209
    %v1874 = vunpack.c.h.b16 %v1209
    %v1875 = vunpack.c.l.b16 %v1210
    %v1876 = vunpack.c.h.b16 %v1210
    %v1877 = vunpack.c.l.b16 %v1211
    %v1878 = vunpack.c.h.b16 %v1211
    %v1879 = vunpack.c.l.b16 %v1212
    %v1880 = vunpack.c.h.b16 %v1212
    %v1881 = vunpack.c.l.b16 %v1213
    %v1882 = vunpack.c.h.b16 %v1213
    %v1883 = vunpack.c.l.b16 %v1214
    %v1884 = vunpack.c.h.b16 %v1214
    %v1885 = vunpack.c.l.b16 %v1215
    %v1886 = vunpack.c.h.b16 %v1215
    %v1887 = vunpack.c.l.b16 %v1216
    %v1888 = vunpack.c.h.b16 %v1216
    %v1889 = vunpack.c.l.b16 %v1217
    %v1890 = vunpack.c.h.b16 %v1217
    %v1891 = vunpack.c.l.b16 %v1218
    %v1892 = vunpack.c.h.b16 %v1218
    %v1893 = vunpack.c.l.b16 %v1219
    %v1894 = vunpack.c.h.b16 %v1219
    %v1895 = vunpack.c.l.b16 %v1220
    %v1896 = vunpack.c.h.b16 %v1220
    %v1897 = vunpack.c.l.b16 %v1221
    %v1898 = vunpack.c.h.b16 %v1221
    %v1899 = vunpack.c.l.b16 %v1222
    %v1900 = vunpack.c.h.b16 %v1222
    %v1901 = vunpack.c.l.b16 %v1223
    %v1902 = vunpack.c.h.b16 %v1223
    %v1903 = vunpack.c.l.b16 %v1224
    %v1904 = vunpack.c.h.b16 %v1224
    %v1905 = vunpack.c.l.b16 %v1225
    %v1906 = vunpack.c.h.b16 %v1225
    %v1907 = vunpack.c.l.b16 %v1226
    %v1908 = vunpack.c.h.b16 %v1226
    %v1909 = vunpack.c.l.b16 %v1227
    %v1910 = vunpack.c.h.b16 %v1227
    %v1911 = vunpack.c.l.b16 %v1228
    %v1912 = vunpack.c.h.b16 %v1228
    %v1913 = vunpack.c.l.b16 %v1229
    %v1914 = vunpack.c.h.b16 %v1229
    %v1915 = vunpack.c.l.b16 %v1230
    %v1916 = vunpack.c.h.b16 %v1230
    %v1917 = vunpack.c.l.b16 %v1231
    %v1918 = vunpack.c.h.b16 %v1231
    %v1919 = vunpack.c.l.b16 %v1232
    %v1920 = vunpack.c.h.b16 %v1232
    %v1921 = vunpack.c.l.b16 %v1233
    %v1922 = vunpack.c.h.b16 %v1233
    %v1923 = vunpack.c.l.b16 %v1234
    %v1924 = vunpack.c.h.b16 %v1234
    %v1925 = vunpack.c.l.b16 %v1235
    %v1926 = vunpack.c.h.b16 %v1235
    %v1927 = vunpack.c.l.b16 %v1236
    %v1928 = vunpack.c.h.b16 %v1236
    %v1929 = vunpack.c.l.b16 %v1237
    %v1930 = vunpack.c.h.b16 %v1237
    %v1931 = vunpack.c.l.b16 %v1238
    %v1932 = vunpack.c.h.b16 %v1238
    %v1933 = vunpack.c.l.b16 %v1239
    %v1934 = vunpack.c.h.b16 %v1239
    %v1935 = vunpack.c.l.b16 %v1240
    %v1936 = vunpack.c.h.b16 %v1240
    %v1937 = vunpack.c.l.b16 %v1241
    %v1938 = vunpack.c.h.b16 %v1241
    %v1939 = vunpack.c.l.b16 %v1242
    %v1940 = vunpack.c.h.b16 %v1242
    %v1941 = vunpack.c.l.b16 %v1243
    %v1942 = vunpack.c.h.b16 %v1243
    %v1943 = vunpack.c.l.b16 %v1244
    %v1944 = vunpack.c.h.b16 %v1244
    %v1945 = vunpack.c.l.b16 %v1245
    %v1946 = vunpack.c.h.b16 %v1245
    %v1947 = vunpack.c.l.b16 %v1246
    %v1948 = vunpack.c.h.b16 %v1246
    %v1949 = vunpack.c.l.b16 %v1247
    %v1950 = vunpack.c.h.b16 %v1247
    %v1951 = vunpack.c.l.b16 %v1248
    %v1952 = vunpack.c.h.b16 %v1248
    %v1953 = vunpack.c.l.b16 %v1249
    %v1954 = vunpack.c.h.b16 %v1249
    %v1955 = vunpack.c.l.b16 %v1250
    %v1956 = vunpack.c.h.b16 %v1250
    %v1957 = vunpack.c.l.b16 %v1251
    %v1958 = vunpack.c.h.b16 %v1251
    %v1959 = vunpack.c.l.b16 %v1252
    %v1960 = vunpack.c.h.b16 %v1252
    %v1961 = vunpack.c.l.b16 %v1253
    %v1962 = vunpack.c.h.b16 %v1253
    %v1963 = vunpack.c.l.b16 %v1254
    %v1964 = vunpack.c.h.b16 %v1254
    %v1965 = vunpack.c.l.b16 %v1255
    %v1966 = vunpack.c.h.b16 %v1255
    %v1967 = vunpack.c.l.b16 %v1256
    %v1968 = vunpack.c.h.b16 %v1256
    %v1969 = vunpack.c.l.b16 %v1257
    %v1970 = vunpack.c.h.b16 %v1257
    %v1971 = vunpack.c.l.b16 %v1258
    %v1972 = vunpack.c.h.b16 %v1258
    %v1973 = vunpack.c.l.b16 %v1259
    %v1974 = vunpack.c.h.b16 %v1259
    %v1975 = vunpack.c.l.b16 %v1260
    %v1976 = vunpack.c.h.b16 %v1260
    %v1977 = vunpack.c.l.b16 %v1261
    %v1978 = vunpack.c.h.b16 %v1261
    %v1979 = vunpack.c.l.b16 %v1262
    %v1980 = vunpack.c.h.b16 %v1262
    %v1981 = vunpack.c.l.b16 %v1263
    %v1982 = vunpack.c.h.b16 %v1263
    %v1983 = vunpack.c.l.b16 %v1264
    %v1984 = vunpack.c.h.b16 %v1264
    %v1985 = vunpack.c.l.b16 %v1265
    %v1986 = vunpack.c.h.b16 %v1265
    %v1987 = vunpack.c.l.b16 %v1266
    %v1988 = vunpack.c.h.b16 %v1266
    %v1989 = vunpack.c.l.b16 %v1267
    %v1990 = vunpack.c.h.b16 %v1267
    %v1991 = vunpack.c.l.b16 %v1268
    %v1992 = vunpack.c.h.b16 %v1268
    %v1993 = vunpack.c.l.b16 %v1269
    %v1994 = vunpack.c.h.b16 %v1269
    %v1995 = vunpack.c.l.b16 %v1270
    %v1996 = vunpack.c.h.b16 %v1270
    %v1997 = vunpack.c.l.b16 %v1271
    %v1998 = vunpack.c.h.b16 %v1271
    %v1999 = vunpack.c.l.b16 %v1272
    %v2000 = vunpack.c.h.b16 %v1272
    %v2001 = vunpack.c.l.b16 %v1273
    %v2002 = vunpack.c.h.b16 %v1273
    %v2003 = vunpack.c.l.b16 %v1274
    %v2004 = vunpack.c.h.b16 %v1274
    %v2005 = vunpack.c.l.b16 %v1275
    %v2006 = vunpack.c.h.b16 %v1275
    %v2007 = vunpack.c.l.b16 %v1276
    %v2008 = vunpack.c.h.b16 %v1276
    %v2009 = vunpack.c.l.b16 %v1277
    %v2010 = vunpack.c.h.b16 %v1277
    %v2011 = vunpack.c.l.b16 %v1278
    %v2012 = vunpack.c.h.b16 %v1278
    %v2013 = vunpack.c.l.b16 %v1279
    %v2014 = vunpack.c.h.b16 %v1279
    %v2015 = vunpack.c.l.b16 %v1280
    %v2016 = vunpack.c.h.b16 %v1280
    %v2017 = vunpack.c.l.b16 %v1281
    %v2018 = vunpack.c.h.b16 %v1281
    %v2019 = vunpack.c.l.b16 %v1282
    %v2020 = vunpack.c.h.b16 %v1282
    %v2021 = vunpack.c.l.b16 %v1283
    %v2022 = vunpack.c.h.b16 %v1283
    %v2023 = vunpack.c.l.b16 %v1284
    %v2024 = vunpack.c.h.b16 %v1284
    %v2025 = vunpack.c.l.b16 %v1285
    %v2026 = vunpack.c.h.b16 %v1285
    %v2027 = vunpack.c.l.b16 %v1286
    %v2028 = vunpack.c.h.b16 %v1286
    %v2029 = vunpack.c.l.b16 %v1287
    %v2030 = vunpack.c.h.b16 %v1287
    %v2031 = vunpack.c.l.b16 %v1288
    %v2032 = vunpack.c.h.b16 %v1288
    %v2033 = vunpack.c.l.b16 %v1289
    %v2034 = vunpack.c.h.b16 %v1289
    %v2035 = vunpack.c.l.b16 %v1290
    %v2036 = vunpack.c.h.b16 %v1290
    %v2037 = vunpack.c.l.b16 %v1291
    %v2038 = vunpack.c.h.b16 %v1291
    %v2039 = vunpack.c.l.b16 %v1292
    %v2040 = vunpack.c.h.b16 %v1292
    %v2041 = vunpack.c.l.b16 %v1293
    %v2042 = vunpack.c.h.b16 %v1293
    %v2043 = vunpack.c.l.b16 %v1294
    %v2044 = vunpack.c.h.b16 %v1294
    %v2045 = vunpack.c.l.b16 %v1295
    %v2046 = vunpack.c.h.b16 %v1295
    %v2047 = vunpack.c.l.b16 %v1296
    %v2048 = vunpack.c.h.b16 %v1296
    %v2049 = vunpack.c.l.b16 %v1297
    %v2050 = vunpack.c.h.b16 %v1297
    %v2051 = vunpack.c.l.b16 %v1298
    %v2052 = vunpack.c.h.b16 %v1298
    %v2053 = vunpack.c.l.b16 %v1299
    %v2054 = vunpack.c.h.b16 %v1299
    %v2055 = vunpack.c.l.b16 %v1300
    %v2056 = vunpack.c.h.b16 %v1300
    %v2057 = vunpack.c.l.b16 %v1301
    %v2058 = vunpack.c.h.b16 %v1301
    %v2059 = vunpack.c.l.b16 %v1302
    %v2060 = vunpack.c.h.b16 %v1302
    %v2061 = vunpack.c.l.b16 %v1303
    %v2062 = vunpack.c.h.b16 %v1303
    %v2063 = vunpack.c.l.b16 %v1304
    %v2064 = vunpack.c.h.b16 %v1304
    %v2065 = vunpack.c.l.b16 %v1305
    %v2066 = vunpack.c.h.b16 %v1305
    %v2067 = vunpack.c.l.b16 %v1306
    %v2068 = vunpack.c.h.b16 %v1306
    %v2069 = vunpack.c.l.b16 %v1307
    %v2070 = vunpack.c.h.b16 %v1307
    %v2071 = vunpack.c.l.b16 %v1308
    %v2072 = vunpack.c.h.b16 %v1308
    %v2073 = vunpack.c.l.b16 %v1309
    %v2074 = vunpack.c.h.b16 %v1309
    %v2075 = vunpack.c.l.b16 %v1310
    %v2076 = vunpack.c.h.b16 %v1310
    %v2077 = vunpack.c.l.b16 %v1311
    %v2078 = vunpack.c.h.b16 %v1311
    %v2079 = vunpack.c.l.b16 %v1312
    %v2080 = vunpack.c.h.b16 %v1312
    %v2081 = vpack.c.b16 %v1577, %v1569
    %v2082 = vpack.c.b16 %v1578, %v1570
    %v2083 = vpack.c.b16 %v1579, %v1571
    %v2084 = vpack.c.b16 %v1580, %v1572
    %v2085 = vpack.c.b16 %v1581, %v1573
    %v2086 = vpack.c.b16 %v1582, %v1574
    %v2087 = vpack.c.b16 %v1583, %v1575
    %v2088 = vpack.c.b16 %v1584, %v1576
    %v2089 = vpack.c.b16 %v1593, %v1585
    %v2090 = vpack.c.b16 %v1594, %v1586
    %v2091 = vpack.c.b16 %v1595, %v1587
    %v2092 = vpack.c.b16 %v1596, %v1588
    %v2093 = vpack.c.b16 %v1597, %v1589
    %v2094 = vpack.c.b16 %v1598, %v1590
    %v2095 = vpack.c.b16 %v1599, %v1591
    %v2096 = vpack.c.b16 %v1600, %v1592
    %v2097 = vpack.c.b16 %v1609, %v1601
    %v2098 = vpack.c.b16 %v1610, %v1602
    %v2099 = vpack.c.b16 %v1611, %v1603
    %v2100 = vpack.c.b16 %v1612, %v1604
    %v2101 = vpack.c.b16 %v1613, %v1605
    %v2102 = vpack.c.b16 %v1614, %v1606
    %v2103 = vpack.c.b16 %v1615, %v1607
    %v2104 = vpack.c.b16 %v1616, %v1608
    %v2105 = vpack.c.b16 %v1625, %v1617
    %v2106 = vpack.c.b16 %v1626, %v1618
    %v2107 = vpack.c.b16 %v1627, %v1619
    %v2108 = vpack.c.b16 %v1628, %v1620
    %v2109 = vpack.c.b16 %v1629, %v1621
    %v2110 = vpack.c.b16 %v1630, %v1622
    %v2111 = vpack.c.b16 %v1631, %v1623
    %v2112 = vpack.c.b16 %v1632, %v1624
    %v2113 = vpack.c.b16 %v1641, %v1633
    %v2114 = vpack.c.b16 %v1642, %v1634
    %v2115 = vpack.c.b16 %v1643, %v1635
    %v2116 = vpack.c.b16 %v1644, %v1636
    %v2117 = vpack.c.b16 %v1645, %v1637
    %v2118 = vpack.c.b16 %v1646, %v1638
    %v2119 = vpack.c.b16 %v1647, %v1639
    %v2120 = vpack.c.b16 %v1648, %v1640
    %v2121 = vpack.c.b16 %v1657, %v1649
    %v2122 = vpack.c.b16 %v1658, %v1650
    %v2123 = vpack.c.b16 %v1659, %v1651
    %v2124 = vpack.c.b16 %v1660, %v1652
    %v2125 = vpack.c.b16 %v1661, %v1653
    %v2126 = vpack.c.b16 %v1662, %v1654
    %v2127 = vpack.c.b16 %v1663, %v1655
    %v2128 = vpack.c.b16 %v1664, %v1656
    %v2129 = vpack.c.b16 %v1673, %v1665
    %v2130 = vpack.c.b16 %v1674, %v1666
    %v2131 = vpack.c.b16 %v1675, %v1667
    %v2132 = vpack.c.b16 %v1676, %v1668
    %v2133 = vpack.c.b16 %v1677, %v1669
    %v2134 = vpack.c.b16 %v1678, %v1670
    %v2135 = vpack.c.b16 %v1679, %v1671
    %v2136 = vpack.c.b16 %v1680, %v1672
    %v2137 = vpack.c.b16 %v1689, %v1681
    %v2138 = vpack.c.b16 %v1690, %v1682
    %v2139 = vpack.c.b16 %v1691, %v1683
    %v2140 = vpack.c.b16 %v1692, %v1684
    %v2141 = vpack.c.b16 %v1693, %v1685
    %v2142 = vpack.c.b16 %v1694, %v1686
    %v2143 = vpack.c.b16 %v1695, %v1687
    %v2144 = vpack.c.b16 %v1696, %v1688
    %v2145 = vpack.c.b16 %v1705, %v1697
    %v2146 = vpack.c.b16 %v1706, %v1698
    %v2147 = vpack.c.b16 %v1707, %v1699
    %v2148 = vpack.c.b16 %v1708, %v1700
    %v2149 = vpack.c.b16 %v1709, %v1701
    %v2150 = vpack.c.b16 %v1710, %v1702
    %v2151 = vpack.c.b16 %v1711, %v1703
    %v2152 = vpack.c.b16 %v1712, %v1704
    %v2153 = vpack.c.b16 %v1721, %v1713
    %v2154 = vpack.c.b16 %v1722, %v1714
    %v2155 = vpack.c.b16 %v1723, %v1715
    %v2156 = vpack.c.b16 %v1724, %v1716
    %v2157 = vpack.c.b16 %v1725, %v1717
    %v2158 = vpack.c.b16 %v1726, %v1718
    %v2159 = vpack.c.b16 %v1727, %v1719
    %v2160 = vpack.c.b16 %v1728, %v1720
    %v2161 = vpack.c.b16 %v1737, %v1729
    %v2162 = vpack.c.b16 %v1738, %v1730
    %v2163 = vpack.c.b16 %v1739, %v1731
    %v2164 = vpack.c.b16 %v1740, %v1732
    %v2165 = vpack.c.b16 %v1741, %v1733
    %v2166 = vpack.c.b16 %v1742, %v1734
    %v2167 = vpack.c.b16 %v1743, %v1735
    %v2168 = vpack.c.b16 %v1744, %v1736
    %v2169 = vpack.c.b16 %v1753, %v1745
    %v2170 = vpack.c.b16 %v1754, %v1746
    %v2171 = vpack.c.b16 %v1755, %v1747
    %v2172 = vpack.c.b16 %v1756, %v1748
    %v2173 = vpack.c.b16 %v1757, %v1749
    %v2174 = vpack.c.b16 %v1758, %v1750
    %v2175 = vpack.c.b16 %v1759, %v1751
    %v2176 = vpack.c.b16 %v1760, %v1752
    %v2177 = vpack.c.b16 %v1769, %v1761
    %v2178 = vpack.c.b16 %v1770, %v1762
    %v2179 = vpack.c.b16 %v1771, %v1763
    %v2180 = vpack.c.b16 %v1772, %v1764
    %v2181 = vpack.c.b16 %v1773, %v1765
    %v2182 = vpack.c.b16 %v1774, %v1766
    %v2183 = vpack.c.b16 %v1775, %v1767
    %v2184 = vpack.c.b16 %v1776, %v1768
    %v2185 = vpack.c.b16 %v1785, %v1777
    %v2186 = vpack.c.b16 %v1786, %v1778
    %v2187 = vpack.c.b16 %v1787, %v1779
    %v2188 = vpack.c.b16 %v1788, %v1780
    %v2189 = vpack.c.b16 %v1789, %v1781
    %v2190 = vpack.c.b16 %v1790, %v1782
    %v2191 = vpack.c.b16 %v1791, %v1783
    %v2192 = vpack.c.b16 %v1792, %v1784
    %v2193 = vpack.c.b16 %v1801, %v1793
    %v2194 = vpack.c.b16 %v1802, %v1794
    %v2195 = vpack.c.b16 %v1803, %v1795
    %v2196 = vpack.c.b16 %v1804, %v1796
    %v2197 = vpack.c.b16 %v1805, %v1797
    %v2198 = vpack.c.b16 %v1806, %v1798
    %v2199 = vpack.c.b16 %v1807, %v1799
    %v2200 = vpack.c.b16 %v1808, %v1800
    %v2201 = vpack.c.b16 %v1817, %v1809
    %v2202 = vpack.c.b16 %v1818, %v1810
    %v2203 = vpack.c.b16 %v1819, %v1811
    %v2204 = vpack.c.b16 %v1820, %v1812
    %v2205 = vpack.c.b16 %v1821, %v1813
    %v2206 = vpack.c.b16 %v1822, %v1814
    %v2207 = vpack.c.b16 %v1823, %v1815
    %v2208 = vpack.c.b16 %v1824, %v1816
    %v2209 = vpack.c.b16 %v1833, %v1825
    %v2210 = vpack.c.b16 %v1834, %v1826
    %v2211 = vpack.c.b16 %v1835, %v1827
    %v2212 = vpack.c.b16 %v1836, %v1828
    %v2213 = vpack.c.b16 %v1837, %v1829
    %v2214 = vpack.c.b16 %v1838, %v1830
    %v2215 = vpack.c.b16 %v1839, %v1831
    %v2216 = vpack.c.b16 %v1840, %v1832
    %v2217 = vpack.c.b16 %v1849, %v1841
    %v2218 = vpack.c.b16 %v1850, %v1842
    %v2219 = vpack.c.b16 %v1851, %v1843
    %v2220 = vpack.c.b16 %v1852, %v1844
    %v2221 = vpack.c.b16 %v1853, %v1845
    %v2222 = vpack.c.b16 %v1854, %v1846
    %v2223 = vpack.c.b16 %v1855, %v1847
    %v2224 = vpack.c.b16 %v1856, %v1848
    %v2225 = vpack.c.b16 %v1865, %v1857
    %v2226 = vpack.c.b16 %v1866, %v1858
    %v2227 = vpack.c.b16 %v1867, %v1859
    %v2228 = vpack.c.b16 %v1868, %v1860
    %v2229 = vpack.c.b16 %v1869, %v1861
    %v2230 = vpack.c.b16 %v1870, %v1862
    %v2231 = vpack.c.b16 %v1871, %v1863
    %v2232 = vpack.c.b16 %v1872, %v1864
    %v2233 = vpack.c.b16 %v1881, %v1873
    %v2234 = vpack.c.b16 %v1882, %v1874
    %v2235 = vpack.c.b16 %v1883, %v1875
    %v2236 = vpack.c.b16 %v1884, %v1876
    %v2237 = vpack.c.b16 %v1885, %v1877
    %v2238 = vpack.c.b16 %v1886, %v1878
    %v2239 = vpack.c.b16 %v1887, %v1879
    %v2240 = vpack.c.b16 %v1888, %v1880
    %v2241 = vpack.c.b16 %v1897, %v1889
    %v2242 = vpack.c.b16 %v1898, %v1890
    %v2243 = vpack.c.b16 %v1899, %v1891
    %v2244 = vpack.c.b16 %v1900, %v1892
    %v2245 = vpack.c.b16 %v1901, %v1893
    %v2246 = vpack.c.b16 %v1902, %v1894
    %v2247 = vpack.c.b16 %v1903, %v1895
    %v2248 = vpack.c.b16 %v1904, %v1896
    %v2249 = vpack.c.b16 %v1913, %v1905
    %v2250 = vpack.c.b16 %v1914, %v1906
    %v2251 = vpack.c.b16 %v1915, %v1907
    %v2252 = vpack.c.b16 %v1916, %v1908
    %v2253 = vpack.c.b16 %v1917, %v1909
    %v2254 = vpack.c.b16 %v1918, %v1910
    %v2255 = vpack.c.b16 %v1919, %v1911
    %v2256 = vpack.c.b16 %v1920, %v1912
    %v2257 = vpack.c.b16 %v1929, %v1921
    %v2258 = vpack.c.b16 %v1930, %v1922
    %v2259 = vpack.c.b16 %v1931, %v1923
    %v2260 = vpack.c.b16 %v1932, %v1924
    %v2261 = vpack.c.b16 %v1933, %v1925
    %v2262 = vpack.c.b16 %v1934, %v1926
    %v2263 = vpack.c.b16 %v1935, %v1927
    %v2264 = vpack.c.b16 %v1936, %v1928
    %v2265 = vpack.c.b16 %v1945, %v1937
    %v2266 = vpack.c.b16 %v1946, %v1938
    %v2267 = vpack.c.b16 %v1947, %v1939
    %v2268 = vpack.c.b16 %v1948, %v1940
    %v2269 = vpack.c.b16 %v1949, %v1941
    %v2270 = vpack.c.b16 %v1950, %v1942
    %v2271 = vpack.c.b16 %v1951, %v1943
    %v2272 = vpack.c.b16 %v1952, %v1944
    %v2273 = vpack.c.b16 %v1961, %v1953
    %v2274 = vpack.c.b16 %v1962, %v1954
    %v2275 = vpack.c.b16 %v1963, %v1955
    %v2276 = vpack.c.b16 %v1964, %v1956
    %v2277 = vpack.c.b16 %v1965, %v1957
    %v2278 = vpack.c.b16 %v1966, %v1958
    %v2279 = vpack.c.b16 %v1967, %v1959
    %v2280 = vpack.c.b16 %v1968, %v1960
    %v2281 = vpack.c.b16 %v1977, %v1969
    %v2282 = vpack.c.b16 %v1978, %v1970
    %v2283 = vpack.c.b16 %v1979, %v1971
    %v2284 = vpack.c.b16 %v1980, %v1972
    %v2285 = vpack.c.b16 %v1981, %v1973
    %v2286 = vpack.c.b16 %v1982, %v1974
    %v2287 = vpack.c.b16 %v1983, %v1975
    %v2288 = vpack.c.b16 %v1984, %v1976
    %v2289 = vpack.c.b16 %v1993, %v1985
    %v2290 = vpack.c.b16 %v1994, %v1986
    %v2291 = vpack.c.b16 %v1995, %v1987
    %v2292 = vpack.c.b16 %v1996, %v1988
    %v2293 = vpack.c.b16 %v1997, %v1989
    %v2294 = vpack.c.b16 %v1998, %v1990
    %v2295 = vpack.c.b16 %v1999, %v1991
    %v2296 = vpack.c.b16 %v2000, %v1992
    %v2297 = vpack.c.b16 %v2009, %v2001
    %v2298 = vpack.c.b16 %v2010, %v2002
    %v2299 = vpack.c.b16 %v2011, %v2003
    %v2300 = vpack.c.b16 %v2012, %v2004
    %v2301 = vpack.c.b16 %v2013, %v2005
    %v2302 = vpack.c.b16 %v2014, %v2006
    %v2303 = vpack.c.b16 %v2015, %v2007
    %v2304 = vpack.c.b16 %v2016, %v2008
    %v2305 = vpack.c.b16 %v2025, %v2017
    %v2306 = vpack.c.b16 %v2026, %v2018
    %v2307 = vpack.c.b16 %v2027, %v2019
    %v2308 = vpack.c.b16 %v2028, %v2020
    %v2309 = vpack.c.b16 %v2029, %v2021
    %v2310 = vpack.c.b16 %v2030, %v2022
    %v2311 = vpack.c.b16 %v2031, %v2023
    %v2312 = vpack.c.b16 %v2032, %v2024
    %v2313 = vpack.c.b16 %v2041, %v2033
    %v2314 = vpack.c.b16 %v2042, %v2034
    %v2315 = vpack.c.b16 %v2043, %v2035
    %v2316 = vpack.c.b16 %v2044, %v2036
    %v2317 = vpack.c.b16 %v2045, %v2037
    %v2318 = vpack.c.b16 %v2046, %v2038
    %v2319 = vpack.c.b16 %v2047, %v2039
    %v2320 = vpack.c.b16 %v2048, %v2040
    %v2321 = vpack.c.b16 %v2057, %v2049
    %v2322 = vpack.c.b16 %v2058, %v2050
    %v2323 = vpack.c.b16 %v2059, %v2051
    %v2324 = vpack.c.b16 %v2060, %v2052
    %v2325 = vpack.c.b16 %v2061, %v2053
    %v2326 = vpack.c.b16 %v2062, %v2054
    %v2327 = vpack.c.b16 %v2063, %v2055
    %v2328 = vpack.c.b16 %v2064, %v2056
    %v2329 = vpack.c.b16 %v2073, %v2065
    %v2330 = vpack.c.b16 %v2074, %v2066
    %v2331 = vpack.c.b16 %v2075, %v2067
    %v2332 = vpack.c.b16 %v2076, %v2068
    %v2333 = vpack.c.b16 %v2077, %v2069
    %v2334 = vpack.c.b16 %v2078, %v2070
    %v2335 = vpack.c.b16 %v2079, %v2071
    %v2336 = vpack.c.b16 %v2080, %v2072
    %2593 = vmatprep.subr.bf16.mxu0 %v2138
    %2594 = vmatpush1.bf16.msra.mxu0 %v2137
    %2595 = vmatprep.subr.bf16.mxu0 %v2130
    %2596 = vmatpush1.bf16.msra.mxu0 %v2129
    %2597 = vmatprep.subr.bf16.mxu0 %v2122
    %2598 = vmatpush1.bf16.msra.mxu0 %v2121
    %2599 = vmatprep.subr.bf16.mxu0 %v2114
    %2600 = vmatpush1.bf16.msra.mxu0 %v2113
    %2601 = vmatprep.subr.bf16.mxu0 %v2106
    %2602 = vmatpush1.bf16.msra.mxu0 %v2105
    %2603 = vmatprep.subr.bf16.mxu0 %v2098
    %2604 = vmatpush1.bf16.msra.mxu0 %v2097
    %2605 = vmatprep.subr.bf16.mxu0 %v2090
    %2606 = vmatpush1.bf16.msra.mxu0 %v2089
    %2607 = vmatprep.subr.bf16.mxu0 %v2082
    %2608 = vmatpush1.bf16.msra.mxu0 %v2081
    %2609 = vmatprep.subr.bf16.mxu0 %v2202
    %2610 = vmatpush2.bf16.msra.mxu0 %v2201
    %2611 = vmatprep.subr.bf16.mxu0 %v2194
    %2612 = vmatpush2.bf16.msra.mxu0 %v2193
    %2613 = vmatprep.subr.bf16.mxu0 %v2186
    %2614 = vmatpush2.bf16.msra.mxu0 %v2185
    %2615 = vmatprep.subr.bf16.mxu0 %v2178
    %2616 = vmatpush2.bf16.msra.mxu0 %v2177
    %2617 = vmatprep.subr.bf16.mxu0 %v2170
    %2618 = vmatpush2.bf16.msra.mxu0 %v2169
    %2619 = vmatprep.subr.bf16.mxu0 %v2162
    %2620 = vmatpush2.bf16.msra.mxu0 %v2161
    %2621 = vmatprep.subr.bf16.mxu0 %v2154
    %2622 = vmatpush2.bf16.msra.mxu0 %v2153
    %2623 = vmatprep.subr.bf16.mxu0 %v2146
    %2624 = vmatpush2.bf16.msra.mxu0 %v2145
    %2625 = vmatprep.mubr.bf16.mxu0 %v1054
    %2626 = vmatmul.mubr.bf16.gmra.mxu0 %v1053
    %v2627 = vpop.f32.mrf.mxu0
    %v2628 = vadd.f32 0.0, %v2627
    %v2629 = vpop.f32.mrf.mxu0
    %v2630 = vadd.f32 0.0, %v2629
    %v2631 = vpop.f32.mrf.mxu0
    %v2632 = vadd.f32 0.0, %v2631
    %v2633 = vpop.f32.mrf.mxu0
    %v2634 = vadd.f32 0.0, %v2633
    %2635 = vdwg.mxu0
    %2636 = vmatprep.subr.bf16.mxu0 %v2266
    %2637 = vmatpush1.bf16.msra.mxu0 %v2265
    %2638 = vmatprep.subr.bf16.mxu0 %v2258
    %2639 = vmatpush1.bf16.msra.mxu0 %v2257
    %2640 = vmatprep.subr.bf16.mxu0 %v2250
    %2641 = vmatpush1.bf16.msra.mxu0 %v2249
    %2642 = vmatprep.subr.bf16.mxu0 %v2242
    %2643 = vmatpush1.bf16.msra.mxu0 %v2241
    %2644 = vmatprep.subr.bf16.mxu0 %v2234
    %2645 = vmatpush1.bf16.msra.mxu0 %v2233
    %2646 = vmatprep.subr.bf16.mxu0 %v2226
    %2647 = vmatpush1.bf16.msra.mxu0 %v2225
    %2648 = vmatprep.subr.bf16.mxu0 %v2218
    %2649 = vmatpush1.bf16.msra.mxu0 %v2217
    %2650 = vmatprep.subr.bf16.mxu0 %v2210
    %2651 = vmatpush1.bf16.msra.mxu0 %v2209
    %2652 = vmatprep.subr.bf16.mxu0 %v2330
    %2653 = vmatpush2.bf16.msra.mxu0 %v2329
    %2654 = vmatprep.subr.bf16.mxu0 %v2322
    %2655 = vmatpush2.bf16.msra.mxu0 %v2321
    %2656 = vmatprep.subr.bf16.mxu0 %v2314
    %2657 = vmatpush2.bf16.msra.mxu0 %v2313
    %2658 = vmatprep.subr.bf16.mxu0 %v2306
    %2659 = vmatpush2.bf16.msra.mxu0 %v2305
    %2660 = vmatprep.subr.bf16.mxu0 %v2298
    %2661 = vmatpush2.bf16.msra.mxu0 %v2297
    %2662 = vmatprep.subr.bf16.mxu0 %v2290
    %2663 = vmatpush2.bf16.msra.mxu0 %v2289
    %2664 = vmatprep.subr.bf16.mxu0 %v2282
    %2665 = vmatpush2.bf16.msra.mxu0 %v2281
    %2666 = vmatprep.subr.bf16.mxu0 %v2274
    %2667 = vmatpush2.bf16.msra.mxu0 %v2273
    %2668 = vmatprep.mubr.bf16.mxu0 %v1056
    %2669 = vmatmul.mubr.bf16.gmra.mxu0 %v1055
    %v2670 = vpop.f32.mrf.mxu0
    %v2671 = vadd.f32 %v2628, %v2670
    %v2672 = vpop.f32.mrf.mxu0
    %v2673 = vadd.f32 %v2630, %v2672
    %v2674 = vpop.f32.mrf.mxu0
    %v2675 = vadd.f32 %v2632, %v2674
    %v2676 = vpop.f32.mrf.mxu0
    %v2677 = vadd.f32 %v2634, %v2676
    %2678 = vdwg.mxu0
    %2679 = vmatprep.subr.bf16.mxu0 %v2140
    %2680 = vmatpush1.bf16.msra.mxu0 %v2139
    %2681 = vmatprep.subr.bf16.mxu0 %v2132
    %2682 = vmatpush1.bf16.msra.mxu0 %v2131
    %2683 = vmatprep.subr.bf16.mxu0 %v2124
    %2684 = vmatpush1.bf16.msra.mxu0 %v2123
    %2685 = vmatprep.subr.bf16.mxu0 %v2116
    %2686 = vmatpush1.bf16.msra.mxu0 %v2115
    %2687 = vmatprep.subr.bf16.mxu0 %v2108
    %2688 = vmatpush1.bf16.msra.mxu0 %v2107
    %2689 = vmatprep.subr.bf16.mxu0 %v2100
    %2690 = vmatpush1.bf16.msra.mxu0 %v2099
    %2691 = vmatprep.subr.bf16.mxu0 %v2092
    %2692 = vmatpush1.bf16.msra.mxu0 %v2091
    %2693 = vmatprep.subr.bf16.mxu0 %v2084
    %2694 = vmatpush1.bf16.msra.mxu0 %v2083
    %2695 = vmatprep.subr.bf16.mxu0 %v2204
    %2696 = vmatpush2.bf16.msra.mxu0 %v2203
    %2697 = vmatprep.subr.bf16.mxu0 %v2196
    %2698 = vmatpush2.bf16.msra.mxu0 %v2195
    %2699 = vmatprep.subr.bf16.mxu0 %v2188
    %2700 = vmatpush2.bf16.msra.mxu0 %v2187
    %2701 = vmatprep.subr.bf16.mxu0 %v2180
    %2702 = vmatpush2.bf16.msra.mxu0 %v2179
    %2703 = vmatprep.subr.bf16.mxu0 %v2172
    %2704 = vmatpush2.bf16.msra.mxu0 %v2171
    %2705 = vmatprep.subr.bf16.mxu0 %v2164
    %2706 = vmatpush2.bf16.msra.mxu0 %v2163
    %2707 = vmatprep.subr.bf16.mxu0 %v2156
    %2708 = vmatpush2.bf16.msra.mxu0 %v2155
    %2709 = vmatprep.subr.bf16.mxu0 %v2148
    %2710 = vmatpush2.bf16.msra.mxu0 %v2147
    %2711 = vmatprep.mubr.bf16.mxu0 %v1054
    %2712 = vmatmul.mubr.bf16.gmra.mxu0 %v1053
    %v2713 = vpop.f32.mrf.mxu0
    %v2714 = vadd.f32 0.0, %v2713
    %v2715 = vpop.f32.mrf.mxu0
    %v2716 = vadd.f32 0.0, %v2715
    %v2717 = vpop.f32.mrf.mxu0
    %v2718 = vadd.f32 0.0, %v2717
    %v2719 = vpop.f32.mrf.mxu0
    %v2720 = vadd.f32 0.0, %v2719
    %2721 = vdwg.mxu0
    %2722 = vmatprep.subr.bf16.mxu0 %v2268
    %2723 = vmatpush1.bf16.msra.mxu0 %v2267
    %2724 = vmatprep.subr.bf16.mxu0 %v2260
    %2725 = vmatpush1.bf16.msra.mxu0 %v2259
    %2726 = vmatprep.subr.bf16.mxu0 %v2252
    %2727 = vmatpush1.bf16.msra.mxu0 %v2251
    %2728 = vmatprep.subr.bf16.mxu0 %v2244
    %2729 = vmatpush1.bf16.msra.mxu0 %v2243
    %2730 = vmatprep.subr.bf16.mxu0 %v2236
    %2731 = vmatpush1.bf16.msra.mxu0 %v2235
    %2732 = vmatprep.subr.bf16.mxu0 %v2228
    %2733 = vmatpush1.bf16.msra.mxu0 %v2227
    %2734 = vmatprep.subr.bf16.mxu0 %v2220
    %2735 = vmatpush1.bf16.msra.mxu0 %v2219
    %2736 = vmatprep.subr.bf16.mxu0 %v2212
    %2737 = vmatpush1.bf16.msra.mxu0 %v2211
    %2738 = vmatprep.subr.bf16.mxu0 %v2332
    %2739 = vmatpush2.bf16.msra.mxu0 %v2331
    %2740 = vmatprep.subr.bf16.mxu0 %v2324
    %2741 = vmatpush2.bf16.msra.mxu0 %v2323
    %2742 = vmatprep.subr.bf16.mxu0 %v2316
    %2743 = vmatpush2.bf16.msra.mxu0 %v2315
    %2744 = vmatprep.subr.bf16.mxu0 %v2308
    %2745 = vmatpush2.bf16.msra.mxu0 %v2307
    %2746 = vmatprep.subr.bf16.mxu0 %v2300
    %2747 = vmatpush2.bf16.msra.mxu0 %v2299
    %2748 = vmatprep.subr.bf16.mxu0 %v2292
    %2749 = vmatpush2.bf16.msra.mxu0 %v2291
    %2750 = vmatprep.subr.bf16.mxu0 %v2284
    %2751 = vmatpush2.bf16.msra.mxu0 %v2283
    %2752 = vmatprep.subr.bf16.mxu0 %v2276
    %2753 = vmatpush2.bf16.msra.mxu0 %v2275
    %2754 = vmatprep.mubr.bf16.mxu0 %v1056
    %2755 = vmatmul.mubr.bf16.gmra.mxu0 %v1055
    %v2756 = vpop.f32.mrf.mxu0
    %v2757 = vadd.f32 %v2714, %v2756
    %v2758 = vpop.f32.mrf.mxu0
    %v2759 = vadd.f32 %v2716, %v2758
    %v2760 = vpop.f32.mrf.mxu0
    %v2761 = vadd.f32 %v2718, %v2760
    %v2762 = vpop.f32.mrf.mxu0
    %v2763 = vadd.f32 %v2720, %v2762
    %2764 = vdwg.mxu0
    %2765 = vmatprep.subr.bf16.mxu0 %v2142
    %2766 = vmatpush1.bf16.msra.mxu0 %v2141
    %2767 = vmatprep.subr.bf16.mxu0 %v2134
    %2768 = vmatpush1.bf16.msra.mxu0 %v2133
    %2769 = vmatprep.subr.bf16.mxu0 %v2126
    %2770 = vmatpush1.bf16.msra.mxu0 %v2125
    %2771 = vmatprep.subr.bf16.mxu0 %v2118
    %2772 = vmatpush1.bf16.msra.mxu0 %v2117
    %2773 = vmatprep.subr.bf16.mxu0 %v2110
    %2774 = vmatpush1.bf16.msra.mxu0 %v2109
    %2775 = vmatprep.subr.bf16.mxu0 %v2102
    %2776 = vmatpush1.bf16.msra.mxu0 %v2101
    %2777 = vmatprep.subr.bf16.mxu0 %v2094
    %2778 = vmatpush1.bf16.msra.mxu0 %v2093
    %2779 = vmatprep.subr.bf16.mxu0 %v2086
    %2780 = vmatpush1.bf16.msra.mxu0 %v2085
    %2781 = vmatprep.subr.bf16.mxu0 %v2206
    %2782 = vmatpush2.bf16.msra.mxu0 %v2205
    %2783 = vmatprep.subr.bf16.mxu0 %v2198
    %2784 = vmatpush2.bf16.msra.mxu0 %v2197
    %2785 = vmatprep.subr.bf16.mxu0 %v2190
    %2786 = vmatpush2.bf16.msra.mxu0 %v2189
    %2787 = vmatprep.subr.bf16.mxu0 %v2182
    %2788 = vmatpush2.bf16.msra.mxu0 %v2181
    %2789 = vmatprep.subr.bf16.mxu0 %v2174
    %2790 = vmatpush2.bf16.msra.mxu0 %v2173
    %2791 = vmatprep.subr.bf16.mxu0 %v2166
    %2792 = vmatpush2.bf16.msra.mxu0 %v2165
    %2793 = vmatprep.subr.bf16.mxu0 %v2158
    %2794 = vmatpush2.bf16.msra.mxu0 %v2157
    %2795 = vmatprep.subr.bf16.mxu0 %v2150
    %2796 = vmatpush2.bf16.msra.mxu0 %v2149
    %2797 = vmatprep.mubr.bf16.mxu0 %v1054
    %2798 = vmatmul.mubr.bf16.gmra.mxu0 %v1053
    %v2799 = vpop.f32.mrf.mxu0
    %v2800 = vadd.f32 0.0, %v2799
    %v2801 = vpop.f32.mrf.mxu0
    %v2802 = vadd.f32 0.0, %v2801
    %v2803 = vpop.f32.mrf.mxu0
    %v2804 = vadd.f32 0.0, %v2803
    %v2805 = vpop.f32.mrf.mxu0
    %v2806 = vadd.f32 0.0, %v2805
    %2807 = vdwg.mxu0
    %2808 = vmatprep.subr.bf16.mxu0 %v2270
    %2809 = vmatpush1.bf16.msra.mxu0 %v2269
    %2810 = vmatprep.subr.bf16.mxu0 %v2262
    %2811 = vmatpush1.bf16.msra.mxu0 %v2261
    %2812 = vmatprep.subr.bf16.mxu0 %v2254
    %2813 = vmatpush1.bf16.msra.mxu0 %v2253
    %2814 = vmatprep.subr.bf16.mxu0 %v2246
    %2815 = vmatpush1.bf16.msra.mxu0 %v2245
    %2816 = vmatprep.subr.bf16.mxu0 %v2238
    %2817 = vmatpush1.bf16.msra.mxu0 %v2237
    %2818 = vmatprep.subr.bf16.mxu0 %v2230
    %2819 = vmatpush1.bf16.msra.mxu0 %v2229
    %2820 = vmatprep.subr.bf16.mxu0 %v2222
    %2821 = vmatpush1.bf16.msra.mxu0 %v2221
    %2822 = vmatprep.subr.bf16.mxu0 %v2214
    %2823 = vmatpush1.bf16.msra.mxu0 %v2213
    %2824 = vmatprep.subr.bf16.mxu0 %v2334
    %2825 = vmatpush2.bf16.msra.mxu0 %v2333
    %2826 = vmatprep.subr.bf16.mxu0 %v2326
    %2827 = vmatpush2.bf16.msra.mxu0 %v2325
    %2828 = vmatprep.subr.bf16.mxu0 %v2318
    %2829 = vmatpush2.bf16.msra.mxu0 %v2317
    %2830 = vmatprep.subr.bf16.mxu0 %v2310
    %2831 = vmatpush2.bf16.msra.mxu0 %v2309
    %2832 = vmatprep.subr.bf16.mxu0 %v2302
    %2833 = vmatpush2.bf16.msra.mxu0 %v2301
    %2834 = vmatprep.subr.bf16.mxu0 %v2294
    %2835 = vmatpush2.bf16.msra.mxu0 %v2293
    %2836 = vmatprep.subr.bf16.mxu0 %v2286
    %2837 = vmatpush2.bf16.msra.mxu0 %v2285
    %2838 = vmatprep.subr.bf16.mxu0 %v2278
    %2839 = vmatpush2.bf16.msra.mxu0 %v2277
    %2840 = vmatprep.mubr.bf16.mxu0 %v1056
    %2841 = vmatmul.mubr.bf16.gmra.mxu0 %v1055
    %v2842 = vpop.f32.mrf.mxu0
    %v2843 = vadd.f32 %v2800, %v2842
    %v2844 = vpop.f32.mrf.mxu0
    %v2845 = vadd.f32 %v2802, %v2844
    %v2846 = vpop.f32.mrf.mxu0
    %v2847 = vadd.f32 %v2804, %v2846
    %v2848 = vpop.f32.mrf.mxu0
    %v2849 = vadd.f32 %v2806, %v2848
    %2850 = vdwg.mxu0
    %2851 = vmatprep.subr.bf16.mxu0 %v2144
    %2852 = vmatpush1.bf16.msra.mxu0 %v2143
    %2853 = vmatprep.subr.bf16.mxu0 %v2136
    %2854 = vmatpush1.bf16.msra.mxu0 %v2135
    %2855 = vmatprep.subr.bf16.mxu0 %v2128
    %2856 = vmatpush1.bf16.msra.mxu0 %v2127
    %2857 = vmatprep.subr.bf16.mxu0 %v2120
    %2858 = vmatpush1.bf16.msra.mxu0 %v2119
    %2859 = vmatprep.subr.bf16.mxu0 %v2112
    %2860 = vmatpush1.bf16.msra.mxu0 %v2111
    %2861 = vmatprep.subr.bf16.mxu0 %v2104
    %2862 = vmatpush1.bf16.msra.mxu0 %v2103
    %2863 = vmatprep.subr.bf16.mxu0 %v2096
    %2864 = vmatpush1.bf16.msra.mxu0 %v2095
    %2865 = vmatprep.subr.bf16.mxu0 %v2088
    %2866 = vmatpush1.bf16.msra.mxu0 %v2087
    %2867 = vmatprep.subr.bf16.mxu0 %v2208
    %2868 = vmatpush2.bf16.msra.mxu0 %v2207
    %2869 = vmatprep.subr.bf16.mxu0 %v2200
    %2870 = vmatpush2.bf16.msra.mxu0 %v2199
    %2871 = vmatprep.subr.bf16.mxu0 %v2192
    %2872 = vmatpush2.bf16.msra.mxu0 %v2191
    %2873 = vmatprep.subr.bf16.mxu0 %v2184
    %2874 = vmatpush2.bf16.msra.mxu0 %v2183
    %2875 = vmatprep.subr.bf16.mxu0 %v2176
    %2876 = vmatpush2.bf16.msra.mxu0 %v2175
    %2877 = vmatprep.subr.bf16.mxu0 %v2168
    %2878 = vmatpush2.bf16.msra.mxu0 %v2167
    %2879 = vmatprep.subr.bf16.mxu0 %v2160
    %2880 = vmatpush2.bf16.msra.mxu0 %v2159
    %2881 = vmatprep.subr.bf16.mxu0 %v2152
    %2882 = vmatpush2.bf16.msra.mxu0 %v2151
    %2883 = vmatprep.mubr.bf16.mxu0 %v1054
    %2884 = vmatmul.mubr.bf16.gmra.mxu0 %v1053
    %v2885 = vpop.f32.mrf.mxu0
    %v2886 = vadd.f32 0.0, %v2885
    %v2887 = vpop.f32.mrf.mxu0
    %v2888 = vadd.f32 0.0, %v2887
    %v2889 = vpop.f32.mrf.mxu0
    %v2890 = vadd.f32 0.0, %v2889
    %v2891 = vpop.f32.mrf.mxu0
    %v2892 = vadd.f32 0.0, %v2891
    %2893 = vdwg.mxu0
    %2894 = vmatprep.subr.bf16.mxu0 %v2272
    %2895 = vmatpush1.bf16.msra.mxu0 %v2271
    %2896 = vmatprep.subr.bf16.mxu0 %v2264
    %2897 = vmatpush1.bf16.msra.mxu0 %v2263
    %2898 = vmatprep.subr.bf16.mxu0 %v2256
    %2899 = vmatpush1.bf16.msra.mxu0 %v2255
    %2900 = vmatprep.subr.bf16.mxu0 %v2248
    %2901 = vmatpush1.bf16.msra.mxu0 %v2247
    %2902 = vmatprep.subr.bf16.mxu0 %v2240
    %2903 = vmatpush1.bf16.msra.mxu0 %v2239
    %2904 = vmatprep.subr.bf16.mxu0 %v2232
    %2905 = vmatpush1.bf16.msra.mxu0 %v2231
    %2906 = vmatprep.subr.bf16.mxu0 %v2224
    %2907 = vmatpush1.bf16.msra.mxu0 %v2223
    %2908 = vmatprep.subr.bf16.mxu0 %v2216
    %2909 = vmatpush1.bf16.msra.mxu0 %v2215
    %2910 = vmatprep.subr.bf16.mxu0 %v2336
    %2911 = vmatpush2.bf16.msra.mxu0 %v2335
    %2912 = vmatprep.subr.bf16.mxu0 %v2328
    %2913 = vmatpush2.bf16.msra.mxu0 %v2327
    %2914 = vmatprep.subr.bf16.mxu0 %v2320
    %2915 = vmatpush2.bf16.msra.mxu0 %v2319
    %2916 = vmatprep.subr.bf16.mxu0 %v2312
    %2917 = vmatpush2.bf16.msra.mxu0 %v2311
    %2918 = vmatprep.subr.bf16.mxu0 %v2304
    %2919 = vmatpush2.bf16.msra.mxu0 %v2303
    %2920 = vmatprep.subr.bf16.mxu0 %v2296
    %2921 = vmatpush2.bf16.msra.mxu0 %v2295
    %2922 = vmatprep.subr.bf16.mxu0 %v2288
    %2923 = vmatpush2.bf16.msra.mxu0 %v2287
    %2924 = vmatprep.subr.bf16.mxu0 %v2280
    %2925 = vmatpush2.bf16.msra.mxu0 %v2279
    %2926 = vmatprep.mubr.bf16.mxu0 %v1056
    %2927 = vmatmul.mubr.bf16.gmra.mxu0 %v1055
    %v2928 = vpop.f32.mrf.mxu0
    %v2929 = vadd.f32 %v2886, %v2928
    %v2930 = vpop.f32.mrf.mxu0
    %v2931 = vadd.f32 %v2888, %v2930
    %v2932 = vpop.f32.mrf.mxu0
    %v2933 = vadd.f32 %v2890, %v2932
    %v2934 = vpop.f32.mrf.mxu0
    %v2935 = vadd.f32 %v2892, %v2934
    %2936 = vdwg.mxu0
    %v2937 = vadd.f32 %v2671, %v2675
    %v2938 = vrot.slane %v2937, 4
    %v2939 = vadd.f32 %v2937, %v2938
    %v2940 = vrot.slane %v2939, 2
    %v2941 = vadd.f32 %v2939, %v2940
    %v2942 = vrot.slane %v2941, 1
    %v2943 = vadd.f32 %v2941, %v2942
    %v2944 = vadd.f32 %v2673, %v2677
    %v2945 = vrot.slane %v2944, 4
    %v2946 = vadd.f32 %v2944, %v2945
    %v2947 = vrot.slane %v2946, 2
    %v2948 = vadd.f32 %v2946, %v2947
    %v2949 = vrot.slane %v2948, 1
    %v2950 = vadd.f32 %v2948, %v2949
    %v2951 = vadd.f32 %v2757, %v2761
    %v2952 = vrot.slane %v2951, 4
    %v2953 = vadd.f32 %v2951, %v2952
    %v2954 = vrot.slane %v2953, 2
    %v2955 = vadd.f32 %v2953, %v2954
    %v2956 = vrot.slane %v2955, 1
    %v2957 = vadd.f32 %v2955, %v2956
    %v2958 = vadd.f32 %v2759, %v2763
    %v2959 = vrot.slane %v2958, 4
    %v2960 = vadd.f32 %v2958, %v2959
    %v2961 = vrot.slane %v2960, 2
    %v2962 = vadd.f32 %v2960, %v2961
    %v2963 = vrot.slane %v2962, 1
    %v2964 = vadd.f32 %v2962, %v2963
    %v2965 = vadd.f32 %v2843, %v2847
    %v2966 = vrot.slane %v2965, 4
    %v2967 = vadd.f32 %v2965, %v2966
    %v2968 = vrot.slane %v2967, 2
    %v2969 = vadd.f32 %v2967, %v2968
    %v2970 = vrot.slane %v2969, 1
    %v2971 = vadd.f32 %v2969, %v2970
    %v2972 = vadd.f32 %v2845, %v2849
    %v2973 = vrot.slane %v2972, 4
    %v2974 = vadd.f32 %v2972, %v2973
    %v2975 = vrot.slane %v2974, 2
    %v2976 = vadd.f32 %v2974, %v2975
    %v2977 = vrot.slane %v2976, 1
    %v2978 = vadd.f32 %v2976, %v2977
    %v2979 = vadd.f32 %v2929, %v2933
    %v2980 = vrot.slane %v2979, 4
    %v2981 = vadd.f32 %v2979, %v2980
    %v2982 = vrot.slane %v2981, 2
    %v2983 = vadd.f32 %v2981, %v2982
    %v2984 = vrot.slane %v2983, 1
    %v2985 = vadd.f32 %v2983, %v2984
    %v2986 = vadd.f32 %v2931, %v2935
    %v2987 = vrot.slane %v2986, 4
    %v2988 = vadd.f32 %v2986, %v2987
    %v2989 = vrot.slane %v2988, 2
    %v2990 = vadd.f32 %v2988, %v2989
    %v2991 = vrot.slane %v2990, 1
    %v2992 = vadd.f32 %v2990, %v2991
    %v2993 = vmul.f32 %v2943, 0.125
    %v2994 = vmul.f32 %v2950, 0.125
    %v2995 = vmul.f32 %v2957, 0.125
    %v2996 = vmul.f32 %v2964, 0.125
    %v2997 = vmul.f32 %v2971, 0.125
    %v2998 = vmul.f32 %v2978, 0.125
    %v2999 = vmul.f32 %v2985, 0.125
    %v3000 = vmul.f32 %v2992, 0.125
    %v3001 = vmul.f32 %v2671, %v2671
    %v3002 = vmul.f32 %v2673, %v2673
    %v3003 = vmul.f32 %v2757, %v2757
    %v3004 = vmul.f32 %v2759, %v2759
    %v3005 = vmul.f32 %v2843, %v2843
    %v3006 = vmul.f32 %v2845, %v2845
    %v3007 = vmul.f32 %v2929, %v2929
    %v3008 = vmul.f32 %v2931, %v2931
    %v3009 = vmul.f32 %v2675, %v2675
    %v3010 = vmul.f32 %v2677, %v2677
    %v3011 = vmul.f32 %v2761, %v2761
    %v3012 = vmul.f32 %v2763, %v2763
    %v3013 = vmul.f32 %v2847, %v2847
    %v3014 = vmul.f32 %v2849, %v2849
    %v3015 = vmul.f32 %v2933, %v2933
    %v3016 = vmul.f32 %v2935, %v2935
    %v3017 = vadd.f32 %v3001, %v3009
    %v3018 = vrot.slane %v3017, 4
    %v3019 = vadd.f32 %v3017, %v3018
    %v3020 = vrot.slane %v3019, 2
    %v3021 = vadd.f32 %v3019, %v3020
    %v3022 = vrot.slane %v3021, 1
    %v3023 = vadd.f32 %v3021, %v3022
    %v3024 = vadd.f32 %v3002, %v3010
    %v3025 = vrot.slane %v3024, 4
    %v3026 = vadd.f32 %v3024, %v3025
    %v3027 = vrot.slane %v3026, 2
    %v3028 = vadd.f32 %v3026, %v3027
    %v3029 = vrot.slane %v3028, 1
    %v3030 = vadd.f32 %v3028, %v3029
    %v3031 = vadd.f32 %v3003, %v3011
    %v3032 = vrot.slane %v3031, 4
    %v3033 = vadd.f32 %v3031, %v3032
    %v3034 = vrot.slane %v3033, 2
    %v3035 = vadd.f32 %v3033, %v3034
    %v3036 = vrot.slane %v3035, 1
    %v3037 = vadd.f32 %v3035, %v3036
    %v3038 = vadd.f32 %v3004, %v3012
    %v3039 = vrot.slane %v3038, 4
    %v3040 = vadd.f32 %v3038, %v3039
    %v3041 = vrot.slane %v3040, 2
    %v3042 = vadd.f32 %v3040, %v3041
    %v3043 = vrot.slane %v3042, 1
    %v3044 = vadd.f32 %v3042, %v3043
    %v3045 = vadd.f32 %v3005, %v3013
    %v3046 = vrot.slane %v3045, 4
    %v3047 = vadd.f32 %v3045, %v3046
    %v3048 = vrot.slane %v3047, 2
    %v3049 = vadd.f32 %v3047, %v3048
    %v3050 = vrot.slane %v3049, 1
    %v3051 = vadd.f32 %v3049, %v3050
    %v3052 = vadd.f32 %v3006, %v3014
    %v3053 = vrot.slane %v3052, 4
    %v3054 = vadd.f32 %v3052, %v3053
    %v3055 = vrot.slane %v3054, 2
    %v3056 = vadd.f32 %v3054, %v3055
    %v3057 = vrot.slane %v3056, 1
    %v3058 = vadd.f32 %v3056, %v3057
    %v3059 = vadd.f32 %v3007, %v3015
    %v3060 = vrot.slane %v3059, 4
    %v3061 = vadd.f32 %v3059, %v3060
    %v3062 = vrot.slane %v3061, 2
    %v3063 = vadd.f32 %v3061, %v3062
    %v3064 = vrot.slane %v3063, 1
    %v3065 = vadd.f32 %v3063, %v3064
    %v3066 = vadd.f32 %v3008, %v3016
    %v3067 = vrot.slane %v3066, 4
    %v3068 = vadd.f32 %v3066, %v3067
    %v3069 = vrot.slane %v3068, 2
    %v3070 = vadd.f32 %v3068, %v3069
    %v3071 = vrot.slane %v3070, 1
    %v3072 = vadd.f32 %v3070, %v3071
    %v3073 = vmul.f32 %v3023, 0.125
    %v3074 = vmul.f32 %v3030, 0.125
    %v3075 = vmul.f32 %v3037, 0.125
    %v3076 = vmul.f32 %v3044, 0.125
    %v3077 = vmul.f32 %v3051, 0.125
    %v3078 = vmul.f32 %v3058, 0.125
    %v3079 = vmul.f32 %v3065, 0.125
    %v3080 = vmul.f32 %v3072, 0.125
    %v3081 = vmul.f32 %v2993, %v2993
    %v3082 = vmul.f32 %v2994, %v2994
    %v3083 = vmul.f32 %v2995, %v2995
    %v3084 = vmul.f32 %v2996, %v2996
    %v3085 = vmul.f32 %v2997, %v2997
    %v3086 = vmul.f32 %v2998, %v2998
    %v3087 = vmul.f32 %v2999, %v2999
    %v3088 = vmul.f32 %v3000, %v3000
    %v3089 = vsub.f32 %v3073, %v3081
    %v3090 = vsub.f32 %v3074, %v3082
    %v3091 = vsub.f32 %v3075, %v3083
    %v3092 = vsub.f32 %v3076, %v3084
    %v3093 = vsub.f32 %v3077, %v3085
    %v3094 = vsub.f32 %v3078, %v3086
    %v3095 = vsub.f32 %v3079, %v3087
    %v3096 = vsub.f32 %v3080, %v3088
    %v3097 = vadd.f32 %v3089, 1e-05
    %v3098 = vadd.f32 %v3090, 1e-05
    %v3099 = vadd.f32 %v3091, 1e-05
    %v3100 = vadd.f32 %v3092, 1e-05
    %v3101 = vadd.f32 %v3093, 1e-05
    %v3102 = vadd.f32 %v3094, 1e-05
    %v3103 = vadd.f32 %v3095, 1e-05
    %v3104 = vadd.f32 %v3096, 1e-05
    %v3105 = vrsqrt.pop %v3097
    %v3106 = vrsqrt.pop %v3098
    %v3107 = vrsqrt.pop %v3099
    %v3108 = vrsqrt.pop %v3100
    %v3109 = vrsqrt.pop %v3101
    %v3110 = vrsqrt.pop %v3102
    %v3111 = vrsqrt.pop %v3103
    %v3112 = vrsqrt.pop %v3104
    %v3113 = vld [vmem:[%s8] sm:$0xff]
    %v3115 = vlaneseq
    %v3116 = vshrl.u32 %v3115, 7
    %v3117 = vsub.s32 0, %v3116
    %v3118 = vrot.slane %v3113, %v3117
    %v3119 = vlaneseq
    %v3120 = vshrl.u32 %v3119, 7
    %v3121 = vsub.s32 1, %v3120
    %v3122 = vrot.slane %v3113, %v3121
    %v3123 = vlaneseq
    %v3124 = vshrl.u32 %v3123, 7
    %v3125 = vsub.s32 2, %v3124
    %v3126 = vrot.slane %v3113, %v3125
    %v3127 = vlaneseq
    %v3128 = vshrl.u32 %v3127, 7
    %v3129 = vsub.s32 3, %v3128
    %v3130 = vrot.slane %v3113, %v3129
    %v3131 = vlaneseq
    %v3132 = vshrl.u32 %v3131, 7
    %v3133 = vsub.s32 4, %v3132
    %v3134 = vrot.slane %v3113, %v3133
    %v3135 = vlaneseq
    %v3136 = vshrl.u32 %v3135, 7
    %v3137 = vsub.s32 5, %v3136
    %v3138 = vrot.slane %v3113, %v3137
    %v3139 = vlaneseq
    %v3140 = vshrl.u32 %v3139, 7
    %v3141 = vsub.s32 6, %v3140
    %v3142 = vrot.slane %v3113, %v3141
    %v3143 = vlaneseq
    %v3144 = vshrl.u32 %v3143, 7
    %v3145 = vsub.s32 7, %v3144
    %v3146 = vrot.slane %v3113, %v3145
    %v3155 = vmul.f32 %v3105, %v3118
    %v3156 = vmul.f32 %v3106, %v3122
    %v3157 = vmul.f32 %v3107, %v3126
    %v3158 = vmul.f32 %v3108, %v3130
    %v3159 = vmul.f32 %v3109, %v3134
    %v3160 = vmul.f32 %v3110, %v3138
    %v3161 = vmul.f32 %v3111, %v3142
    %v3162 = vmul.f32 %v3112, %v3146
    %v3163 = vld [vmem:[%s9] sm:$0xff]
    %v3164 = vmul.f32 %v2993, %v3155
    %v3165 = vmul.f32 %v2994, %v3156
    %v3166 = vmul.f32 %v2995, %v3157
    %v3167 = vmul.f32 %v2996, %v3158
    %v3168 = vmul.f32 %v2997, %v3159
    %v3169 = vmul.f32 %v2998, %v3160
    %v3170 = vmul.f32 %v2999, %v3161
    %v3171 = vmul.f32 %v3000, %v3162
    %v3180 = vcombine.low %v3164, %v3165
    %v3181 = vcombine.low %v3166, %v3167
    %v3182 = vcombine.low %v3168, %v3169
    %v3183 = vcombine.low %v3170, %v3171
    %v3185 = vunpack.c.l.s4 1966171168
    %v3186 = vunpack.c.0.s8 %v3185
    %v3187 = vlaneseq
    %v3188 = vshrl.u32 %v3187, 7
    %v3189 = vsub.s32 %v3186, %v3188
    %v3190 = vrot.slane %v3180, %v3189
    %v3192 = vunpack.c.l.s4 1966171168
    %v3193 = vunpack.c.0.s8 %v3192
    %v3194 = vlaneseq
    %v3195 = vshrl.u32 %v3194, 7
    %v3196 = vsub.s32 %v3193, %v3195
    %v3197 = vrot.slane %v3181, %v3196
    %v3199 = vunpack.c.l.s4 1966171168
    %v3200 = vunpack.c.0.s8 %v3199
    %v3201 = vlaneseq
    %v3202 = vshrl.u32 %v3201, 7
    %v3203 = vsub.s32 %v3200, %v3202
    %v3204 = vrot.slane %v3182, %v3203
    %v3206 = vunpack.c.l.s4 1966171168
    %v3207 = vunpack.c.0.s8 %v3206
    %v3208 = vlaneseq
    %v3209 = vshrl.u32 %v3208, 7
    %v3210 = vsub.s32 %v3207, %v3209
    %v3211 = vrot.slane %v3183, %v3210
    %v3212 = vcombine.low %v3190, %v3197
    %v3213 = vcombine.low %v3204, %v3211
    %v3215 = vunpack.c.l.s4 1966171168
    %v3216 = vunpack.c.0.s8 %v3215
    %v3217 = vlaneseq
    %v3218 = vshrl.u32 %v3217, 7
    %v3219 = vsub.s32 %v3216, %v3218
    %v3220 = vrot.slane %v3212, %v3219
    %v3222 = vunpack.c.l.s4 1966171168
    %v3223 = vunpack.c.0.s8 %v3222
    %v3224 = vlaneseq
    %v3225 = vshrl.u32 %v3224, 7
    %v3226 = vsub.s32 %v3223, %v3225
    %v3227 = vrot.slane %v3213, %v3226
    %v3228 = vcombine.low %v3220, %v3227
    %v3230 = vsub.f32 %v3163, %v3228
    %v3231 = vlaneseq
    %v3232 = vshrl.u32 %v3231, 7
    %v3233 = vsub.s32 0, %v3232
    %v3234 = vrot.slane %v3155, %v3233
    %v3235 = vlaneseq
    %v3236 = vshrl.u32 %v3235, 7
    %v3237 = vsub.s32 0, %v3236
    %v3238 = vrot.slane %v3156, %v3237
    %v3239 = vlaneseq
    %v3240 = vshrl.u32 %v3239, 7
    %v3241 = vsub.s32 0, %v3240
    %v3242 = vrot.slane %v3157, %v3241
    %v3243 = vlaneseq
    %v3244 = vshrl.u32 %v3243, 7
    %v3245 = vsub.s32 0, %v3244
    %v3246 = vrot.slane %v3158, %v3245
    %v3247 = vlaneseq
    %v3248 = vshrl.u32 %v3247, 7
    %v3249 = vsub.s32 0, %v3248
    %v3250 = vrot.slane %v3159, %v3249
    %v3251 = vlaneseq
    %v3252 = vshrl.u32 %v3251, 7
    %v3253 = vsub.s32 0, %v3252
    %v3254 = vrot.slane %v3160, %v3253
    %v3255 = vlaneseq
    %v3256 = vshrl.u32 %v3255, 7
    %v3257 = vsub.s32 0, %v3256
    %v3258 = vrot.slane %v3161, %v3257
    %v3259 = vlaneseq
    %v3260 = vshrl.u32 %v3259, 7
    %v3261 = vsub.s32 0, %v3260
    %v3262 = vrot.slane %v3162, %v3261
    %v3263 = vmul.f32 %v2671, %v3234
    %v3264 = vmul.f32 %v2673, %v3238
    %v3265 = vmul.f32 %v2757, %v3242
    %v3266 = vmul.f32 %v2759, %v3246
    %v3267 = vmul.f32 %v2843, %v3250
    %v3268 = vmul.f32 %v2845, %v3254
    %v3269 = vmul.f32 %v2929, %v3258
    %v3270 = vmul.f32 %v2931, %v3262
    %v3271 = vmul.f32 %v2675, %v3234
    %v3272 = vmul.f32 %v2677, %v3238
    %v3273 = vmul.f32 %v2761, %v3242
    %v3274 = vmul.f32 %v2763, %v3246
    %v3275 = vmul.f32 %v2847, %v3250
    %v3276 = vmul.f32 %v2849, %v3254
    %v3277 = vmul.f32 %v2933, %v3258
    %v3278 = vmul.f32 %v2935, %v3262
    %v3280 = vlaneseq
    %v3281 = vshrl.u32 %v3280, 7
    %v3282 = vsub.s32 0, %v3281
    %v3283 = vrot.slane %v3230, %v3282
    %v3284 = vlaneseq
    %v3285 = vshrl.u32 %v3284, 7
    %v3286 = vsub.s32 1, %v3285
    %v3287 = vrot.slane %v3230, %v3286
    %v3288 = vlaneseq
    %v3289 = vshrl.u32 %v3288, 7
    %v3290 = vsub.s32 2, %v3289
    %v3291 = vrot.slane %v3230, %v3290
    %v3292 = vlaneseq
    %v3293 = vshrl.u32 %v3292, 7
    %v3294 = vsub.s32 3, %v3293
    %v3295 = vrot.slane %v3230, %v3294
    %v3296 = vlaneseq
    %v3297 = vshrl.u32 %v3296, 7
    %v3298 = vsub.s32 4, %v3297
    %v3299 = vrot.slane %v3230, %v3298
    %v3300 = vlaneseq
    %v3301 = vshrl.u32 %v3300, 7
    %v3302 = vsub.s32 5, %v3301
    %v3303 = vrot.slane %v3230, %v3302
    %v3304 = vlaneseq
    %v3305 = vshrl.u32 %v3304, 7
    %v3306 = vsub.s32 6, %v3305
    %v3307 = vrot.slane %v3230, %v3306
    %v3308 = vlaneseq
    %v3309 = vshrl.u32 %v3308, 7
    %v3310 = vsub.s32 7, %v3309
    %v3311 = vrot.slane %v3230, %v3310
    %v3320 = vadd.f32 %v3263, %v3283
    %v3321 = vadd.f32 %v3264, %v3287
    %v3322 = vadd.f32 %v3265, %v3291
    %v3323 = vadd.f32 %v3266, %v3295
    %v3324 = vadd.f32 %v3267, %v3299
    %v3325 = vadd.f32 %v3268, %v3303
    %v3326 = vadd.f32 %v3269, %v3307
    %v3327 = vadd.f32 %v3270, %v3311
    %v3328 = vadd.f32 %v3271, %v3283
    %v3329 = vadd.f32 %v3272, %v3287
    %v3330 = vadd.f32 %v3273, %v3291
    %v3331 = vadd.f32 %v3274, %v3295
    %v3332 = vadd.f32 %v3275, %v3299
    %v3333 = vadd.f32 %v3276, %v3303
    %v3334 = vadd.f32 %v3277, %v3307
    %v3335 = vadd.f32 %v3278, %v3311
    %v3336 = vmax.f32 %v3320, 0.0
    %v3337 = vmax.f32 %v3321, 0.0
    %v3338 = vmax.f32 %v3322, 0.0
    %v3339 = vmax.f32 %v3323, 0.0
    %v3340 = vmax.f32 %v3324, 0.0
    %v3341 = vmax.f32 %v3325, 0.0
    %v3342 = vmax.f32 %v3326, 0.0
    %v3343 = vmax.f32 %v3327, 0.0
    %v3344 = vmax.f32 %v3328, 0.0
    %v3345 = vmax.f32 %v3329, 0.0
    %v3346 = vmax.f32 %v3330, 0.0
    %v3347 = vmax.f32 %v3331, 0.0
    %v3348 = vmax.f32 %v3332, 0.0
    %v3349 = vmax.f32 %v3333, 0.0
    %v3350 = vmax.f32 %v3334, 0.0
    %v3351 = vmax.f32 %v3335, 0.0
    %v3352 = vsel %vm357, %v3336, 0.0
    %v3353 = vsel %vm357, %v3337, 0.0
    %v3354 = vsel %vm357, %v3338, 0.0
    %v3355 = vsel %vm357, %v3339, 0.0
    %v3356 = vsel %vm357, %v3340, 0.0
    %v3357 = vsel %vm357, %v3341, 0.0
    %v3358 = vsel %vm357, %v3342, 0.0
    %v3359 = vsel %vm357, %v3343, 0.0
    %v3360 = vsel %vm358, %v3344, 0.0
    %v3361 = vsel %vm358, %v3345, 0.0
    %v3362 = vsel %vm358, %v3346, 0.0
    %v3363 = vsel %vm358, %v3347, 0.0
    %v3364 = vsel %vm358, %v3348, 0.0
    %v3365 = vsel %vm358, %v3349, 0.0
    %v3366 = vsel %vm358, %v3350, 0.0
    %v3367 = vsel %vm358, %v3351, 0.0
    %v3368 = vpack.c.bf16 %v3360, %v3352
    %v3369 = vpack.c.bf16 %v3361, %v3353
    %v3370 = vpack.c.bf16 %v3362, %v3354
    %v3371 = vpack.c.bf16 %v3363, %v3355
    %v3372 = vpack.c.bf16 %v3364, %v3356
    %v3373 = vpack.c.bf16 %v3365, %v3357
    %v3374 = vpack.c.bf16 %v3366, %v3358
    %v3375 = vpack.c.bf16 %v3367, %v3359
    %v3376 = vld [vmem:[#allocation7] sm:$0xf]
    %v3377 = vld [vmem:[#allocation7 + $0x4] sm:$0xf]
    %v3378 = vld [vmem:[#allocation7 + $0x8] sm:$0xf]
    %v3379 = vld [vmem:[#allocation7 + $0xc] sm:$0xf]
    %v3380 = vld [vmem:[#allocation7 + $0x10] sm:$0xf]
    %v3381 = vld [vmem:[#allocation7 + $0x14] sm:$0xf]
    %v3382 = vld [vmem:[#allocation7 + $0x18] sm:$0xf]
    %v3383 = vld [vmem:[#allocation7 + $0x1c] sm:$0xf]
    %v3384 = vld [vmem:[#allocation7 + $0x20] sm:$0xf]
    %v3385 = vld [vmem:[#allocation7 + $0x24] sm:$0xf]
    %v3386 = vld [vmem:[#allocation7 + $0x28] sm:$0xf]
    %v3387 = vld [vmem:[#allocation7 + $0x2c] sm:$0xf]
    %v3388 = vld [vmem:[#allocation7 + $0x30] sm:$0xf]
    %v3389 = vld [vmem:[#allocation7 + $0x34] sm:$0xf]
    %v3390 = vld [vmem:[#allocation7 + $0x38] sm:$0xf]
    %v3391 = vld [vmem:[#allocation7 + $0x3c] sm:$0xf]
    %v3392 = vld [vmem:[#allocation7 + $0x40] sm:$0xf]
    %v3393 = vld [vmem:[#allocation7 + $0x44] sm:$0xf]
    %v3394 = vld [vmem:[#allocation7 + $0x48] sm:$0xf]
    %v3395 = vld [vmem:[#allocation7 + $0x4c] sm:$0xf]
    %v3396 = vld [vmem:[#allocation7 + $0x50] sm:$0xf]
    %v3397 = vld [vmem:[#allocation7 + $0x54] sm:$0xf]
    %v3398 = vld [vmem:[#allocation7 + $0x58] sm:$0xf]
    %v3399 = vld [vmem:[#allocation7 + $0x5c] sm:$0xf]
    %v3400 = vld [vmem:[#allocation7 + $0x60] sm:$0xf]
    %v3401 = vld [vmem:[#allocation7 + $0x64] sm:$0xf]
    %v3402 = vld [vmem:[#allocation7 + $0x68] sm:$0xf]
    %v3403 = vld [vmem:[#allocation7 + $0x6c] sm:$0xf]
    %v3404 = vld [vmem:[#allocation7 + $0x70] sm:$0xf]
    %v3405 = vld [vmem:[#allocation7 + $0x74] sm:$0xf]
    %v3406 = vld [vmem:[#allocation7 + $0x78] sm:$0xf]
    %v3407 = vld [vmem:[#allocation7 + $0x7c] sm:$0xf]
    %v3408 = vld [vmem:[#allocation7 + $0x80] sm:$0xf]
    %v3409 = vld [vmem:[#allocation7 + $0x84] sm:$0xf]
    %v3410 = vld [vmem:[#allocation7 + $0x88] sm:$0xf]
    %v3411 = vld [vmem:[#allocation7 + $0x8c] sm:$0xf]
    %v3412 = vld [vmem:[#allocation7 + $0x90] sm:$0xf]
    %v3413 = vld [vmem:[#allocation7 + $0x94] sm:$0xf]
    %v3414 = vld [vmem:[#allocation7 + $0x98] sm:$0xf]
    %v3415 = vld [vmem:[#allocation7 + $0x9c] sm:$0xf]
    %v3416 = vld [vmem:[#allocation7 + $0xa0] sm:$0xf]
    %v3417 = vld [vmem:[#allocation7 + $0xa4] sm:$0xf]
    %v3418 = vld [vmem:[#allocation7 + $0xa8] sm:$0xf]
    %v3419 = vld [vmem:[#allocation7 + $0xac] sm:$0xf]
    %v3420 = vld [vmem:[#allocation7 + $0xb0] sm:$0xf]
    %v3421 = vld [vmem:[#allocation7 + $0xb4] sm:$0xf]
    %v3422 = vld [vmem:[#allocation7 + $0xb8] sm:$0xf]
    %v3423 = vld [vmem:[#allocation7 + $0xbc] sm:$0xf]
    %v3424 = vld [vmem:[#allocation7 + $0xc0] sm:$0xf]
    %v3425 = vld [vmem:[#allocation7 + $0xc4] sm:$0xf]
    %v3426 = vld [vmem:[#allocation7 + $0xc8] sm:$0xf]
    %v3427 = vld [vmem:[#allocation7 + $0xcc] sm:$0xf]
    %v3428 = vld [vmem:[#allocation7 + $0xd0] sm:$0xf]
    %v3429 = vld [vmem:[#allocation7 + $0xd4] sm:$0xf]
    %v3430 = vld [vmem:[#allocation7 + $0xd8] sm:$0xf]
    %v3431 = vld [vmem:[#allocation7 + $0xdc] sm:$0xf]
    %v3432 = vld [vmem:[#allocation7 + $0xe0] sm:$0xf]
    %v3433 = vld [vmem:[#allocation7 + $0xe4] sm:$0xf]
    %v3434 = vld [vmem:[#allocation7 + $0xe8] sm:$0xf]
    %v3435 = vld [vmem:[#allocation7 + $0xec] sm:$0xf]
    %v3436 = vld [vmem:[#allocation7 + $0xf0] sm:$0xf]
    %v3437 = vld [vmem:[#allocation7 + $0xf4] sm:$0xf]
    %v3438 = vld [vmem:[#allocation7 + $0xf8] sm:$0xf]
    %v3439 = vld [vmem:[#allocation7 + $0xfc] sm:$0xf]
    %v3440 = vld [vmem:[#allocation7 + $0x100] sm:$0xf]
    %v3441 = vld [vmem:[#allocation7 + $0x104] sm:$0xf]
    %v3442 = vld [vmem:[#allocation7 + $0x108] sm:$0xf]
    %v3443 = vld [vmem:[#allocation7 + $0x10c] sm:$0xf]
    %v3444 = vld [vmem:[#allocation7 + $0x110] sm:$0xf]
    %v3445 = vld [vmem:[#allocation7 + $0x114] sm:$0xf]
    %v3446 = vld [vmem:[#allocation7 + $0x118] sm:$0xf]
    %v3447 = vld [vmem:[#allocation7 + $0x11c] sm:$0xf]
    %v3448 = vld [vmem:[#allocation7 + $0x120] sm:$0xf]
    %v3449 = vld [vmem:[#allocation7 + $0x124] sm:$0xf]
    %v3450 = vld [vmem:[#allocation7 + $0x128] sm:$0xf]
    %v3451 = vld [vmem:[#allocation7 + $0x12c] sm:$0xf]
    %v3452 = vld [vmem:[#allocation7 + $0x130] sm:$0xf]
    %v3453 = vld [vmem:[#allocation7 + $0x134] sm:$0xf]
    %v3454 = vld [vmem:[#allocation7 + $0x138] sm:$0xf]
    %v3455 = vld [vmem:[#allocation7 + $0x13c] sm:$0xf]
    %v3456 = vld [vmem:[#allocation7 + $0x140] sm:$0xf]
    %v3457 = vld [vmem:[#allocation7 + $0x144] sm:$0xf]
    %v3458 = vld [vmem:[#allocation7 + $0x148] sm:$0xf]
    %v3459 = vld [vmem:[#allocation7 + $0x14c] sm:$0xf]
    %v3460 = vld [vmem:[#allocation7 + $0x150] sm:$0xf]
    %v3461 = vld [vmem:[#allocation7 + $0x154] sm:$0xf]
    %v3462 = vld [vmem:[#allocation7 + $0x158] sm:$0xf]
    %v3463 = vld [vmem:[#allocation7 + $0x15c] sm:$0xf]
    %v3464 = vld [vmem:[#allocation7 + $0x160] sm:$0xf]
    %v3465 = vld [vmem:[#allocation7 + $0x164] sm:$0xf]
    %v3466 = vld [vmem:[#allocation7 + $0x168] sm:$0xf]
    %v3467 = vld [vmem:[#allocation7 + $0x16c] sm:$0xf]
    %v3468 = vld [vmem:[#allocation7 + $0x170] sm:$0xf]
    %v3469 = vld [vmem:[#allocation7 + $0x174] sm:$0xf]
    %v3470 = vld [vmem:[#allocation7 + $0x178] sm:$0xf]
    %v3471 = vld [vmem:[#allocation7 + $0x17c] sm:$0xf]
    %v3472 = vld [vmem:[#allocation7 + $0x180] sm:$0xf]
    %v3473 = vld [vmem:[#allocation7 + $0x184] sm:$0xf]
    %v3474 = vld [vmem:[#allocation7 + $0x188] sm:$0xf]
    %v3475 = vld [vmem:[#allocation7 + $0x18c] sm:$0xf]
    %v3476 = vld [vmem:[#allocation7 + $0x190] sm:$0xf]
    %v3477 = vld [vmem:[#allocation7 + $0x194] sm:$0xf]
    %v3478 = vld [vmem:[#allocation7 + $0x198] sm:$0xf]
    %v3479 = vld [vmem:[#allocation7 + $0x19c] sm:$0xf]
    %v3480 = vld [vmem:[#allocation7 + $0x1a0] sm:$0xf]
    %v3481 = vld [vmem:[#allocation7 + $0x1a4] sm:$0xf]
    %v3482 = vld [vmem:[#allocation7 + $0x1a8] sm:$0xf]
    %v3483 = vld [vmem:[#allocation7 + $0x1ac] sm:$0xf]
    %v3484 = vld [vmem:[#allocation7 + $0x1b0] sm:$0xf]
    %v3485 = vld [vmem:[#allocation7 + $0x1b4] sm:$0xf]
    %v3486 = vld [vmem:[#allocation7 + $0x1b8] sm:$0xf]
    %v3487 = vld [vmem:[#allocation7 + $0x1bc] sm:$0xf]
    %v3488 = vld [vmem:[#allocation7 + $0x1c0] sm:$0xf]
    %v3489 = vld [vmem:[#allocation7 + $0x1c4] sm:$0xf]
    %v3490 = vld [vmem:[#allocation7 + $0x1c8] sm:$0xf]
    %v3491 = vld [vmem:[#allocation7 + $0x1cc] sm:$0xf]
    %v3492 = vld [vmem:[#allocation7 + $0x1d0] sm:$0xf]
    %v3493 = vld [vmem:[#allocation7 + $0x1d4] sm:$0xf]
    %v3494 = vld [vmem:[#allocation7 + $0x1d8] sm:$0xf]
    %v3495 = vld [vmem:[#allocation7 + $0x1dc] sm:$0xf]
    %v3496 = vld [vmem:[#allocation7 + $0x1e0] sm:$0xf]
    %v3497 = vld [vmem:[#allocation7 + $0x1e4] sm:$0xf]
    %v3498 = vld [vmem:[#allocation7 + $0x1e8] sm:$0xf]
    %v3499 = vld [vmem:[#allocation7 + $0x1ec] sm:$0xf]
    %v3500 = vld [vmem:[#allocation7 + $0x1f0] sm:$0xf]
    %v3501 = vld [vmem:[#allocation7 + $0x1f4] sm:$0xf]
    %v3502 = vld [vmem:[#allocation7 + $0x1f8] sm:$0xf]
    %v3503 = vld [vmem:[#allocation7 + $0x1fc] sm:$0xf]
    %v3504 = vld [vmem:[%s11] sm:$0x1]
    %v3506 = vlaneseq
    %v3507 = vshrl.u32 %v3506, 7
    %v3508 = vsub.s32 0, %v3507
    %v3509 = vrot.slane %v3504, %v3508
    %v3639 = vunpack.c.l.b16 %v3376
    %v3640 = vunpack.c.l.b16 %v3377
    %v3641 = vunpack.c.l.b16 %v3378
    %v3642 = vunpack.c.l.b16 %v3379
    %v3643 = vunpack.c.l.b16 %v3380
    %v3644 = vunpack.c.l.b16 %v3381
    %v3645 = vunpack.c.l.b16 %v3382
    %v3646 = vunpack.c.l.b16 %v3383
    %v3647 = vunpack.c.l.b16 %v3384
    %v3648 = vunpack.c.l.b16 %v3385
    %v3649 = vunpack.c.l.b16 %v3386
    %v3650 = vunpack.c.l.b16 %v3387
    %v3651 = vunpack.c.l.b16 %v3388
    %v3652 = vunpack.c.l.b16 %v3389
    %v3653 = vunpack.c.l.b16 %v3390
    %v3654 = vunpack.c.l.b16 %v3391
    %v3655 = vunpack.c.l.b16 %v3392
    %v3656 = vunpack.c.l.b16 %v3393
    %v3657 = vunpack.c.l.b16 %v3394
    %v3658 = vunpack.c.l.b16 %v3395
    %v3659 = vunpack.c.l.b16 %v3396
    %v3660 = vunpack.c.l.b16 %v3397
    %v3661 = vunpack.c.l.b16 %v3398
    %v3662 = vunpack.c.l.b16 %v3399
    %v3663 = vunpack.c.l.b16 %v3400
    %v3664 = vunpack.c.l.b16 %v3401
    %v3665 = vunpack.c.l.b16 %v3402
    %v3666 = vunpack.c.l.b16 %v3403
    %v3667 = vunpack.c.l.b16 %v3404
    %v3668 = vunpack.c.l.b16 %v3405
    %v3669 = vunpack.c.l.b16 %v3406
    %v3670 = vunpack.c.l.b16 %v3407
    %v3671 = vunpack.c.l.b16 %v3408
    %v3672 = vunpack.c.l.b16 %v3409
    %v3673 = vunpack.c.l.b16 %v3410
    %v3674 = vunpack.c.l.b16 %v3411
    %v3675 = vunpack.c.l.b16 %v3412
    %v3676 = vunpack.c.l.b16 %v3413
    %v3677 = vunpack.c.l.b16 %v3414
    %v3678 = vunpack.c.l.b16 %v3415
    %v3679 = vunpack.c.l.b16 %v3416
    %v3680 = vunpack.c.l.b16 %v3417
    %v3681 = vunpack.c.l.b16 %v3418
    %v3682 = vunpack.c.l.b16 %v3419
    %v3683 = vunpack.c.l.b16 %v3420
    %v3684 = vunpack.c.l.b16 %v3421
    %v3685 = vunpack.c.l.b16 %v3422
    %v3686 = vunpack.c.l.b16 %v3423
    %v3687 = vunpack.c.l.b16 %v3424
    %v3688 = vunpack.c.l.b16 %v3425
    %v3689 = vunpack.c.l.b16 %v3426
    %v3690 = vunpack.c.l.b16 %v3427
    %v3691 = vunpack.c.l.b16 %v3428
    %v3692 = vunpack.c.l.b16 %v3429
    %v3693 = vunpack.c.l.b16 %v3430
    %v3694 = vunpack.c.l.b16 %v3431
    %v3695 = vunpack.c.l.b16 %v3432
    %v3696 = vunpack.c.l.b16 %v3433
    %v3697 = vunpack.c.l.b16 %v3434
    %v3698 = vunpack.c.l.b16 %v3435
    %v3699 = vunpack.c.l.b16 %v3436
    %v3700 = vunpack.c.l.b16 %v3437
    %v3701 = vunpack.c.l.b16 %v3438
    %v3702 = vunpack.c.l.b16 %v3439
    %v3703 = vunpack.c.l.b16 %v3440
    %v3704 = vunpack.c.l.b16 %v3441
    %v3705 = vunpack.c.l.b16 %v3442
    %v3706 = vunpack.c.l.b16 %v3443
    %v3707 = vunpack.c.l.b16 %v3444
    %v3708 = vunpack.c.l.b16 %v3445
    %v3709 = vunpack.c.l.b16 %v3446
    %v3710 = vunpack.c.l.b16 %v3447
    %v3711 = vunpack.c.l.b16 %v3448
    %v3712 = vunpack.c.l.b16 %v3449
    %v3713 = vunpack.c.l.b16 %v3450
    %v3714 = vunpack.c.l.b16 %v3451
    %v3715 = vunpack.c.l.b16 %v3452
    %v3716 = vunpack.c.l.b16 %v3453
    %v3717 = vunpack.c.l.b16 %v3454
    %v3718 = vunpack.c.l.b16 %v3455
    %v3719 = vunpack.c.l.b16 %v3456
    %v3720 = vunpack.c.l.b16 %v3457
    %v3721 = vunpack.c.l.b16 %v3458
    %v3722 = vunpack.c.l.b16 %v3459
    %v3723 = vunpack.c.l.b16 %v3460
    %v3724 = vunpack.c.l.b16 %v3461
    %v3725 = vunpack.c.l.b16 %v3462
    %v3726 = vunpack.c.l.b16 %v3463
    %v3727 = vunpack.c.l.b16 %v3464
    %v3728 = vunpack.c.l.b16 %v3465
    %v3729 = vunpack.c.l.b16 %v3466
    %v3730 = vunpack.c.l.b16 %v3467
    %v3731 = vunpack.c.l.b16 %v3468
    %v3732 = vunpack.c.l.b16 %v3469
    %v3733 = vunpack.c.l.b16 %v3470
    %v3734 = vunpack.c.l.b16 %v3471
    %v3735 = vunpack.c.l.b16 %v3472
    %v3736 = vunpack.c.l.b16 %v3473
    %v3737 = vunpack.c.l.b16 %v3474
    %v3738 = vunpack.c.l.b16 %v3475
    %v3739 = vunpack.c.l.b16 %v3476
    %v3740 = vunpack.c.l.b16 %v3477
    %v3741 = vunpack.c.l.b16 %v3478
    %v3742 = vunpack.c.l.b16 %v3479
    %v3743 = vunpack.c.l.b16 %v3480
    %v3744 = vunpack.c.l.b16 %v3481
    %v3745 = vunpack.c.l.b16 %v3482
    %v3746 = vunpack.c.l.b16 %v3483
    %v3747 = vunpack.c.l.b16 %v3484
    %v3748 = vunpack.c.l.b16 %v3485
    %v3749 = vunpack.c.l.b16 %v3486
    %v3750 = vunpack.c.l.b16 %v3487
    %v3751 = vunpack.c.l.b16 %v3488
    %v3752 = vunpack.c.l.b16 %v3489
    %v3753 = vunpack.c.l.b16 %v3490
    %v3754 = vunpack.c.l.b16 %v3491
    %v3755 = vunpack.c.l.b16 %v3492
    %v3756 = vunpack.c.l.b16 %v3493
    %v3757 = vunpack.c.l.b16 %v3494
    %v3758 = vunpack.c.l.b16 %v3495
    %v3759 = vunpack.c.l.b16 %v3496
    %v3760 = vunpack.c.l.b16 %v3497
    %v3761 = vunpack.c.l.b16 %v3498
    %v3762 = vunpack.c.l.b16 %v3499
    %v3763 = vunpack.c.l.b16 %v3500
    %v3764 = vunpack.c.l.b16 %v3501
    %v3765 = vunpack.c.l.b16 %v3502
    %v3766 = vunpack.c.l.b16 %v3503
    %v3767 = vpack.c.b16 %v3640, %v3639
    %v3768 = vpack.c.b16 %v3642, %v3641
    %v3769 = vpack.c.b16 %v3644, %v3643
    %v3770 = vpack.c.b16 %v3646, %v3645
    %v3771 = vpack.c.b16 %v3648, %v3647
    %v3772 = vpack.c.b16 %v3650, %v3649
    %v3773 = vpack.c.b16 %v3652, %v3651
    %v3774 = vpack.c.b16 %v3654, %v3653
    %v3775 = vpack.c.b16 %v3656, %v3655
    %v3776 = vpack.c.b16 %v3658, %v3657
    %v3777 = vpack.c.b16 %v3660, %v3659
    %v3778 = vpack.c.b16 %v3662, %v3661
    %v3779 = vpack.c.b16 %v3664, %v3663
    %v3780 = vpack.c.b16 %v3666, %v3665
    %v3781 = vpack.c.b16 %v3668, %v3667
    %v3782 = vpack.c.b16 %v3670, %v3669
    %v3783 = vpack.c.b16 %v3672, %v3671
    %v3784 = vpack.c.b16 %v3674, %v3673
    %v3785 = vpack.c.b16 %v3676, %v3675
    %v3786 = vpack.c.b16 %v3678, %v3677
    %v3787 = vpack.c.b16 %v3680, %v3679
    %v3788 = vpack.c.b16 %v3682, %v3681
    %v3789 = vpack.c.b16 %v3684, %v3683
    %v3790 = vpack.c.b16 %v3686, %v3685
    %v3791 = vpack.c.b16 %v3688, %v3687
    %v3792 = vpack.c.b16 %v3690, %v3689
    %v3793 = vpack.c.b16 %v3692, %v3691
    %v3794 = vpack.c.b16 %v3694, %v3693
    %v3795 = vpack.c.b16 %v3696, %v3695
    %v3796 = vpack.c.b16 %v3698, %v3697
    %v3797 = vpack.c.b16 %v3700, %v3699
    %v3798 = vpack.c.b16 %v3702, %v3701
    %v3799 = vpack.c.b16 %v3704, %v3703
    %v3800 = vpack.c.b16 %v3706, %v3705
    %v3801 = vpack.c.b16 %v3708, %v3707
    %v3802 = vpack.c.b16 %v3710, %v3709
    %v3803 = vpack.c.b16 %v3712, %v3711
    %v3804 = vpack.c.b16 %v3714, %v3713
    %v3805 = vpack.c.b16 %v3716, %v3715
    %v3806 = vpack.c.b16 %v3718, %v3717
    %v3807 = vpack.c.b16 %v3720, %v3719
    %v3808 = vpack.c.b16 %v3722, %v3721
    %v3809 = vpack.c.b16 %v3724, %v3723
    %v3810 = vpack.c.b16 %v3726, %v3725
    %v3811 = vpack.c.b16 %v3728, %v3727
    %v3812 = vpack.c.b16 %v3730, %v3729
    %v3813 = vpack.c.b16 %v3732, %v3731
    %v3814 = vpack.c.b16 %v3734, %v3733
    %v3815 = vpack.c.b16 %v3736, %v3735
    %v3816 = vpack.c.b16 %v3738, %v3737
    %v3817 = vpack.c.b16 %v3740, %v3739
    %v3818 = vpack.c.b16 %v3742, %v3741
    %v3819 = vpack.c.b16 %v3744, %v3743
    %v3820 = vpack.c.b16 %v3746, %v3745
    %v3821 = vpack.c.b16 %v3748, %v3747
    %v3822 = vpack.c.b16 %v3750, %v3749
    %v3823 = vpack.c.b16 %v3752, %v3751
    %v3824 = vpack.c.b16 %v3754, %v3753
    %v3825 = vpack.c.b16 %v3756, %v3755
    %v3826 = vpack.c.b16 %v3758, %v3757
    %v3827 = vpack.c.b16 %v3760, %v3759
    %v3828 = vpack.c.b16 %v3762, %v3761
    %v3829 = vpack.c.b16 %v3764, %v3763
    %v3830 = vpack.c.b16 %v3766, %v3765
    %3895 = vmatprep.subr.bf16.mxu0 0
    %3896 = vmatpush1.bf16.msra.mxu0 %v3774
    %3897 = vmatprep.subr.bf16.mxu0 0
    %3898 = vmatpush1.bf16.msra.mxu0 %v3773
    %3899 = vmatprep.subr.bf16.mxu0 0
    %3900 = vmatpush1.bf16.msra.mxu0 %v3772
    %3901 = vmatprep.subr.bf16.mxu0 0
    %3902 = vmatpush1.bf16.msra.mxu0 %v3771
    %3903 = vmatprep.subr.bf16.mxu0 0
    %3904 = vmatpush1.bf16.msra.mxu0 %v3770
    %3905 = vmatprep.subr.bf16.mxu0 0
    %3906 = vmatpush1.bf16.msra.mxu0 %v3769
    %3907 = vmatprep.subr.bf16.mxu0 0
    %3908 = vmatpush1.bf16.msra.mxu0 %v3768
    %3909 = vmatprep.subr.bf16.mxu0 0
    %3910 = vmatpush1.bf16.msra.mxu0 %v3767
    %3911 = vmatprep.subr.bf16.mxu0 0
    %3912 = vmatpush2.bf16.msra.mxu0 %v3782
    %3913 = vmatprep.subr.bf16.mxu0 0
    %3914 = vmatpush2.bf16.msra.mxu0 %v3781
    %3915 = vmatprep.subr.bf16.mxu0 0
    %3916 = vmatpush2.bf16.msra.mxu0 %v3780
    %3917 = vmatprep.subr.bf16.mxu0 0
    %3918 = vmatpush2.bf16.msra.mxu0 %v3779
    %3919 = vmatprep.subr.bf16.mxu0 0
    %3920 = vmatpush2.bf16.msra.mxu0 %v3778
    %3921 = vmatprep.subr.bf16.mxu0 0
    %3922 = vmatpush2.bf16.msra.mxu0 %v3777
    %3923 = vmatprep.subr.bf16.mxu0 0
    %3924 = vmatpush2.bf16.msra.mxu0 %v3776
    %3925 = vmatprep.subr.bf16.mxu0 0
    %3926 = vmatpush2.bf16.msra.mxu0 %v3775
    %3927 = vmatprep.mubr.bf16.mxu0 %v3369
    %3928 = vmatmul.mubr.bf16.gmra.mxu0 %v3368
    %v3929 = vpop.f32.mrf.mxu0
    %v3930 = vadd.f32 %v3509, %v3929
    %v3931 = vpop.f32.mrf.mxu0
    %v3932 = vpop.f32.mrf.mxu0
    %v3933 = vadd.f32 %v3509, %v3932
    %v3934 = vpop.f32.mrf.mxu0
    %3935 = vdwg.mxu0
    %3936 = vmatprep.subr.bf16.mxu0 0
    %3937 = vmatpush1.bf16.msra.mxu0 %v3790
    %3938 = vmatprep.subr.bf16.mxu0 0
    %3939 = vmatpush1.bf16.msra.mxu0 %v3789
    %3940 = vmatprep.subr.bf16.mxu0 0
    %3941 = vmatpush1.bf16.msra.mxu0 %v3788
    %3942 = vmatprep.subr.bf16.mxu0 0
    %3943 = vmatpush1.bf16.msra.mxu0 %v3787
    %3944 = vmatprep.subr.bf16.mxu0 0
    %3945 = vmatpush1.bf16.msra.mxu0 %v3786
    %3946 = vmatprep.subr.bf16.mxu0 0
    %3947 = vmatpush1.bf16.msra.mxu0 %v3785
    %3948 = vmatprep.subr.bf16.mxu0 0
    %3949 = vmatpush1.bf16.msra.mxu0 %v3784
    %3950 = vmatprep.subr.bf16.mxu0 0
    %3951 = vmatpush1.bf16.msra.mxu0 %v3783
    %3952 = vmatprep.subr.bf16.mxu0 0
    %3953 = vmatpush2.bf16.msra.mxu0 %v3798
    %3954 = vmatprep.subr.bf16.mxu0 0
    %3955 = vmatpush2.bf16.msra.mxu0 %v3797
    %3956 = vmatprep.subr.bf16.mxu0 0
    %3957 = vmatpush2.bf16.msra.mxu0 %v3796
    %3958 = vmatprep.subr.bf16.mxu0 0
    %3959 = vmatpush2.bf16.msra.mxu0 %v3795
    %3960 = vmatprep.subr.bf16.mxu0 0
    %3961 = vmatpush2.bf16.msra.mxu0 %v3794
    %3962 = vmatprep.subr.bf16.mxu0 0
    %3963 = vmatpush2.bf16.msra.mxu0 %v3793
    %3964 = vmatprep.subr.bf16.mxu0 0
    %3965 = vmatpush2.bf16.msra.mxu0 %v3792
    %3966 = vmatprep.subr.bf16.mxu0 0
    %3967 = vmatpush2.bf16.msra.mxu0 %v3791
    %3968 = vmatprep.mubr.bf16.mxu0 %v3371
    %3969 = vmatmul.mubr.bf16.gmra.mxu0 %v3370
    %v3970 = vpop.f32.mrf.mxu0
    %v3971 = vadd.f32 %v3930, %v3970
    %v3972 = vpop.f32.mrf.mxu0
    %v3973 = vpop.f32.mrf.mxu0
    %v3974 = vadd.f32 %v3933, %v3973
    %v3975 = vpop.f32.mrf.mxu0
    %3976 = vdwg.mxu0
    %3977 = vmatprep.subr.bf16.mxu0 0
    %3978 = vmatpush1.bf16.msra.mxu0 %v3806
    %3979 = vmatprep.subr.bf16.mxu0 0
    %3980 = vmatpush1.bf16.msra.mxu0 %v3805
    %3981 = vmatprep.subr.bf16.mxu0 0
    %3982 = vmatpush1.bf16.msra.mxu0 %v3804
    %3983 = vmatprep.subr.bf16.mxu0 0
    %3984 = vmatpush1.bf16.msra.mxu0 %v3803
    %3985 = vmatprep.subr.bf16.mxu0 0
    %3986 = vmatpush1.bf16.msra.mxu0 %v3802
    %3987 = vmatprep.subr.bf16.mxu0 0
    %3988 = vmatpush1.bf16.msra.mxu0 %v3801
    %3989 = vmatprep.subr.bf16.mxu0 0
    %3990 = vmatpush1.bf16.msra.mxu0 %v3800
    %3991 = vmatprep.subr.bf16.mxu0 0
    %3992 = vmatpush1.bf16.msra.mxu0 %v3799
    %3993 = vmatprep.subr.bf16.mxu0 0
    %3994 = vmatpush2.bf16.msra.mxu0 %v3814
    %3995 = vmatprep.subr.bf16.mxu0 0
    %3996 = vmatpush2.bf16.msra.mxu0 %v3813
    %3997 = vmatprep.subr.bf16.mxu0 0
    %3998 = vmatpush2.bf16.msra.mxu0 %v3812
    %3999 = vmatprep.subr.bf16.mxu0 0
    %4000 = vmatpush2.bf16.msra.mxu0 %v3811
    %4001 = vmatprep.subr.bf16.mxu0 0
    %4002 = vmatpush2.bf16.msra.mxu0 %v3810
    %4003 = vmatprep.subr.bf16.mxu0 0
    %4004 = vmatpush2.bf16.msra.mxu0 %v3809
    %4005 = vmatprep.subr.bf16.mxu0 0
    %4006 = vmatpush2.bf16.msra.mxu0 %v3808
    %4007 = vmatprep.subr.bf16.mxu0 0
    %4008 = vmatpush2.bf16.msra.mxu0 %v3807
    %4009 = vmatprep.mubr.bf16.mxu0 %v3373
    %4010 = vmatmul.mubr.bf16.gmra.mxu0 %v3372
    %v4011 = vpop.f32.mrf.mxu0
    %v4012 = vadd.f32 %v3971, %v4011
    %v4013 = vpop.f32.mrf.mxu0
    %v4014 = vpop.f32.mrf.mxu0
    %v4015 = vadd.f32 %v3974, %v4014
    %v4016 = vpop.f32.mrf.mxu0
    %4017 = vdwg.mxu0
    %4018 = vmatprep.subr.bf16.mxu0 0
    %4019 = vmatpush1.bf16.msra.mxu0 %v3822
    %4020 = vmatprep.subr.bf16.mxu0 0
    %4021 = vmatpush1.bf16.msra.mxu0 %v3821
    %4022 = vmatprep.subr.bf16.mxu0 0
    %4023 = vmatpush1.bf16.msra.mxu0 %v3820
    %4024 = vmatprep.subr.bf16.mxu0 0
    %4025 = vmatpush1.bf16.msra.mxu0 %v3819
    %4026 = vmatprep.subr.bf16.mxu0 0
    %4027 = vmatpush1.bf16.msra.mxu0 %v3818
    %4028 = vmatprep.subr.bf16.mxu0 0
    %4029 = vmatpush1.bf16.msra.mxu0 %v3817
    %4030 = vmatprep.subr.bf16.mxu0 0
    %4031 = vmatpush1.bf16.msra.mxu0 %v3816
    %4032 = vmatprep.subr.bf16.mxu0 0
    %4033 = vmatpush1.bf16.msra.mxu0 %v3815
    %4034 = vmatprep.subr.bf16.mxu0 0
    %4035 = vmatpush2.bf16.msra.mxu0 %v3830
    %4036 = vmatprep.subr.bf16.mxu0 0
    %4037 = vmatpush2.bf16.msra.mxu0 %v3829
    %4038 = vmatprep.subr.bf16.mxu0 0
    %4039 = vmatpush2.bf16.msra.mxu0 %v3828
    %4040 = vmatprep.subr.bf16.mxu0 0
    %4041 = vmatpush2.bf16.msra.mxu0 %v3827
    %4042 = vmatprep.subr.bf16.mxu0 0
    %4043 = vmatpush2.bf16.msra.mxu0 %v3826
    %4044 = vmatprep.subr.bf16.mxu0 0
    %4045 = vmatpush2.bf16.msra.mxu0 %v3825
    %4046 = vmatprep.subr.bf16.mxu0 0
    %4047 = vmatpush2.bf16.msra.mxu0 %v3824
    %4048 = vmatprep.subr.bf16.mxu0 0
    %4049 = vmatpush2.bf16.msra.mxu0 %v3823
    %4050 = vmatprep.mubr.bf16.mxu0 %v3375
    %4051 = vmatmul.mubr.bf16.gmra.mxu0 %v3374
    %v4052 = vpop.f32.mrf.mxu0
    %v4053 = vadd.f32 %v4012, %v4052
    %v4054 = vpop.f32.mrf.mxu0
    %v4055 = vpop.f32.mrf.mxu0
    %v4056 = vadd.f32 %v4015, %v4055
    %v4057 = vpop.f32.mrf.mxu0
    %4058 = vdwg.mxu0
    %v4059 = vtanh.pop %v4053
    %v4060 = vtanh.pop %v4056
    %4061 = vst [vmem:[%s12] sm:$0xff] %v4059
    %4062 = vst [vmem:[%s12 + $0x8] sm:$0xff] %v4060
    // Predicated region
    $region66: #{generator_forward.1} parent=1 // pred_check
      _
    $region67: #{generator_forward.1} parent=1 // pred_check_branch
      %4064 = sbr.rel (0) target = $region69
    $region68: #{generator_forward.1} parent=1 // pred_region
      _
    $region69: #{generator_forward.1} parent=1 // pred_fallthru
      _
    // Predicated region
    $region70: #{generator_forward.1} parent=1 // pred_check
      _
    $region71: #{generator_forward.1} parent=1 // pred_check_branch
      %4066 = sbr.rel (0) target = $region73
    $region72: #{generator_forward.1} parent=1 // pred_region
      _
    $region73: #{generator_forward.1} parent=1 // pred_fallthru
      _
    %4067 = vsyncpa [#allocation3], 1
    %4068 = vsyncpa [#allocation5], 1
    %4069 = vsyncpa [#allocation8], 1

</llo_original>
